<compile_context>
chip_gen: v7x
topology: tpu7x:2x2x1
jax: 0.10.0
libtpu: 0.0.40
codegen_flags: <defaults>
</compile_context>

<pallas_src>
import numpy as np
import jax
import jax.numpy as jnp
from jax import lax
from jax.experimental import pallas as pl
from jax.experimental.pallas import tpu as pltpu

BN_EPS = 1e-5
LANE = 128


# ----------------------------------------------------------------------------
# small helpers
# ----------------------------------------------------------------------------
def _pad_to(n, m):
    return ((n + m - 1) // m) * m


def _chip_kind():
    try:
        return jax.devices()[0].device_kind.lower()
    except Exception:
        return ""


def _num_tensorcores(kind):
    # v7x has 2 TensorCores per chip sharded over "parallel" grid axes.
    return 2 if ("v7" in kind or "7x" in kind) else 1


def _pad_feature(d, kind):
    # v6e/v7x MXU is 2x256^2: prefer 256-multiples once the true width exceeds 128.
    if d > LANE and ("v6" in kind or "v7" in kind):
        return _pad_to(d, 2 * LANE)
    return _pad_to(d, LANE)


def fold_bn(gamma, beta, mean, var):
    s = gamma / jnp.sqrt(var + BN_EPS)
    return s, beta - mean * s


# ----------------------------------------------------------------------------
# Pallas kernel: fused one-hot input build -> [Linear -> ReLU]*(n-1) -> Linear
# (all BatchNorms and embedding tables pre-folded into the weights on the host)
# ----------------------------------------------------------------------------
def make_mlp_kernel(cat_sizes, n_cont, n_layers, compute_dtype, epilogue_dtype):
    offsets, off = [], 0
    for ni in cat_sizes:
        offsets.append(off)
        off += ni
    cont_off = off

    def kernel(xcat_ref, xcont_ref, *refs):
        out_ref = refs[-1]
        prm = refs[:-1]                       # (w0, b0, w1, b1, ..., w_{n-1}, b_{n-1})
        tile_b = xcat_ref.shape[0]
        n_in_pad = prm[0].shape[0]

        # Fused embedding lookup / concat / bn_cont: lookup == one_hot(idx) @ table,
        # with (table @ W0_rows) and the bn_cont affine already folded into prm[0/1].
        lane = lax.broadcasted_iota(jnp.int32, (tile_b, n_in_pad), 1)
        x = jnp.zeros((tile_b, n_in_pad), compute_dtype)
        for i, o in enumerate(offsets):
            idx = xcat_ref[:, i:i + 1] + o                   # (tile_b, 1) int32
            x = x + (lane == idx).astype(compute_dtype)      # one-hot block (VPU)
        for j in range(n_cont):
            v = xcont_ref[:, j:j + 1].astype(compute_dtype)  # (tile_b, 1)
            x = jnp.where(lane == cont_off + j, v, x)        # place continuous col

        # [Linear -> ReLU]*(n-1) -> Linear; MXU with f32 accumulation.
        for li in range(n_layers):
            w_ref, b_ref = prm[2 * li], prm[2 * li + 1]
            y = jnp.dot(x.astype(compute_dtype), w_ref[...],
                        preferred_element_type=jnp.float32)
            y = y.astype(epilogue_dtype) + b_ref[...]        # bf16 epilogue on v6e/v7x
            x = jnp.maximum(y, 0) if li < n_layers - 1 else y
        out_ref[...] = x.astype(out_ref.dtype)               # full 128-lane store

    return kernel


# ----------------------------------------------------------------------------
# One-time parameter preparation: fold BNs + embedding tables, pad, cast.
# ----------------------------------------------------------------------------
def prepare_params(params, *, compute_dtype=jnp.bfloat16, epilogue_dtype=None,
                   out_dtype=jnp.bfloat16):
    kind = _chip_kind()
    if epilogue_dtype is None:
        # v6e/v7x VPUs have bf16 ALUs; keep the epilogue in f32 on v5e and older.
        epilogue_dtype = jnp.bfloat16 if ("v6" in kind or "v7" in kind) else jnp.float32

    emb = params["emb"]
    cat_sizes = [int(t.shape[0]) for t in emb]
    emb_dims = [int(t.shape[1]) for t in emb]
    n_cont = int(params["bn_cont"]["gamma"].shape[0])
    hidden = params["hidden"]
    out_sz = int(params["out"]["w"].shape[1])

    # ---- fold every embedding table and bn_cont into the first Linear ---------
    W1, b1 = hidden[0]["w"], hidden[0]["b"]
    row, blocks = 0, []
    for tab, nf in zip(emb, emb_dims):
        blocks.append(tab @ W1[row:row + nf, :])     # (ni, h1): table @ its W1 rows
        row += nf
    s_c, t_c = fold_bn(params["bn_cont"]["gamma"], params["bn_cont"]["beta"],
                       params["bn_cont"]["mean"], params["bn_cont"]["var"])
    W1_cont = W1[row:row + n_cont, :]
    blocks.append(s_c[:, None] * W1_cont)
    Ws = [jnp.concatenate(blocks, axis=0)]           # (sum(ni) + n_cont, h1)
    Bs = [b1 + t_c @ W1_cont]

    # ---- fold every eval-mode hidden BN into the next Linear -------------------
    s, t = fold_bn(hidden[0]["bn"]["gamma"], hidden[0]["bn"]["beta"],
                   hidden[0]["bn"]["mean"], hidden[0]["bn"]["var"])
    for layer in hidden[1:]:
        Ws.append(s[:, None] * layer["w"])
        Bs.append(layer["b"] + t @ layer["w"])
        s, t = fold_bn(layer["bn"]["gamma"], layer["bn"]["beta"],
                       layer["bn"]["mean"], layer["bn"]["var"])
    Ws.append(s[:, None] * params["out"]["w"])
    Bs.append(params["out"]["b"] + t @ params["out"]["w"])
    # TODO(synk): training-mode dropout (pltpu.prng_*) and batch-statistics BN are
    # not implemented (eval-mode forward: Dropout == identity, BN uses running stats).

    # ---- lane-dense zero padding + dtype cast (one-time) -----------------------
    n_in_oh = sum(cat_sizes) + n_cont
    dims = [n_in_oh] + [int(w.shape[1]) for w in Ws]
    pdims = [_pad_feature(d, kind) for d in dims]
    Wp, Bp = [], []
    for li, (w, b) in enumerate(zip(Ws, Bs)):
        wp = jnp.zeros((pdims[li], pdims[li + 1]), jnp.float32)
        wp = wp.at[:w.shape[0], :w.shape[1]].set(w)
        bp = jnp.zeros((1, pdims[li + 1]), jnp.float32).at[0, :b.shape[0]].set(b)
        Wp.append(wp.astype(compute_dtype))
        Bp.append(bp.astype(epilogue_dtype))

    return dict(Ws=Wp, Bs=Bp, cat_sizes=cat_sizes, n_cont=n_cont, out_sz=out_sz,
                n_in_pad=pdims[0], out_pad=pdims[-1],
                compute_dtype=compute_dtype, epilogue_dtype=epilogue_dtype,
                out_dtype=out_dtype, num_tc=_num_tensorcores(kind))


# ----------------------------------------------------------------------------
# pallas_call wrapper
# ----------------------------------------------------------------------------
def mlp_pallas(x_cat, x_cont, prep, *, tile_b):
    B_pad, n_cat = x_cat.shape
    n_cont = prep["n_cont"]
    Ws, Bs = prep["Ws"], prep["Bs"]
    out_pad = prep["out_pad"]
    out_itemsize = np.dtype(prep["out_dtype"]).itemsize
    assert B_pad % tile_b == 0
    grid = (B_pad // tile_b,)

    flat = []
    for w, b in zip(Ws, Bs):
        flat += [w, b]

    param_bytes = sum(int(p.size) * p.dtype.itemsize for p in flat)
    io_bytes = tile_b * (n_cat * 4 + n_cont * 4 + out_pad * out_itemsize)
    # Keep the resident-weight scheme inside v7x's 64 MiB VMEM; at production widths
    # tile the widest layer's output (N) dim instead of growing this footprint.
    assert 2 * param_bytes + 2 * io_bytes < (48 << 20), (
        "resident weights exceed the VMEM budget; tile the output (N) dimension")
    vmem_limit = int(min(max(2 * param_bytes + 4 * io_bytes + (8 << 20), 32 << 20),
                         48 << 20))

    kernel = make_mlp_kernel(prep["cat_sizes"], n_cont, len(Ws),
                             prep["compute_dtype"], prep["epilogue_dtype"])

    flops = 2 * B_pad * sum(int(w.shape[0]) * int(w.shape[1]) for w in Ws)
    bytes_accessed = (B_pad * (n_cat + n_cont) * 4 + param_bytes
                      + B_pad * out_pad * out_itemsize)

    def build(param_buffers):
        in_specs = [pl.BlockSpec((tile_b, n_cat), lambda i: (i, 0)),
                    pl.BlockSpec((tile_b, n_cont), lambda i: (i, 0))]
        for p in flat:
            if param_buffers is None:
                in_specs.append(pl.BlockSpec(p.shape, lambda i: (0, 0)))
            else:
                # Constant index_map -> params DMA'd once; single-buffer them so the
                # resident weights do not occupy 2x VMEM.
                in_specs.append(pl.BlockSpec(p.shape, lambda i: (0, 0),
                                             pipeline_mode=pl.Buffered(param_buffers)))
        return pl.pallas_call(
            kernel,
            grid=grid,
            in_specs=in_specs,
            out_specs=pl.BlockSpec((tile_b, out_pad), lambda i: (i, 0)),
            out_shape=jax.ShapeDtypeStruct((B_pad, out_pad), prep["out_dtype"]),
            compiler_params=pltpu.CompilerParams(
                dimension_semantics=("parallel",),
                vmem_limit_bytes=vmem_limit),
            cost_estimate=pl.CostEstimate(flops=flops, transcendentals=0,
                                          bytes_accessed=bytes_accessed),
        )

    try:
        out = build(1)(x_cat, x_cont, *flat)
        return jax.block_until_ready(out)    # surface lowering issues so we can fall back
    except Exception:
        # This jax build rejected pipeline_mode=pl.Buffered(1): use default pipelining.
        return build(None)(x_cat, x_cont, *flat)


def _pick_tile_b(B, num_tc, max_tile_b=512):
    # One grid step per TensorCore: v5e/v6e -> single step (no per-step ~0.35us
    # overhead); v7x -> a multiple of 2 steps so both cores get work.  Rows in
    # multiples of 16 (bf16 sublane packing).
    steps = num_tc
    tile = _pad_to(-(-B // steps), 16)
    while tile > max_tile_b:
        steps += num_tc
        tile = _pad_to(-(-B // steps), 16)
    return tile


def tabular_forward(x_cat, x_cont, prep, *, max_tile_b=512):
    B = x_cat.shape[0]
    tile_b = _pick_tile_b(B, prep["num_tc"], max_tile_b)
    B_pad = _pad_to(B, tile_b)
    x_cat = x_cat.astype(jnp.int32)
    x_cont = x_cont.astype(jnp.float32)
    if B_pad != B:
        # Only the narrow raw inputs get batch-padded (a few columns), never a
        # 128-wide activation tensor -> no big HBM round trip.
        x_cat = jnp.pad(x_cat, ((0, B_pad - B), (0, 0)))
        x_cont = jnp.pad(x_cont, ((0, B_pad - B), (0, 0)))
    out = mlp_pallas(x_cat, x_cont, prep, tile_b=tile_b)
    return out[:B, :prep["out_sz"]].astype(jnp.float32)


# ----------------------------------------------------------------------------
# Parameter construction (deterministic, matching TabularModel.__init__ shapes);
# hidden/continuous BatchNorms get non-trivial running stats to exercise the fold.
# ----------------------------------------------------------------------------
def init_params(key, emb_sizes, n_cont, out_sz, layers):
    keys = iter(jax.random.split(key, 64))
    params = {}
    params["emb"] = [jax.random.normal(next(keys), (ni, nf), jnp.float32) * 0.1
                     for (ni, nf) in emb_sizes]
    params["bn_cont"] = dict(
        gamma=1.0 + 0.2 * jax.random.normal(next(keys), (n_cont,), jnp.float32),
        beta=0.1 * jax.random.normal(next(keys), (n_cont,), jnp.float32),
        mean=0.3 * jax.random.normal(next(keys), (n_cont,), jnp.float32),
        var=0.5 + jax.random.uniform(next(keys), (n_cont,), jnp.float32),
    )
    total_emb = sum(nf for _, nf in emb_sizes)
    fan_in = total_emb + n_cont
    params["hidden"] = []
    for h in layers:
        w = jax.random.normal(next(keys), (fan_in, h), jnp.float32) / jnp.sqrt(fan_in)
        b = jax.random.normal(next(keys), (h,), jnp.float32) * 0.01
        bn = dict(
            gamma=1.0 + 0.2 * jax.random.normal(next(keys), (h,), jnp.float32),
            beta=0.1 * jax.random.normal(next(keys), (h,), jnp.float32),
            mean=0.2 * jax.random.normal(next(keys), (h,), jnp.float32),
            var=0.5 + jax.random.uniform(next(keys), (h,), jnp.float32),
        )
        params["hidden"].append(dict(w=w, b=b, bn=bn))
        fan_in = h
    w = jax.random.normal(next(keys), (fan_in, out_sz), jnp.float32) / jnp.sqrt(fan_in)
    b = jax.random.normal(next(keys), (out_sz,), jnp.float32) * 0.01
    params["out"] = dict(w=w, b=b)
    return params


# pure-JAX f32 reference (same eval-mode semantics) for verification
def tabular_forward_ref(x_cat, x_cont, params):
    embs = [tab[x_cat[:, i]] for i, tab in enumerate(params["emb"])]
    x_emb = jnp.concatenate(embs, axis=1)
    bn = params["bn_cont"]
    xc = (x_cont - bn["mean"]) / jnp.sqrt(bn["var"] + BN_EPS) * bn["gamma"] + bn["beta"]
    x = jnp.concatenate([x_emb, xc], axis=1)
    for layer in params["hidden"]:
        x = jnp.maximum(x @ layer["w"] + layer["b"], 0.0)
        b = layer["bn"]
        x = (x - b["mean"]) / jnp.sqrt(b["var"] + BN_EPS) * b["gamma"] + b["beta"]
    return x @ params["out"]["w"] + params["out"]["b"]


if __name__ == "__main__":
    # small shapes consistent with the module
    emb_sizes = [(10, 4), (8, 3), (6, 5)]   # -> total_emb = 12
    n_cont = 4                              # -> n_in = 16 (one-hot width 28)
    layers = [32, 16]
    out_sz = 2
    B = 256

    key = jax.random.PRNGKey(0)
    k_par, k_cat, k_cont = jax.random.split(key, 3)
    params = init_params(k_par, emb_sizes, n_cont, out_sz, layers)

    cat_keys = jax.random.split(k_cat, len(emb_sizes))
    x_cat = jnp.stack(
        [jax.random.randint(cat_keys[i], (B,), 0, ni) for i, (ni, _) in enumerate(emb_sizes)],
        axis=1,
    ).astype(jnp.int32)                                  # (B, n_cat)
    x_cont = jax.random.normal(k_cont, (B, n_cont), jnp.float32)

    prep = prepare_params(params)   # one-time: BN + embedding fold, pad, bf16 cast
    out = tabular_forward(x_cat, x_cont, prep)
    out = jax.block_until_ready(out)

    ref = tabular_forward_ref(x_cat, x_cont, params)
    assert out.shape == (B, out_sz)
    # bf16 weights/activations/epilogue with f32 MXU accumulation vs f32 reference
    assert jnp.allclose(out, ref, atol=5e-2, rtol=5e-2), "Pallas output mismatch vs reference"

    print("KERNEL_OK")
</pallas_src>

<mosaic_0001>
module attributes {stable_mosaic.version = 11 : i64} {
  func.func @kernel(%arg0: i32, %arg1: memref<256x3xi32, #tpu.memory_space<vmem>>, %arg2: memref<256x4xf32, #tpu.memory_space<vmem>>, %arg3: memref<128x128xbf16, #tpu.memory_space<vmem>>, %arg4: memref<1x128xf32, #tpu.memory_space<vmem>>, %arg5: memref<128x128xbf16, #tpu.memory_space<vmem>>, %arg6: memref<1x128xf32, #tpu.memory_space<vmem>>, %arg7: memref<128x128xbf16, #tpu.memory_space<vmem>>, %arg8: memref<1x128xf32, #tpu.memory_space<vmem>>, %arg9: memref<256x128xbf16, #tpu.memory_space<vmem>>) attributes {dimension_semantics = [#tpu.dimension_semantics<parallel>], iteration_bounds = array<i64: 1>, scalar_prefetch = 0 : i64, scratch_operands = 0 : i64, tpu.core_type = #tpu.core_type<tc>, window_params = [{transform_indices = @transform_0, window_bounds = array<i64: 256, 3>}, {transform_indices = @transform_1, window_bounds = array<i64: 256, 4>}, {pipeline_mode = #tpu.pipeline_mode<synchronous>, transform_indices = @transform_2, window_bounds = array<i64: 128, 128>}, {pipeline_mode = #tpu.pipeline_mode<synchronous>, transform_indices = @transform_3, window_bounds = array<i64: 1, 128>}, {pipeline_mode = #tpu.pipeline_mode<synchronous>, transform_indices = @transform_4, window_bounds = array<i64: 128, 128>}, {pipeline_mode = #tpu.pipeline_mode<synchronous>, transform_indices = @transform_5, window_bounds = array<i64: 1, 128>}, {pipeline_mode = #tpu.pipeline_mode<synchronous>, transform_indices = @transform_6, window_bounds = array<i64: 128, 128>}, {pipeline_mode = #tpu.pipeline_mode<synchronous>, transform_indices = @transform_7, window_bounds = array<i64: 1, 128>}, {transform_indices = @transform_8, window_bounds = array<i64: 256, 128>}]} {
    %0 = tpu.iota {dimensions = array<i32: 1>} : vector<256x128xi32>
    %cst = arith.constant 0.000000e+00 : bf16
    %1 = vector.broadcast %cst : bf16 to vector<256x128xbf16>
    %c0 = arith.constant 0 : index
    %c0_0 = arith.constant 0 : index
    %2 = vector.load %arg1[%c0, %c0_0] : memref<256x3xi32, #tpu.memory_space<vmem>>, vector<256x1xi32>
    %c0_i32 = arith.constant 0 : i32
    %3 = vector.broadcast %c0_i32 : i32 to vector<256x1xi32>
    %4 = arith.addi %2, %3 : vector<256x1xi32>
    %5 = vector.broadcast %4 : vector<256x1xi32> to vector<256x128xi32>
    %6 = arith.cmpi eq, %0, %5 : vector<256x128xi32>
    %7 = arith.extui %6 : vector<256x128xi1> to vector<256x128xi32>
    %8 = arith.sitofp %7 : vector<256x128xi32> to vector<256x128xf32>
    %9 = arith.truncf %8 : vector<256x128xf32> to vector<256x128xbf16>
    %10 = arith.addf %1, %9 : vector<256x128xbf16>
    %c0_1 = arith.constant 0 : index
    %c1 = arith.constant 1 : index
    %11 = vector.load %arg1[%c0_1, %c1] : memref<256x3xi32, #tpu.memory_space<vmem>>, vector<256x1xi32>
    %c10_i32 = arith.constant 10 : i32
    %12 = vector.broadcast %c10_i32 : i32 to vector<256x1xi32>
    %13 = arith.addi %11, %12 : vector<256x1xi32>
    %14 = vector.broadcast %13 : vector<256x1xi32> to vector<256x128xi32>
    %15 = arith.cmpi eq, %0, %14 : vector<256x128xi32>
    %16 = arith.extui %15 : vector<256x128xi1> to vector<256x128xi32>
    %17 = arith.sitofp %16 : vector<256x128xi32> to vector<256x128xf32>
    %18 = arith.truncf %17 : vector<256x128xf32> to vector<256x128xbf16>
    %19 = arith.addf %10, %18 : vector<256x128xbf16>
    %c0_2 = arith.constant 0 : index
    %c2 = arith.constant 2 : index
    %20 = vector.load %arg1[%c0_2, %c2] : memref<256x3xi32, #tpu.memory_space<vmem>>, vector<256x1xi32>
    %c18_i32 = arith.constant 18 : i32
    %21 = vector.broadcast %c18_i32 : i32 to vector<256x1xi32>
    %22 = arith.addi %20, %21 : vector<256x1xi32>
    %23 = vector.broadcast %22 : vector<256x1xi32> to vector<256x128xi32>
    %24 = arith.cmpi eq, %0, %23 : vector<256x128xi32>
    %25 = arith.extui %24 : vector<256x128xi1> to vector<256x128xi32>
    %26 = arith.sitofp %25 : vector<256x128xi32> to vector<256x128xf32>
    %27 = arith.truncf %26 : vector<256x128xf32> to vector<256x128xbf16>
    %28 = arith.addf %19, %27 : vector<256x128xbf16>
    %c0_3 = arith.constant 0 : index
    %c0_4 = arith.constant 0 : index
    %29 = vector.load %arg2[%c0_3, %c0_4] : memref<256x4xf32, #tpu.memory_space<vmem>>, vector<256x1xf32>
    %30 = arith.truncf %29 : vector<256x1xf32> to vector<256x1xbf16>
    %c24_i32 = arith.constant 24 : i32
    %31 = vector.broadcast %c24_i32 : i32 to vector<256x128xi32>
    %32 = arith.cmpi eq, %0, %31 : vector<256x128xi32>
    %33 = vector.shape_cast %30 : vector<256x1xbf16> to vector<256x1xbf16>
    %34 = vector.broadcast %33 : vector<256x1xbf16> to vector<256x128xbf16>
    %35 = arith.select %32, %34, %28 : vector<256x128xi1>, vector<256x128xbf16>
    %c0_5 = arith.constant 0 : index
    %c1_6 = arith.constant 1 : index
    %36 = vector.load %arg2[%c0_5, %c1_6] : memref<256x4xf32, #tpu.memory_space<vmem>>, vector<256x1xf32>
    %37 = arith.truncf %36 : vector<256x1xf32> to vector<256x1xbf16>
    %c25_i32 = arith.constant 25 : i32
    %38 = vector.broadcast %c25_i32 : i32 to vector<256x128xi32>
    %39 = arith.cmpi eq, %0, %38 : vector<256x128xi32>
    %40 = vector.shape_cast %37 : vector<256x1xbf16> to vector<256x1xbf16>
    %41 = vector.broadcast %40 : vector<256x1xbf16> to vector<256x128xbf16>
    %42 = arith.select %39, %41, %35 : vector<256x128xi1>, vector<256x128xbf16>
    %c0_7 = arith.constant 0 : index
    %c2_8 = arith.constant 2 : index
    %43 = vector.load %arg2[%c0_7, %c2_8] : memref<256x4xf32, #tpu.memory_space<vmem>>, vector<256x1xf32>
    %44 = arith.truncf %43 : vector<256x1xf32> to vector<256x1xbf16>
    %c26_i32 = arith.constant 26 : i32
    %45 = vector.broadcast %c26_i32 : i32 to vector<256x128xi32>
    %46 = arith.cmpi eq, %0, %45 : vector<256x128xi32>
    %47 = vector.shape_cast %44 : vector<256x1xbf16> to vector<256x1xbf16>
    %48 = vector.broadcast %47 : vector<256x1xbf16> to vector<256x128xbf16>
    %49 = arith.select %46, %48, %42 : vector<256x128xi1>, vector<256x128xbf16>
    %c0_9 = arith.constant 0 : index
    %c3 = arith.constant 3 : index
    %50 = vector.load %arg2[%c0_9, %c3] : memref<256x4xf32, #tpu.memory_space<vmem>>, vector<256x1xf32>
    %51 = arith.truncf %50 : vector<256x1xf32> to vector<256x1xbf16>
    %c27_i32 = arith.constant 27 : i32
    %52 = vector.broadcast %c27_i32 : i32 to vector<256x128xi32>
    %53 = arith.cmpi eq, %0, %52 : vector<256x128xi32>
    %54 = vector.shape_cast %51 : vector<256x1xbf16> to vector<256x1xbf16>
    %55 = vector.broadcast %54 : vector<256x1xbf16> to vector<256x128xbf16>
    %56 = arith.select %53, %55, %49 : vector<256x128xi1>, vector<256x128xbf16>
    %c0_10 = arith.constant 0 : index
    %c0_11 = arith.constant 0 : index
    %57 = vector.load %arg3[%c0_10, %c0_11] : memref<128x128xbf16, #tpu.memory_space<vmem>>, vector<128x128xbf16>
    %cst_12 = arith.constant dense<0.000000e+00> : vector<256x128xf32>
    %58 = tpu.matmul %56, %57, %cst_12 {dimension_numbers = #tpu.dot_dimension_numbers<[1], [0], [0], [1], [0, 0, 1, 1], [], []>} : vector<256x128xbf16>, vector<128x128xbf16>, vector<256x128xf32> -> vector<256x128xf32>
    %c0_13 = arith.constant 0 : index
    %c0_14 = arith.constant 0 : index
    %59 = vector.load %arg4[%c0_13, %c0_14] : memref<1x128xf32, #tpu.memory_space<vmem>>, vector<1x128xf32>
    %60 = vector.broadcast %59 : vector<1x128xf32> to vector<256x128xf32>
    %61 = arith.addf %58, %60 : vector<256x128xf32>
    %cst_15 = arith.constant 0.000000e+00 : f32
    %62 = vector.broadcast %cst_15 : f32 to vector<256x128xf32>
    %63 = arith.maximumf %61, %62 : vector<256x128xf32>
    %64 = arith.truncf %63 : vector<256x128xf32> to vector<256x128xbf16>
    %c0_16 = arith.constant 0 : index
    %c0_17 = arith.constant 0 : index
    %65 = vector.load %arg5[%c0_16, %c0_17] : memref<128x128xbf16, #tpu.memory_space<vmem>>, vector<128x128xbf16>
    %cst_18 = arith.constant dense<0.000000e+00> : vector<256x128xf32>
    %66 = tpu.matmul %64, %65, %cst_18 {dimension_numbers = #tpu.dot_dimension_numbers<[1], [0], [0], [1], [0, 0, 1, 1], [], []>} : vector<256x128xbf16>, vector<128x128xbf16>, vector<256x128xf32> -> vector<256x128xf32>
    %c0_19 = arith.constant 0 : index
    %c0_20 = arith.constant 0 : index
    %67 = vector.load %arg6[%c0_19, %c0_20] : memref<1x128xf32, #tpu.memory_space<vmem>>, vector<1x128xf32>
    %68 = vector.broadcast %67 : vector<1x128xf32> to vector<256x128xf32>
    %69 = arith.addf %66, %68 : vector<256x128xf32>
    %cst_21 = arith.constant 0.000000e+00 : f32
    %70 = vector.broadcast %cst_21 : f32 to vector<256x128xf32>
    %71 = arith.maximumf %69, %70 : vector<256x128xf32>
    %72 = arith.truncf %71 : vector<256x128xf32> to vector<256x128xbf16>
    %c0_22 = arith.constant 0 : index
    %c0_23 = arith.constant 0 : index
    %73 = vector.load %arg7[%c0_22, %c0_23] : memref<128x128xbf16, #tpu.memory_space<vmem>>, vector<128x128xbf16>
    %cst_24 = arith.constant dense<0.000000e+00> : vector<256x128xf32>
    %74 = tpu.matmul %72, %73, %cst_24 {dimension_numbers = #tpu.dot_dimension_numbers<[1], [0], [0], [1], [0, 0, 1, 1], [], []>} : vector<256x128xbf16>, vector<128x128xbf16>, vector<256x128xf32> -> vector<256x128xf32>
    %c0_25 = arith.constant 0 : index
    %c0_26 = arith.constant 0 : index
    %75 = vector.load %arg8[%c0_25, %c0_26] : memref<1x128xf32, #tpu.memory_space<vmem>>, vector<1x128xf32>
    %76 = vector.broadcast %75 : vector<1x128xf32> to vector<256x128xf32>
    %77 = arith.addf %74, %76 : vector<256x128xf32>
    %78 = arith.truncf %77 : vector<256x128xf32> to vector<256x128xbf16>
    %c0_27 = arith.constant 0 : index
    %c0_28 = arith.constant 0 : index
    %79 = vector.load %arg9[%c0_27, %c0_28] : memref<256x128xbf16, #tpu.memory_space<vmem>>, vector<256x128xbf16>
    tpu.vector_store %arg9[%c0_27, %c0_28], %78 {strides = array<i32>} : memref<256x128xbf16, #tpu.memory_space<vmem>>, vector<256x128xbf16>,
    return
  }
  func.func @transform_0(%arg0: i32) -> (i32, i32) {
    %c0_i32 = arith.constant 0 : i32
    %c0_i32_0 = arith.constant 0 : i32
    return %arg0, %c0_i32 : i32, i32
  }
  func.func @transform_1(%arg0: i32) -> (i32, i32) {
    %c0_i32 = arith.constant 0 : i32
    %c0_i32_0 = arith.constant 0 : i32
    return %arg0, %c0_i32 : i32, i32
  }
  func.func @transform_2(%arg0: i32) -> (i32, i32) {
    %c0_i32 = arith.constant 0 : i32
    %c0_i32_0 = arith.constant 0 : i32
    %c0_i32_1 = arith.constant 0 : i32
    return %c0_i32, %c0_i32_0 : i32, i32
  }
  func.func @transform_3(%arg0: i32) -> (i32, i32) {
    %c0_i32 = arith.constant 0 : i32
    %c0_i32_0 = arith.constant 0 : i32
    %c0_i32_1 = arith.constant 0 : i32
    return %c0_i32, %c0_i32_0 : i32, i32
  }
  func.func @transform_4(%arg0: i32) -> (i32, i32) {
    %c0_i32 = arith.constant 0 : i32
    %c0_i32_0 = arith.constant 0 : i32
    %c0_i32_1 = arith.constant 0 : i32
    return %c0_i32, %c0_i32_0 : i32, i32
  }
  func.func @transform_5(%arg0: i32) -> (i32, i32) {
    %c0_i32 = arith.constant 0 : i32
    %c0_i32_0 = arith.constant 0 : i32
    %c0_i32_1 = arith.constant 0 : i32
    return %c0_i32, %c0_i32_0 : i32, i32
  }
  func.func @transform_6(%arg0: i32) -> (i32, i32) {
    %c0_i32 = arith.constant 0 : i32
    %c0_i32_0 = arith.constant 0 : i32
    %c0_i32_1 = arith.constant 0 : i32
    return %c0_i32, %c0_i32_0 : i32, i32
  }
  func.func @transform_7(%arg0: i32) -> (i32, i32) {
    %c0_i32 = arith.constant 0 : i32
    %c0_i32_0 = arith.constant 0 : i32
    %c0_i32_1 = arith.constant 0 : i32
    return %c0_i32, %c0_i32_0 : i32, i32
  }
  func.func @transform_8(%arg0: i32) -> (i32, i32) {
    %c0_i32 = arith.constant 0 : i32
    %c0_i32_0 = arith.constant 0 : i32
    return %arg0, %c0_i32 : i32, i32
  }
}

module attributes {stable_mosaic.version = 11 : i64} {
  func.func @kernel(%arg0: i32, %arg1: memref<256x3xi32, #tpu.memory_space<vmem>>, %arg2: memref<256x4xf32, #tpu.memory_space<vmem>>, %arg3: memref<128x128xbf16, #tpu.memory_space<vmem>>, %arg4: memref<1x128xf32, #tpu.memory_space<vmem>>, %arg5: memref<128x128xbf16, #tpu.memory_space<vmem>>, %arg6: memref<1x128xf32, #tpu.memory_space<vmem>>, %arg7: memref<128x128xbf16, #tpu.memory_space<vmem>>, %arg8: memref<1x128xf32, #tpu.memory_space<vmem>>, %arg9: memref<256x128xbf16, #tpu.memory_space<vmem>>) attributes {dimension_semantics = [#tpu.dimension_semantics<parallel>], iteration_bounds = array<i64: 1>, scalar_prefetch = 0 : i64, scratch_operands = 0 : i64, tpu.core_type = #tpu.core_type<tc>, window_params = [{transform_indices = @transform_0, window_bounds = array<i64: 256, 3>}, {transform_indices = @transform_1, window_bounds = array<i64: 256, 4>}, {pipeline_mode = #tpu.pipeline_mode<synchronous>, transform_indices = @transform_2, window_bounds = array<i64: 128, 128>}, {pipeline_mode = #tpu.pipeline_mode<synchronous>, transform_indices = @transform_3, window_bounds = array<i64: 1, 128>}, {pipeline_mode = #tpu.pipeline_mode<synchronous>, transform_indices = @transform_4, window_bounds = array<i64: 128, 128>}, {pipeline_mode = #tpu.pipeline_mode<synchronous>, transform_indices = @transform_5, window_bounds = array<i64: 1, 128>}, {pipeline_mode = #tpu.pipeline_mode<synchronous>, transform_indices = @transform_6, window_bounds = array<i64: 128, 128>}, {pipeline_mode = #tpu.pipeline_mode<synchronous>, transform_indices = @transform_7, window_bounds = array<i64: 1, 128>}, {transform_indices = @transform_8, window_bounds = array<i64: 256, 128>}]} {
    %0 = tpu.iota {dimensions = array<i32: 1>} : vector<256x128xi32>
    %cst = arith.constant 0.000000e+00 : bf16
    %1 = vector.broadcast %cst : bf16 to vector<256x128xbf16>
    %c0 = arith.constant 0 : index
    %c0_0 = arith.constant 0 : index
    %2 = vector.load %arg1[%c0, %c0_0] : memref<256x3xi32, #tpu.memory_space<vmem>>, vector<256x1xi32>
    %c0_i32 = arith.constant 0 : i32
    %3 = vector.broadcast %c0_i32 : i32 to vector<256x1xi32>
    %4 = arith.addi %2, %3 : vector<256x1xi32>
    %5 = vector.broadcast %4 : vector<256x1xi32> to vector<256x128xi32>
    %6 = arith.cmpi eq, %0, %5 : vector<256x128xi32>
    %7 = arith.extui %6 : vector<256x128xi1> to vector<256x128xi32>
    %8 = arith.sitofp %7 : vector<256x128xi32> to vector<256x128xf32>
    %9 = arith.truncf %8 : vector<256x128xf32> to vector<256x128xbf16>
    %10 = arith.addf %1, %9 : vector<256x128xbf16>
    %c0_1 = arith.constant 0 : index
    %c1 = arith.constant 1 : index
    %11 = vector.load %arg1[%c0_1, %c1] : memref<256x3xi32, #tpu.memory_space<vmem>>, vector<256x1xi32>
    %c10_i32 = arith.constant 10 : i32
    %12 = vector.broadcast %c10_i32 : i32 to vector<256x1xi32>
    %13 = arith.addi %11, %12 : vector<256x1xi32>
    %14 = vector.broadcast %13 : vector<256x1xi32> to vector<256x128xi32>
    %15 = arith.cmpi eq, %0, %14 : vector<256x128xi32>
    %16 = arith.extui %15 : vector<256x128xi1> to vector<256x128xi32>
    %17 = arith.sitofp %16 : vector<256x128xi32> to vector<256x128xf32>
    %18 = arith.truncf %17 : vector<256x128xf32> to vector<256x128xbf16>
    %19 = arith.addf %10, %18 : vector<256x128xbf16>
    %c0_2 = arith.constant 0 : index
    %c2 = arith.constant 2 : index
    %20 = vector.load %arg1[%c0_2, %c2] : memref<256x3xi32, #tpu.memory_space<vmem>>, vector<256x1xi32>
    %c18_i32 = arith.constant 18 : i32
    %21 = vector.broadcast %c18_i32 : i32 to vector<256x1xi32>
    %22 = arith.addi %20, %21 : vector<256x1xi32>
    %23 = vector.broadcast %22 : vector<256x1xi32> to vector<256x128xi32>
    %24 = arith.cmpi eq, %0, %23 : vector<256x128xi32>
    %25 = arith.extui %24 : vector<256x128xi1> to vector<256x128xi32>
    %26 = arith.sitofp %25 : vector<256x128xi32> to vector<256x128xf32>
    %27 = arith.truncf %26 : vector<256x128xf32> to vector<256x128xbf16>
    %28 = arith.addf %19, %27 : vector<256x128xbf16>
    %c0_3 = arith.constant 0 : index
    %c0_4 = arith.constant 0 : index
    %29 = vector.load %arg2[%c0_3, %c0_4] : memref<256x4xf32, #tpu.memory_space<vmem>>, vector<256x1xf32>
    %30 = arith.truncf %29 : vector<256x1xf32> to vector<256x1xbf16>
    %c24_i32 = arith.constant 24 : i32
    %31 = vector.broadcast %c24_i32 : i32 to vector<256x128xi32>
    %32 = arith.cmpi eq, %0, %31 : vector<256x128xi32>
    %33 = vector.shape_cast %30 : vector<256x1xbf16> to vector<256x1xbf16>
    %34 = vector.broadcast %33 : vector<256x1xbf16> to vector<256x128xbf16>
    %35 = arith.select %32, %34, %28 : vector<256x128xi1>, vector<256x128xbf16>
    %c0_5 = arith.constant 0 : index
    %c1_6 = arith.constant 1 : index
    %36 = vector.load %arg2[%c0_5, %c1_6] : memref<256x4xf32, #tpu.memory_space<vmem>>, vector<256x1xf32>
    %37 = arith.truncf %36 : vector<256x1xf32> to vector<256x1xbf16>
    %c25_i32 = arith.constant 25 : i32
    %38 = vector.broadcast %c25_i32 : i32 to vector<256x128xi32>
    %39 = arith.cmpi eq, %0, %38 : vector<256x128xi32>
    %40 = vector.shape_cast %37 : vector<256x1xbf16> to vector<256x1xbf16>
    %41 = vector.broadcast %40 : vector<256x1xbf16> to vector<256x128xbf16>
    %42 = arith.select %39, %41, %35 : vector<256x128xi1>, vector<256x128xbf16>
    %c0_7 = arith.constant 0 : index
    %c2_8 = arith.constant 2 : index
    %43 = vector.load %arg2[%c0_7, %c2_8] : memref<256x4xf32, #tpu.memory_space<vmem>>, vector<256x1xf32>
    %44 = arith.truncf %43 : vector<256x1xf32> to vector<256x1xbf16>
    %c26_i32 = arith.constant 26 : i32
    %45 = vector.broadcast %c26_i32 : i32 to vector<256x128xi32>
    %46 = arith.cmpi eq, %0, %45 : vector<256x128xi32>
    %47 = vector.shape_cast %44 : vector<256x1xbf16> to vector<256x1xbf16>
    %48 = vector.broadcast %47 : vector<256x1xbf16> to vector<256x128xbf16>
    %49 = arith.select %46, %48, %42 : vector<256x128xi1>, vector<256x128xbf16>
    %c0_9 = arith.constant 0 : index
    %c3 = arith.constant 3 : index
    %50 = vector.load %arg2[%c0_9, %c3] : memref<256x4xf32, #tpu.memory_space<vmem>>, vector<256x1xf32>
    %51 = arith.truncf %50 : vector<256x1xf32> to vector<256x1xbf16>
    %c27_i32 = arith.constant 27 : i32
    %52 = vector.broadcast %c27_i32 : i32 to vector<256x128xi32>
    %53 = arith.cmpi eq, %0, %52 : vector<256x128xi32>
    %54 = vector.shape_cast %51 : vector<256x1xbf16> to vector<256x1xbf16>
    %55 = vector.broadcast %54 : vector<256x1xbf16> to vector<256x128xbf16>
    %56 = arith.select %53, %55, %49 : vector<256x128xi1>, vector<256x128xbf16>
    %c0_10 = arith.constant 0 : index
    %c0_11 = arith.constant 0 : index
    %57 = vector.load %arg3[%c0_10, %c0_11] : memref<128x128xbf16, #tpu.memory_space<vmem>>, vector<128x128xbf16>
    %cst_12 = arith.constant dense<0.000000e+00> : vector<256x128xf32>
    %58 = tpu.matmul %56, %57, %cst_12 {dimension_numbers = #tpu.dot_dimension_numbers<[1], [0], [0], [1], [0, 0, 1, 1], [], []>} : vector<256x128xbf16>, vector<128x128xbf16>, vector<256x128xf32> -> vector<256x128xf32>
    %c0_13 = arith.constant 0 : index
    %c0_14 = arith.constant 0 : index
    %59 = vector.load %arg4[%c0_13, %c0_14] : memref<1x128xf32, #tpu.memory_space<vmem>>, vector<1x128xf32>
    %60 = vector.broadcast %59 : vector<1x128xf32> to vector<256x128xf32>
    %61 = arith.addf %58, %60 : vector<256x128xf32>
    %cst_15 = arith.constant 0.000000e+00 : f32
    %62 = vector.broadcast %cst_15 : f32 to vector<256x128xf32>
    %63 = arith.maximumf %61, %62 : vector<256x128xf32>
    %64 = arith.truncf %63 : vector<256x128xf32> to vector<256x128xbf16>
    %c0_16 = arith.constant 0 : index
    %c0_17 = arith.constant 0 : index
    %65 = vector.load %arg5[%c0_16, %c0_17] : memref<128x128xbf16, #tpu.memory_space<vmem>>, vector<128x128xbf16>
    %cst_18 = arith.constant dense<0.000000e+00> : vector<256x128xf32>
    %66 = tpu.matmul %64, %65, %cst_18 {dimension_numbers = #tpu.dot_dimension_numbers<[1], [0], [0], [1], [0, 0, 1, 1], [], []>} : vector<256x128xbf16>, vector<128x128xbf16>, vector<256x128xf32> -> vector<256x128xf32>
    %c0_19 = arith.constant 0 : index
    %c0_20 = arith.constant 0 : index
    %67 = vector.load %arg6[%c0_19, %c0_20] : memref<1x128xf32, #tpu.memory_space<vmem>>, vector<1x128xf32>
    %68 = vector.broadcast %67 : vector<1x128xf32> to vector<256x128xf32>
    %69 = arith.addf %66, %68 : vector<256x128xf32>
    %cst_21 = arith.constant 0.000000e+00 : f32
    %70 = vector.broadcast %cst_21 : f32 to vector<256x128xf32>
    %71 = arith.maximumf %69, %70 : vector<256x128xf32>
    %72 = arith.truncf %71 : vector<256x128xf32> to vector<256x128xbf16>
    %c0_22 = arith.constant 0 : index
    %c0_23 = arith.constant 0 : index
    %73 = vector.load %arg7[%c0_22, %c0_23] : memref<128x128xbf16, #tpu.memory_space<vmem>>, vector<128x128xbf16>
    %cst_24 = arith.constant dense<0.000000e+00> : vector<256x128xf32>
    %74 = tpu.matmul %72, %73, %cst_24 {dimension_numbers = #tpu.dot_dimension_numbers<[1], [0], [0], [1], [0, 0, 1, 1], [], []>} : vector<256x128xbf16>, vector<128x128xbf16>, vector<256x128xf32> -> vector<256x128xf32>
    %c0_25 = arith.constant 0 : index
    %c0_26 = arith.constant 0 : index
    %75 = vector.load %arg8[%c0_25, %c0_26] : memref<1x128xf32, #tpu.memory_space<vmem>>, vector<1x128xf32>
    %76 = vector.broadcast %75 : vector<1x128xf32> to vector<256x128xf32>
    %77 = arith.addf %74, %76 : vector<256x128xf32>
    %78 = arith.truncf %77 : vector<256x128xf32> to vector<256x128xbf16>
    %c0_27 = arith.constant 0 : index
    %c0_28 = arith.constant 0 : index
    %79 = vector.load %arg9[%c0_27, %c0_28] : memref<256x128xbf16, #tpu.memory_space<vmem>>, vector<256x128xbf16>
    tpu.vector_store %arg9[%c0_27, %c0_28], %78 {strides = array<i32>} : memref<256x128xbf16, #tpu.memory_space<vmem>>, vector<256x128xbf16>,
    return
  }
  func.func @transform_0(%arg0: i32) -> (i32, i32) {
    %c0_i32 = arith.constant 0 : i32
    %c0_i32_0 = arith.constant 0 : i32
    return %arg0, %c0_i32 : i32, i32
  }
  func.func @transform_1(%arg0: i32) -> (i32, i32) {
    %c0_i32 = arith.constant 0 : i32
    %c0_i32_0 = arith.constant 0 : i32
    return %arg0, %c0_i32 : i32, i32
  }
  func.func @transform_2(%arg0: i32) -> (i32, i32) {
    %c0_i32 = arith.constant 0 : i32
    %c0_i32_0 = arith.constant 0 : i32
    %c0_i32_1 = arith.constant 0 : i32
    return %c0_i32, %c0_i32_0 : i32, i32
  }
  func.func @transform_3(%arg0: i32) -> (i32, i32) {
    %c0_i32 = arith.constant 0 : i32
    %c0_i32_0 = arith.constant 0 : i32
    %c0_i32_1 = arith.constant 0 : i32
    return %c0_i32, %c0_i32_0 : i32, i32
  }
  func.func @transform_4(%arg0: i32) -> (i32, i32) {
    %c0_i32 = arith.constant 0 : i32
    %c0_i32_0 = arith.constant 0 : i32
    %c0_i32_1 = arith.constant 0 : i32
    return %c0_i32, %c0_i32_0 : i32, i32
  }
  func.func @transform_5(%arg0: i32) -> (i32, i32) {
    %c0_i32 = arith.constant 0 : i32
    %c0_i32_0 = arith.constant 0 : i32
    %c0_i32_1 = arith.constant 0 : i32
    return %c0_i32, %c0_i32_0 : i32, i32
  }
  func.func @transform_6(%arg0: i32) -> (i32, i32) {
    %c0_i32 = arith.constant 0 : i32
    %c0_i32_0 = arith.constant 0 : i32
    %c0_i32_1 = arith.constant 0 : i32
    return %c0_i32, %c0_i32_0 : i32, i32
  }
  func.func @transform_7(%arg0: i32) -> (i32, i32) {
    %c0_i32 = arith.constant 0 : i32
    %c0_i32_0 = arith.constant 0 : i32
    %c0_i32_1 = arith.constant 0 : i32
    return %c0_i32, %c0_i32_0 : i32, i32
  }
  func.func @transform_8(%arg0: i32) -> (i32, i32) {
    %c0_i32 = arith.constant 0 : i32
    %c0_i32_0 = arith.constant 0 : i32
    return %arg0, %c0_i32 : i32, i32
  }
}

</mosaic_0001>

<llo_original>
// kernel: tpu_custom_call.1
$region0: #{tpu_custom_call.1}
  #allocation0 [shape = 'u32[]', space=smem, size = 0x4, offset = 0x4, fixed_abs, tag = 'smem constant byte address 0x4 - core index']
  #allocation1 [shape = 'u32[144,128]{1,0:T(1,128)}', space=vmem, size = 0x12000, scoped, tag = 'internal scratch']
  %s0 = inlined_call_operand.vmem [shape: s32[256,3], index: 0, kind: input, shape index: {}]
  %s1 = inlined_call_operand.vmem [shape: f32[256,4], index: 1, kind: input, shape index: {}]
  %s2 = inlined_call_operand.vmem [shape: bf16[128,128], index: 2, kind: input, shape index: {}]
  %s3 = inlined_call_operand.vmem [shape: f32[1,128], index: 3, kind: input, shape index: {}]
  %s4 = inlined_call_operand.vmem [shape: bf16[128,128], index: 4, kind: input, shape index: {}]
  %s5 = inlined_call_operand.vmem [shape: f32[1,128], index: 5, kind: input, shape index: {}]
  %s6 = inlined_call_operand.vmem [shape: bf16[128,128], index: 6, kind: input, shape index: {}]
  %s7 = inlined_call_operand.vmem [shape: f32[1,128], index: 7, kind: input, shape index: {}]
  %s8 = inlined_call_operand.hbm [shape: bf16[256,128], index: 8, kind: output, shape index: {}]
  %s9 = sld [smem:[#allocation0]]
  $region42: #{tpu_custom_call.1} parent=0
    _
  %s11 = ssub.s32 1, %s9
  %s12 = scalar_select 0, %s11, %s9
  $region1: #{tpu_custom_call.1} parent=0
    #allocation2 [shape = 'u8[65536]{0}', space=vmem, size = 0x10000, scoped, tag = 'output window, operand 0, single buffered']
    #allocation3 [shape = 's32[1]{0}', space=sflag, size = 0x4, scoped, tag = 'scoped memory for tpu_custom_call.1']
    %13 = vsyncpa [#allocation3], 0
    // Predicated region
    $region2: #{tpu_custom_call.1} parent=1 // pred_check
      _
    $region3: #{tpu_custom_call.1} parent=1 // pred_check_branch
      %15 = sbr.rel (0) target = $region5
    $region4: #{tpu_custom_call.1} parent=1 // pred_region
      _
    $region5: #{tpu_custom_call.1} parent=1 // pred_fallthru
      _
    // Predicated region
    $region6: #{tpu_custom_call.1} parent=1 // pred_check
      _
    $region7: #{tpu_custom_call.1} parent=1 // pred_check_branch
      %17 = sbr.rel (0) target = $region9
    $region8: #{tpu_custom_call.1} parent=1 // pred_region
      _
    $region9: #{tpu_custom_call.1} parent=1 // pred_fallthru
      _
    // Predicated region
    $region10: #{tpu_custom_call.1} parent=1 // pred_check
      _
    $region11: #{tpu_custom_call.1} parent=1 // pred_check_branch
      %19 = sbr.rel (0) target = $region13
    $region12: #{tpu_custom_call.1} parent=1 // pred_region
      _
    $region13: #{tpu_custom_call.1} parent=1 // pred_fallthru
      _
    // Predicated region
    $region14: #{tpu_custom_call.1} parent=1 // pred_check
      _
    $region15: #{tpu_custom_call.1} parent=1 // pred_check_branch
      %21 = sbr.rel (0) target = $region17
    $region16: #{tpu_custom_call.1} parent=1 // pred_region
      _
    $region17: #{tpu_custom_call.1} parent=1 // pred_fallthru
      _
    // Predicated region
    $region18: #{tpu_custom_call.1} parent=1 // pred_check
      _
    $region19: #{tpu_custom_call.1} parent=1 // pred_check_branch
      %23 = sbr.rel (0) target = $region21
    $region20: #{tpu_custom_call.1} parent=1 // pred_region
      _
    $region21: #{tpu_custom_call.1} parent=1 // pred_fallthru
      _
    // Predicated region
    $region22: #{tpu_custom_call.1} parent=1 // pred_check
      _
    $region23: #{tpu_custom_call.1} parent=1 // pred_check_branch
      %25 = sbr.rel (0) target = $region25
    $region24: #{tpu_custom_call.1} parent=1 // pred_region
      _
    $region25: #{tpu_custom_call.1} parent=1 // pred_fallthru
      _
    // Predicated region
    $region26: #{tpu_custom_call.1} parent=1 // pred_check
      _
    $region27: #{tpu_custom_call.1} parent=1 // pred_check_branch
      %27 = sbr.rel (0) target = $region29
    $region28: #{tpu_custom_call.1} parent=1 // pred_region
      _
    $region29: #{tpu_custom_call.1} parent=1 // pred_fallthru
      _
    // Predicated region
    $region30: #{tpu_custom_call.1} parent=1 // pred_check
      _
    $region31: #{tpu_custom_call.1} parent=1 // pred_check_branch
      %29 = sbr.rel (0) target = $region33
    $region32: #{tpu_custom_call.1} parent=1 // pred_region
      _
    $region33: #{tpu_custom_call.1} parent=1 // pred_fallthru
      _
    %v33 = vlaneseq
    %v34 = vand.u32 %v33, 127
    %v35 = vld [vmem:[%s0] sm:$0xff]
    %v36 = vld [vmem:[%s0 + $0x8] sm:$0xff]
    %v37 = vld [vmem:[%s0 + $0x10] sm:$0xff]
    %v38 = vld [vmem:[%s0 + $0x18] sm:$0xff]
    %v39 = vld [vmem:[%s0 + $0x20] sm:$0xff]
    %v40 = vld [vmem:[%s0 + $0x28] sm:$0xff]
    %v41 = vld [vmem:[%s0 + $0x30] sm:$0xff]
    %v42 = vld [vmem:[%s0 + $0x38] sm:$0xff]
    %v43 = vld [vmem:[%s0 + $0x40] sm:$0xff]
    %v44 = vld [vmem:[%s0 + $0x48] sm:$0xff]
    %v45 = vld [vmem:[%s0 + $0x50] sm:$0xff]
    %v46 = vld [vmem:[%s0 + $0x58] sm:$0xff]
    %v47 = vld [vmem:[%s0 + $0x60] sm:$0xff]
    %v48 = vld [vmem:[%s0 + $0x68] sm:$0xff]
    %v49 = vld [vmem:[%s0 + $0x70] sm:$0xff]
    %v50 = vld [vmem:[%s0 + $0x78] sm:$0xff]
    %v51 = vld [vmem:[%s0 + $0x80] sm:$0xff]
    %v52 = vld [vmem:[%s0 + $0x88] sm:$0xff]
    %v53 = vld [vmem:[%s0 + $0x90] sm:$0xff]
    %v54 = vld [vmem:[%s0 + $0x98] sm:$0xff]
    %v55 = vld [vmem:[%s0 + $0xa0] sm:$0xff]
    %v56 = vld [vmem:[%s0 + $0xa8] sm:$0xff]
    %v57 = vld [vmem:[%s0 + $0xb0] sm:$0xff]
    %v58 = vld [vmem:[%s0 + $0xb8] sm:$0xff]
    %v59 = vld [vmem:[%s0 + $0xc0] sm:$0xff]
    %v60 = vld [vmem:[%s0 + $0xc8] sm:$0xff]
    %v61 = vld [vmem:[%s0 + $0xd0] sm:$0xff]
    %v62 = vld [vmem:[%s0 + $0xd8] sm:$0xff]
    %v63 = vld [vmem:[%s0 + $0xe0] sm:$0xff]
    %v64 = vld [vmem:[%s0 + $0xe8] sm:$0xff]
    %v65 = vld [vmem:[%s0 + $0xf0] sm:$0xff]
    %v66 = vld [vmem:[%s0 + $0xf8] sm:$0xff]
    %67 = vset.pattern.permute.xlu0 0
    %68 = vperm.xlu0 %67, %v35
    %v69 = vpop.permute.xlu0 %68
    %70 = vset.pattern.permute.xlu0 0
    %71 = vperm.xlu0 %70, %v36
    %v72 = vpop.permute.xlu0 %71
    %73 = vset.pattern.permute.xlu0 0
    %74 = vperm.xlu0 %73, %v37
    %v75 = vpop.permute.xlu0 %74
    %76 = vset.pattern.permute.xlu0 0
    %77 = vperm.xlu0 %76, %v38
    %v78 = vpop.permute.xlu0 %77
    %79 = vset.pattern.permute.xlu0 0
    %80 = vperm.xlu0 %79, %v39
    %v81 = vpop.permute.xlu0 %80
    %82 = vset.pattern.permute.xlu0 0
    %83 = vperm.xlu0 %82, %v40
    %v84 = vpop.permute.xlu0 %83
    %85 = vset.pattern.permute.xlu0 0
    %86 = vperm.xlu0 %85, %v41
    %v87 = vpop.permute.xlu0 %86
    %88 = vset.pattern.permute.xlu0 0
    %89 = vperm.xlu0 %88, %v42
    %v90 = vpop.permute.xlu0 %89
    %91 = vset.pattern.permute.xlu0 0
    %92 = vperm.xlu0 %91, %v43
    %v93 = vpop.permute.xlu0 %92
    %94 = vset.pattern.permute.xlu0 0
    %95 = vperm.xlu0 %94, %v44
    %v96 = vpop.permute.xlu0 %95
    %97 = vset.pattern.permute.xlu0 0
    %98 = vperm.xlu0 %97, %v45
    %v99 = vpop.permute.xlu0 %98
    %100 = vset.pattern.permute.xlu0 0
    %101 = vperm.xlu0 %100, %v46
    %v102 = vpop.permute.xlu0 %101
    %103 = vset.pattern.permute.xlu0 0
    %104 = vperm.xlu0 %103, %v47
    %v105 = vpop.permute.xlu0 %104
    %106 = vset.pattern.permute.xlu0 0
    %107 = vperm.xlu0 %106, %v48
    %v108 = vpop.permute.xlu0 %107
    %109 = vset.pattern.permute.xlu0 0
    %110 = vperm.xlu0 %109, %v49
    %v111 = vpop.permute.xlu0 %110
    %112 = vset.pattern.permute.xlu0 0
    %113 = vperm.xlu0 %112, %v50
    %v114 = vpop.permute.xlu0 %113
    %115 = vset.pattern.permute.xlu0 0
    %116 = vperm.xlu0 %115, %v51
    %v117 = vpop.permute.xlu0 %116
    %118 = vset.pattern.permute.xlu0 0
    %119 = vperm.xlu0 %118, %v52
    %v120 = vpop.permute.xlu0 %119
    %121 = vset.pattern.permute.xlu0 0
    %122 = vperm.xlu0 %121, %v53
    %v123 = vpop.permute.xlu0 %122
    %124 = vset.pattern.permute.xlu0 0
    %125 = vperm.xlu0 %124, %v54
    %v126 = vpop.permute.xlu0 %125
    %127 = vset.pattern.permute.xlu0 0
    %128 = vperm.xlu0 %127, %v55
    %v129 = vpop.permute.xlu0 %128
    %130 = vset.pattern.permute.xlu0 0
    %131 = vperm.xlu0 %130, %v56
    %v132 = vpop.permute.xlu0 %131
    %133 = vset.pattern.permute.xlu0 0
    %134 = vperm.xlu0 %133, %v57
    %v135 = vpop.permute.xlu0 %134
    %136 = vset.pattern.permute.xlu0 0
    %137 = vperm.xlu0 %136, %v58
    %v138 = vpop.permute.xlu0 %137
    %139 = vset.pattern.permute.xlu0 0
    %140 = vperm.xlu0 %139, %v59
    %v141 = vpop.permute.xlu0 %140
    %142 = vset.pattern.permute.xlu0 0
    %143 = vperm.xlu0 %142, %v60
    %v144 = vpop.permute.xlu0 %143
    %145 = vset.pattern.permute.xlu0 0
    %146 = vperm.xlu0 %145, %v61
    %v147 = vpop.permute.xlu0 %146
    %148 = vset.pattern.permute.xlu0 0
    %149 = vperm.xlu0 %148, %v62
    %v150 = vpop.permute.xlu0 %149
    %151 = vset.pattern.permute.xlu0 0
    %152 = vperm.xlu0 %151, %v63
    %v153 = vpop.permute.xlu0 %152
    %154 = vset.pattern.permute.xlu0 0
    %155 = vperm.xlu0 %154, %v64
    %v156 = vpop.permute.xlu0 %155
    %157 = vset.pattern.permute.xlu0 0
    %158 = vperm.xlu0 %157, %v65
    %v159 = vpop.permute.xlu0 %158
    %160 = vset.pattern.permute.xlu0 0
    %161 = vperm.xlu0 %160, %v66
    %v162 = vpop.permute.xlu0 %161
    %vm163 = vcmp.eq.s32.totalorder %v34, %v69
    %vm164 = vcmp.eq.s32.totalorder %v34, %v72
    %vm165 = vcmp.eq.s32.totalorder %v34, %v75
    %vm166 = vcmp.eq.s32.totalorder %v34, %v78
    %vm167 = vcmp.eq.s32.totalorder %v34, %v81
    %vm168 = vcmp.eq.s32.totalorder %v34, %v84
    %vm169 = vcmp.eq.s32.totalorder %v34, %v87
    %vm170 = vcmp.eq.s32.totalorder %v34, %v90
    %vm171 = vcmp.eq.s32.totalorder %v34, %v93
    %vm172 = vcmp.eq.s32.totalorder %v34, %v96
    %vm173 = vcmp.eq.s32.totalorder %v34, %v99
    %vm174 = vcmp.eq.s32.totalorder %v34, %v102
    %vm175 = vcmp.eq.s32.totalorder %v34, %v105
    %vm176 = vcmp.eq.s32.totalorder %v34, %v108
    %vm177 = vcmp.eq.s32.totalorder %v34, %v111
    %vm178 = vcmp.eq.s32.totalorder %v34, %v114
    %vm179 = vcmp.eq.s32.totalorder %v34, %v117
    %vm180 = vcmp.eq.s32.totalorder %v34, %v120
    %vm181 = vcmp.eq.s32.totalorder %v34, %v123
    %vm182 = vcmp.eq.s32.totalorder %v34, %v126
    %vm183 = vcmp.eq.s32.totalorder %v34, %v129
    %vm184 = vcmp.eq.s32.totalorder %v34, %v132
    %vm185 = vcmp.eq.s32.totalorder %v34, %v135
    %vm186 = vcmp.eq.s32.totalorder %v34, %v138
    %vm187 = vcmp.eq.s32.totalorder %v34, %v141
    %vm188 = vcmp.eq.s32.totalorder %v34, %v144
    %vm189 = vcmp.eq.s32.totalorder %v34, %v147
    %vm190 = vcmp.eq.s32.totalorder %v34, %v150
    %vm191 = vcmp.eq.s32.totalorder %v34, %v153
    %vm192 = vcmp.eq.s32.totalorder %v34, %v156
    %vm193 = vcmp.eq.s32.totalorder %v34, %v159
    %vm194 = vcmp.eq.s32.totalorder %v34, %v162
    %v195 = vsel %vm163, 1, 0
    %v196 = vsel %vm164, 1, 0
    %v197 = vsel %vm165, 1, 0
    %v198 = vsel %vm166, 1, 0
    %v199 = vsel %vm167, 1, 0
    %v200 = vsel %vm168, 1, 0
    %v201 = vsel %vm169, 1, 0
    %v202 = vsel %vm170, 1, 0
    %v203 = vsel %vm171, 1, 0
    %v204 = vsel %vm172, 1, 0
    %v205 = vsel %vm173, 1, 0
    %v206 = vsel %vm174, 1, 0
    %v207 = vsel %vm175, 1, 0
    %v208 = vsel %vm176, 1, 0
    %v209 = vsel %vm177, 1, 0
    %v210 = vsel %vm178, 1, 0
    %v211 = vsel %vm179, 1, 0
    %v212 = vsel %vm180, 1, 0
    %v213 = vsel %vm181, 1, 0
    %v214 = vsel %vm182, 1, 0
    %v215 = vsel %vm183, 1, 0
    %v216 = vsel %vm184, 1, 0
    %v217 = vsel %vm185, 1, 0
    %v218 = vsel %vm186, 1, 0
    %v219 = vsel %vm187, 1, 0
    %v220 = vsel %vm188, 1, 0
    %v221 = vsel %vm189, 1, 0
    %v222 = vsel %vm190, 1, 0
    %v223 = vsel %vm191, 1, 0
    %v224 = vsel %vm192, 1, 0
    %v225 = vsel %vm193, 1, 0
    %v226 = vsel %vm194, 1, 0
    %v227 = vcvt.s32.f32 %v195
    %v228 = vcvt.s32.f32 %v196
    %v229 = vcvt.s32.f32 %v197
    %v230 = vcvt.s32.f32 %v198
    %v231 = vcvt.s32.f32 %v199
    %v232 = vcvt.s32.f32 %v200
    %v233 = vcvt.s32.f32 %v201
    %v234 = vcvt.s32.f32 %v202
    %v235 = vcvt.s32.f32 %v203
    %v236 = vcvt.s32.f32 %v204
    %v237 = vcvt.s32.f32 %v205
    %v238 = vcvt.s32.f32 %v206
    %v239 = vcvt.s32.f32 %v207
    %v240 = vcvt.s32.f32 %v208
    %v241 = vcvt.s32.f32 %v209
    %v242 = vcvt.s32.f32 %v210
    %v243 = vcvt.s32.f32 %v211
    %v244 = vcvt.s32.f32 %v212
    %v245 = vcvt.s32.f32 %v213
    %v246 = vcvt.s32.f32 %v214
    %v247 = vcvt.s32.f32 %v215
    %v248 = vcvt.s32.f32 %v216
    %v249 = vcvt.s32.f32 %v217
    %v250 = vcvt.s32.f32 %v218
    %v251 = vcvt.s32.f32 %v219
    %v252 = vcvt.s32.f32 %v220
    %v253 = vcvt.s32.f32 %v221
    %v254 = vcvt.s32.f32 %v222
    %v255 = vcvt.s32.f32 %v223
    %v256 = vcvt.s32.f32 %v224
    %v257 = vcvt.s32.f32 %v225
    %v258 = vcvt.s32.f32 %v226
    %v259 = vpack.c.bf16 %v228, %v227
    %v260 = vpack.c.bf16 %v230, %v229
    %v261 = vpack.c.bf16 %v232, %v231
    %v262 = vpack.c.bf16 %v234, %v233
    %v263 = vpack.c.bf16 %v236, %v235
    %v264 = vpack.c.bf16 %v238, %v237
    %v265 = vpack.c.bf16 %v240, %v239
    %v266 = vpack.c.bf16 %v242, %v241
    %v267 = vpack.c.bf16 %v244, %v243
    %v268 = vpack.c.bf16 %v246, %v245
    %v269 = vpack.c.bf16 %v248, %v247
    %v270 = vpack.c.bf16 %v250, %v249
    %v271 = vpack.c.bf16 %v252, %v251
    %v272 = vpack.c.bf16 %v254, %v253
    %v273 = vpack.c.bf16 %v256, %v255
    %v274 = vpack.c.bf16 %v258, %v257
    %v275 = vadd.bf16 %v259, 0
    %v276 = vadd.bf16 %v260, 0
    %v277 = vadd.bf16 %v261, 0
    %v278 = vadd.bf16 %v262, 0
    %v279 = vadd.bf16 %v263, 0
    %v280 = vadd.bf16 %v264, 0
    %v281 = vadd.bf16 %v265, 0
    %v282 = vadd.bf16 %v266, 0
    %v283 = vadd.bf16 %v267, 0
    %v284 = vadd.bf16 %v268, 0
    %v285 = vadd.bf16 %v269, 0
    %v286 = vadd.bf16 %v270, 0
    %v287 = vadd.bf16 %v271, 0
    %v288 = vadd.bf16 %v272, 0
    %v289 = vadd.bf16 %v273, 0
    %v290 = vadd.bf16 %v274, 0
    %v291 = vadd.s32 %v35, 10
    %v292 = vadd.s32 %v36, 10
    %v293 = vadd.s32 %v37, 10
    %v294 = vadd.s32 %v38, 10
    %v295 = vadd.s32 %v39, 10
    %v296 = vadd.s32 %v40, 10
    %v297 = vadd.s32 %v41, 10
    %v298 = vadd.s32 %v42, 10
    %v299 = vadd.s32 %v43, 10
    %v300 = vadd.s32 %v44, 10
    %v301 = vadd.s32 %v45, 10
    %v302 = vadd.s32 %v46, 10
    %v303 = vadd.s32 %v47, 10
    %v304 = vadd.s32 %v48, 10
    %v305 = vadd.s32 %v49, 10
    %v306 = vadd.s32 %v50, 10
    %v307 = vadd.s32 %v51, 10
    %v308 = vadd.s32 %v52, 10
    %v309 = vadd.s32 %v53, 10
    %v310 = vadd.s32 %v54, 10
    %v311 = vadd.s32 %v55, 10
    %v312 = vadd.s32 %v56, 10
    %v313 = vadd.s32 %v57, 10
    %v314 = vadd.s32 %v58, 10
    %v315 = vadd.s32 %v59, 10
    %v316 = vadd.s32 %v60, 10
    %v317 = vadd.s32 %v61, 10
    %v318 = vadd.s32 %v62, 10
    %v319 = vadd.s32 %v63, 10
    %v320 = vadd.s32 %v64, 10
    %v321 = vadd.s32 %v65, 10
    %v322 = vadd.s32 %v66, 10
    %323 = vset.pattern.permute.xlu0 1
    %324 = vperm.xlu0 %323, %v291
    %v325 = vpop.permute.xlu0 %324
    %326 = vset.pattern.permute.xlu0 1
    %327 = vperm.xlu0 %326, %v292
    %v328 = vpop.permute.xlu0 %327
    %329 = vset.pattern.permute.xlu0 1
    %330 = vperm.xlu0 %329, %v293
    %v331 = vpop.permute.xlu0 %330
    %332 = vset.pattern.permute.xlu0 1
    %333 = vperm.xlu0 %332, %v294
    %v334 = vpop.permute.xlu0 %333
    %335 = vset.pattern.permute.xlu0 1
    %336 = vperm.xlu0 %335, %v295
    %v337 = vpop.permute.xlu0 %336
    %338 = vset.pattern.permute.xlu0 1
    %339 = vperm.xlu0 %338, %v296
    %v340 = vpop.permute.xlu0 %339
    %341 = vset.pattern.permute.xlu0 1
    %342 = vperm.xlu0 %341, %v297
    %v343 = vpop.permute.xlu0 %342
    %344 = vset.pattern.permute.xlu0 1
    %345 = vperm.xlu0 %344, %v298
    %v346 = vpop.permute.xlu0 %345
    %347 = vset.pattern.permute.xlu0 1
    %348 = vperm.xlu0 %347, %v299
    %v349 = vpop.permute.xlu0 %348
    %350 = vset.pattern.permute.xlu0 1
    %351 = vperm.xlu0 %350, %v300
    %v352 = vpop.permute.xlu0 %351
    %353 = vset.pattern.permute.xlu0 1
    %354 = vperm.xlu0 %353, %v301
    %v355 = vpop.permute.xlu0 %354
    %356 = vset.pattern.permute.xlu0 1
    %357 = vperm.xlu0 %356, %v302
    %v358 = vpop.permute.xlu0 %357
    %359 = vset.pattern.permute.xlu0 1
    %360 = vperm.xlu0 %359, %v303
    %v361 = vpop.permute.xlu0 %360
    %362 = vset.pattern.permute.xlu0 1
    %363 = vperm.xlu0 %362, %v304
    %v364 = vpop.permute.xlu0 %363
    %365 = vset.pattern.permute.xlu0 1
    %366 = vperm.xlu0 %365, %v305
    %v367 = vpop.permute.xlu0 %366
    %368 = vset.pattern.permute.xlu0 1
    %369 = vperm.xlu0 %368, %v306
    %v370 = vpop.permute.xlu0 %369
    %371 = vset.pattern.permute.xlu0 1
    %372 = vperm.xlu0 %371, %v307
    %v373 = vpop.permute.xlu0 %372
    %374 = vset.pattern.permute.xlu0 1
    %375 = vperm.xlu0 %374, %v308
    %v376 = vpop.permute.xlu0 %375
    %377 = vset.pattern.permute.xlu0 1
    %378 = vperm.xlu0 %377, %v309
    %v379 = vpop.permute.xlu0 %378
    %380 = vset.pattern.permute.xlu0 1
    %381 = vperm.xlu0 %380, %v310
    %v382 = vpop.permute.xlu0 %381
    %383 = vset.pattern.permute.xlu0 1
    %384 = vperm.xlu0 %383, %v311
    %v385 = vpop.permute.xlu0 %384
    %386 = vset.pattern.permute.xlu0 1
    %387 = vperm.xlu0 %386, %v312
    %v388 = vpop.permute.xlu0 %387
    %389 = vset.pattern.permute.xlu0 1
    %390 = vperm.xlu0 %389, %v313
    %v391 = vpop.permute.xlu0 %390
    %392 = vset.pattern.permute.xlu0 1
    %393 = vperm.xlu0 %392, %v314
    %v394 = vpop.permute.xlu0 %393
    %395 = vset.pattern.permute.xlu0 1
    %396 = vperm.xlu0 %395, %v315
    %v397 = vpop.permute.xlu0 %396
    %398 = vset.pattern.permute.xlu0 1
    %399 = vperm.xlu0 %398, %v316
    %v400 = vpop.permute.xlu0 %399
    %401 = vset.pattern.permute.xlu0 1
    %402 = vperm.xlu0 %401, %v317
    %v403 = vpop.permute.xlu0 %402
    %404 = vset.pattern.permute.xlu0 1
    %405 = vperm.xlu0 %404, %v318
    %v406 = vpop.permute.xlu0 %405
    %407 = vset.pattern.permute.xlu0 1
    %408 = vperm.xlu0 %407, %v319
    %v409 = vpop.permute.xlu0 %408
    %410 = vset.pattern.permute.xlu0 1
    %411 = vperm.xlu0 %410, %v320
    %v412 = vpop.permute.xlu0 %411
    %413 = vset.pattern.permute.xlu0 1
    %414 = vperm.xlu0 %413, %v321
    %v415 = vpop.permute.xlu0 %414
    %416 = vset.pattern.permute.xlu0 1
    %417 = vperm.xlu0 %416, %v322
    %v418 = vpop.permute.xlu0 %417
    %vm419 = vcmp.eq.s32.totalorder %v34, %v325
    %vm420 = vcmp.eq.s32.totalorder %v34, %v328
    %vm421 = vcmp.eq.s32.totalorder %v34, %v331
    %vm422 = vcmp.eq.s32.totalorder %v34, %v334
    %vm423 = vcmp.eq.s32.totalorder %v34, %v337
    %vm424 = vcmp.eq.s32.totalorder %v34, %v340
    %vm425 = vcmp.eq.s32.totalorder %v34, %v343
    %vm426 = vcmp.eq.s32.totalorder %v34, %v346
    %vm427 = vcmp.eq.s32.totalorder %v34, %v349
    %vm428 = vcmp.eq.s32.totalorder %v34, %v352
    %vm429 = vcmp.eq.s32.totalorder %v34, %v355
    %vm430 = vcmp.eq.s32.totalorder %v34, %v358
    %vm431 = vcmp.eq.s32.totalorder %v34, %v361
    %vm432 = vcmp.eq.s32.totalorder %v34, %v364
    %vm433 = vcmp.eq.s32.totalorder %v34, %v367
    %vm434 = vcmp.eq.s32.totalorder %v34, %v370
    %vm435 = vcmp.eq.s32.totalorder %v34, %v373
    %vm436 = vcmp.eq.s32.totalorder %v34, %v376
    %vm437 = vcmp.eq.s32.totalorder %v34, %v379
    %vm438 = vcmp.eq.s32.totalorder %v34, %v382
    %vm439 = vcmp.eq.s32.totalorder %v34, %v385
    %vm440 = vcmp.eq.s32.totalorder %v34, %v388
    %vm441 = vcmp.eq.s32.totalorder %v34, %v391
    %vm442 = vcmp.eq.s32.totalorder %v34, %v394
    %vm443 = vcmp.eq.s32.totalorder %v34, %v397
    %vm444 = vcmp.eq.s32.totalorder %v34, %v400
    %vm445 = vcmp.eq.s32.totalorder %v34, %v403
    %vm446 = vcmp.eq.s32.totalorder %v34, %v406
    %vm447 = vcmp.eq.s32.totalorder %v34, %v409
    %vm448 = vcmp.eq.s32.totalorder %v34, %v412
    %vm449 = vcmp.eq.s32.totalorder %v34, %v415
    %vm450 = vcmp.eq.s32.totalorder %v34, %v418
    %v451 = vsel %vm419, 1, 0
    %v452 = vsel %vm420, 1, 0
    %v453 = vsel %vm421, 1, 0
    %v454 = vsel %vm422, 1, 0
    %v455 = vsel %vm423, 1, 0
    %v456 = vsel %vm424, 1, 0
    %v457 = vsel %vm425, 1, 0
    %v458 = vsel %vm426, 1, 0
    %v459 = vsel %vm427, 1, 0
    %v460 = vsel %vm428, 1, 0
    %v461 = vsel %vm429, 1, 0
    %v462 = vsel %vm430, 1, 0
    %v463 = vsel %vm431, 1, 0
    %v464 = vsel %vm432, 1, 0
    %v465 = vsel %vm433, 1, 0
    %v466 = vsel %vm434, 1, 0
    %v467 = vsel %vm435, 1, 0
    %v468 = vsel %vm436, 1, 0
    %v469 = vsel %vm437, 1, 0
    %v470 = vsel %vm438, 1, 0
    %v471 = vsel %vm439, 1, 0
    %v472 = vsel %vm440, 1, 0
    %v473 = vsel %vm441, 1, 0
    %v474 = vsel %vm442, 1, 0
    %v475 = vsel %vm443, 1, 0
    %v476 = vsel %vm444, 1, 0
    %v477 = vsel %vm445, 1, 0
    %v478 = vsel %vm446, 1, 0
    %v479 = vsel %vm447, 1, 0
    %v480 = vsel %vm448, 1, 0
    %v481 = vsel %vm449, 1, 0
    %v482 = vsel %vm450, 1, 0
    %v483 = vcvt.s32.f32 %v451
    %v484 = vcvt.s32.f32 %v452
    %v485 = vcvt.s32.f32 %v453
    %v486 = vcvt.s32.f32 %v454
    %v487 = vcvt.s32.f32 %v455
    %v488 = vcvt.s32.f32 %v456
    %v489 = vcvt.s32.f32 %v457
    %v490 = vcvt.s32.f32 %v458
    %v491 = vcvt.s32.f32 %v459
    %v492 = vcvt.s32.f32 %v460
    %v493 = vcvt.s32.f32 %v461
    %v494 = vcvt.s32.f32 %v462
    %v495 = vcvt.s32.f32 %v463
    %v496 = vcvt.s32.f32 %v464
    %v497 = vcvt.s32.f32 %v465
    %v498 = vcvt.s32.f32 %v466
    %v499 = vcvt.s32.f32 %v467
    %v500 = vcvt.s32.f32 %v468
    %v501 = vcvt.s32.f32 %v469
    %v502 = vcvt.s32.f32 %v470
    %v503 = vcvt.s32.f32 %v471
    %v504 = vcvt.s32.f32 %v472
    %v505 = vcvt.s32.f32 %v473
    %v506 = vcvt.s32.f32 %v474
    %v507 = vcvt.s32.f32 %v475
    %v508 = vcvt.s32.f32 %v476
    %v509 = vcvt.s32.f32 %v477
    %v510 = vcvt.s32.f32 %v478
    %v511 = vcvt.s32.f32 %v479
    %v512 = vcvt.s32.f32 %v480
    %v513 = vcvt.s32.f32 %v481
    %v514 = vcvt.s32.f32 %v482
    %v515 = vpack.c.bf16 %v484, %v483
    %v516 = vpack.c.bf16 %v486, %v485
    %v517 = vpack.c.bf16 %v488, %v487
    %v518 = vpack.c.bf16 %v490, %v489
    %v519 = vpack.c.bf16 %v492, %v491
    %v520 = vpack.c.bf16 %v494, %v493
    %v521 = vpack.c.bf16 %v496, %v495
    %v522 = vpack.c.bf16 %v498, %v497
    %v523 = vpack.c.bf16 %v500, %v499
    %v524 = vpack.c.bf16 %v502, %v501
    %v525 = vpack.c.bf16 %v504, %v503
    %v526 = vpack.c.bf16 %v506, %v505
    %v527 = vpack.c.bf16 %v508, %v507
    %v528 = vpack.c.bf16 %v510, %v509
    %v529 = vpack.c.bf16 %v512, %v511
    %v530 = vpack.c.bf16 %v514, %v513
    %v531 = vadd.bf16 %v275, %v515
    %v532 = vadd.bf16 %v276, %v516
    %v533 = vadd.bf16 %v277, %v517
    %v534 = vadd.bf16 %v278, %v518
    %v535 = vadd.bf16 %v279, %v519
    %v536 = vadd.bf16 %v280, %v520
    %v537 = vadd.bf16 %v281, %v521
    %v538 = vadd.bf16 %v282, %v522
    %v539 = vadd.bf16 %v283, %v523
    %v540 = vadd.bf16 %v284, %v524
    %v541 = vadd.bf16 %v285, %v525
    %v542 = vadd.bf16 %v286, %v526
    %v543 = vadd.bf16 %v287, %v527
    %v544 = vadd.bf16 %v288, %v528
    %v545 = vadd.bf16 %v289, %v529
    %v546 = vadd.bf16 %v290, %v530
    %v547 = vadd.s32 %v35, 18
    %v548 = vadd.s32 %v36, 18
    %v549 = vadd.s32 %v37, 18
    %v550 = vadd.s32 %v38, 18
    %v551 = vadd.s32 %v39, 18
    %v552 = vadd.s32 %v40, 18
    %v553 = vadd.s32 %v41, 18
    %v554 = vadd.s32 %v42, 18
    %v555 = vadd.s32 %v43, 18
    %v556 = vadd.s32 %v44, 18
    %v557 = vadd.s32 %v45, 18
    %v558 = vadd.s32 %v46, 18
    %v559 = vadd.s32 %v47, 18
    %v560 = vadd.s32 %v48, 18
    %v561 = vadd.s32 %v49, 18
    %v562 = vadd.s32 %v50, 18
    %v563 = vadd.s32 %v51, 18
    %v564 = vadd.s32 %v52, 18
    %v565 = vadd.s32 %v53, 18
    %v566 = vadd.s32 %v54, 18
    %v567 = vadd.s32 %v55, 18
    %v568 = vadd.s32 %v56, 18
    %v569 = vadd.s32 %v57, 18
    %v570 = vadd.s32 %v58, 18
    %v571 = vadd.s32 %v59, 18
    %v572 = vadd.s32 %v60, 18
    %v573 = vadd.s32 %v61, 18
    %v574 = vadd.s32 %v62, 18
    %v575 = vadd.s32 %v63, 18
    %v576 = vadd.s32 %v64, 18
    %v577 = vadd.s32 %v65, 18
    %v578 = vadd.s32 %v66, 18
    %579 = vset.pattern.permute.xlu0 2
    %580 = vperm.xlu0 %579, %v547
    %v581 = vpop.permute.xlu0 %580
    %582 = vset.pattern.permute.xlu0 2
    %583 = vperm.xlu0 %582, %v548
    %v584 = vpop.permute.xlu0 %583
    %585 = vset.pattern.permute.xlu0 2
    %586 = vperm.xlu0 %585, %v549
    %v587 = vpop.permute.xlu0 %586
    %588 = vset.pattern.permute.xlu0 2
    %589 = vperm.xlu0 %588, %v550
    %v590 = vpop.permute.xlu0 %589
    %591 = vset.pattern.permute.xlu0 2
    %592 = vperm.xlu0 %591, %v551
    %v593 = vpop.permute.xlu0 %592
    %594 = vset.pattern.permute.xlu0 2
    %595 = vperm.xlu0 %594, %v552
    %v596 = vpop.permute.xlu0 %595
    %597 = vset.pattern.permute.xlu0 2
    %598 = vperm.xlu0 %597, %v553
    %v599 = vpop.permute.xlu0 %598
    %600 = vset.pattern.permute.xlu0 2
    %601 = vperm.xlu0 %600, %v554
    %v602 = vpop.permute.xlu0 %601
    %603 = vset.pattern.permute.xlu0 2
    %604 = vperm.xlu0 %603, %v555
    %v605 = vpop.permute.xlu0 %604
    %606 = vset.pattern.permute.xlu0 2
    %607 = vperm.xlu0 %606, %v556
    %v608 = vpop.permute.xlu0 %607
    %609 = vset.pattern.permute.xlu0 2
    %610 = vperm.xlu0 %609, %v557
    %v611 = vpop.permute.xlu0 %610
    %612 = vset.pattern.permute.xlu0 2
    %613 = vperm.xlu0 %612, %v558
    %v614 = vpop.permute.xlu0 %613
    %615 = vset.pattern.permute.xlu0 2
    %616 = vperm.xlu0 %615, %v559
    %v617 = vpop.permute.xlu0 %616
    %618 = vset.pattern.permute.xlu0 2
    %619 = vperm.xlu0 %618, %v560
    %v620 = vpop.permute.xlu0 %619
    %621 = vset.pattern.permute.xlu0 2
    %622 = vperm.xlu0 %621, %v561
    %v623 = vpop.permute.xlu0 %622
    %624 = vset.pattern.permute.xlu0 2
    %625 = vperm.xlu0 %624, %v562
    %v626 = vpop.permute.xlu0 %625
    %627 = vset.pattern.permute.xlu0 2
    %628 = vperm.xlu0 %627, %v563
    %v629 = vpop.permute.xlu0 %628
    %630 = vset.pattern.permute.xlu0 2
    %631 = vperm.xlu0 %630, %v564
    %v632 = vpop.permute.xlu0 %631
    %633 = vset.pattern.permute.xlu0 2
    %634 = vperm.xlu0 %633, %v565
    %v635 = vpop.permute.xlu0 %634
    %636 = vset.pattern.permute.xlu0 2
    %637 = vperm.xlu0 %636, %v566
    %v638 = vpop.permute.xlu0 %637
    %639 = vset.pattern.permute.xlu0 2
    %640 = vperm.xlu0 %639, %v567
    %v641 = vpop.permute.xlu0 %640
    %642 = vset.pattern.permute.xlu0 2
    %643 = vperm.xlu0 %642, %v568
    %v644 = vpop.permute.xlu0 %643
    %645 = vset.pattern.permute.xlu0 2
    %646 = vperm.xlu0 %645, %v569
    %v647 = vpop.permute.xlu0 %646
    %648 = vset.pattern.permute.xlu0 2
    %649 = vperm.xlu0 %648, %v570
    %v650 = vpop.permute.xlu0 %649
    %651 = vset.pattern.permute.xlu0 2
    %652 = vperm.xlu0 %651, %v571
    %v653 = vpop.permute.xlu0 %652
    %654 = vset.pattern.permute.xlu0 2
    %655 = vperm.xlu0 %654, %v572
    %v656 = vpop.permute.xlu0 %655
    %657 = vset.pattern.permute.xlu0 2
    %658 = vperm.xlu0 %657, %v573
    %v659 = vpop.permute.xlu0 %658
    %660 = vset.pattern.permute.xlu0 2
    %661 = vperm.xlu0 %660, %v574
    %v662 = vpop.permute.xlu0 %661
    %663 = vset.pattern.permute.xlu0 2
    %664 = vperm.xlu0 %663, %v575
    %v665 = vpop.permute.xlu0 %664
    %666 = vset.pattern.permute.xlu0 2
    %667 = vperm.xlu0 %666, %v576
    %v668 = vpop.permute.xlu0 %667
    %669 = vset.pattern.permute.xlu0 2
    %670 = vperm.xlu0 %669, %v577
    %v671 = vpop.permute.xlu0 %670
    %672 = vset.pattern.permute.xlu0 2
    %673 = vperm.xlu0 %672, %v578
    %v674 = vpop.permute.xlu0 %673
    %vm675 = vcmp.eq.s32.totalorder %v34, %v581
    %vm676 = vcmp.eq.s32.totalorder %v34, %v584
    %vm677 = vcmp.eq.s32.totalorder %v34, %v587
    %vm678 = vcmp.eq.s32.totalorder %v34, %v590
    %vm679 = vcmp.eq.s32.totalorder %v34, %v593
    %vm680 = vcmp.eq.s32.totalorder %v34, %v596
    %vm681 = vcmp.eq.s32.totalorder %v34, %v599
    %vm682 = vcmp.eq.s32.totalorder %v34, %v602
    %vm683 = vcmp.eq.s32.totalorder %v34, %v605
    %vm684 = vcmp.eq.s32.totalorder %v34, %v608
    %vm685 = vcmp.eq.s32.totalorder %v34, %v611
    %vm686 = vcmp.eq.s32.totalorder %v34, %v614
    %vm687 = vcmp.eq.s32.totalorder %v34, %v617
    %vm688 = vcmp.eq.s32.totalorder %v34, %v620
    %vm689 = vcmp.eq.s32.totalorder %v34, %v623
    %vm690 = vcmp.eq.s32.totalorder %v34, %v626
    %vm691 = vcmp.eq.s32.totalorder %v34, %v629
    %vm692 = vcmp.eq.s32.totalorder %v34, %v632
    %vm693 = vcmp.eq.s32.totalorder %v34, %v635
    %vm694 = vcmp.eq.s32.totalorder %v34, %v638
    %vm695 = vcmp.eq.s32.totalorder %v34, %v641
    %vm696 = vcmp.eq.s32.totalorder %v34, %v644
    %vm697 = vcmp.eq.s32.totalorder %v34, %v647
    %vm698 = vcmp.eq.s32.totalorder %v34, %v650
    %vm699 = vcmp.eq.s32.totalorder %v34, %v653
    %vm700 = vcmp.eq.s32.totalorder %v34, %v656
    %vm701 = vcmp.eq.s32.totalorder %v34, %v659
    %vm702 = vcmp.eq.s32.totalorder %v34, %v662
    %vm703 = vcmp.eq.s32.totalorder %v34, %v665
    %vm704 = vcmp.eq.s32.totalorder %v34, %v668
    %vm705 = vcmp.eq.s32.totalorder %v34, %v671
    %vm706 = vcmp.eq.s32.totalorder %v34, %v674
    %v707 = vsel %vm675, 1, 0
    %v708 = vsel %vm676, 1, 0
    %v709 = vsel %vm677, 1, 0
    %v710 = vsel %vm678, 1, 0
    %v711 = vsel %vm679, 1, 0
    %v712 = vsel %vm680, 1, 0
    %v713 = vsel %vm681, 1, 0
    %v714 = vsel %vm682, 1, 0
    %v715 = vsel %vm683, 1, 0
    %v716 = vsel %vm684, 1, 0
    %v717 = vsel %vm685, 1, 0
    %v718 = vsel %vm686, 1, 0
    %v719 = vsel %vm687, 1, 0
    %v720 = vsel %vm688, 1, 0
    %v721 = vsel %vm689, 1, 0
    %v722 = vsel %vm690, 1, 0
    %v723 = vsel %vm691, 1, 0
    %v724 = vsel %vm692, 1, 0
    %v725 = vsel %vm693, 1, 0
    %v726 = vsel %vm694, 1, 0
    %v727 = vsel %vm695, 1, 0
    %v728 = vsel %vm696, 1, 0
    %v729 = vsel %vm697, 1, 0
    %v730 = vsel %vm698, 1, 0
    %v731 = vsel %vm699, 1, 0
    %v732 = vsel %vm700, 1, 0
    %v733 = vsel %vm701, 1, 0
    %v734 = vsel %vm702, 1, 0
    %v735 = vsel %vm703, 1, 0
    %v736 = vsel %vm704, 1, 0
    %v737 = vsel %vm705, 1, 0
    %v738 = vsel %vm706, 1, 0
    %v739 = vcvt.s32.f32 %v707
    %v740 = vcvt.s32.f32 %v708
    %v741 = vcvt.s32.f32 %v709
    %v742 = vcvt.s32.f32 %v710
    %v743 = vcvt.s32.f32 %v711
    %v744 = vcvt.s32.f32 %v712
    %v745 = vcvt.s32.f32 %v713
    %v746 = vcvt.s32.f32 %v714
    %v747 = vcvt.s32.f32 %v715
    %v748 = vcvt.s32.f32 %v716
    %v749 = vcvt.s32.f32 %v717
    %v750 = vcvt.s32.f32 %v718
    %v751 = vcvt.s32.f32 %v719
    %v752 = vcvt.s32.f32 %v720
    %v753 = vcvt.s32.f32 %v721
    %v754 = vcvt.s32.f32 %v722
    %v755 = vcvt.s32.f32 %v723
    %v756 = vcvt.s32.f32 %v724
    %v757 = vcvt.s32.f32 %v725
    %v758 = vcvt.s32.f32 %v726
    %v759 = vcvt.s32.f32 %v727
    %v760 = vcvt.s32.f32 %v728
    %v761 = vcvt.s32.f32 %v729
    %v762 = vcvt.s32.f32 %v730
    %v763 = vcvt.s32.f32 %v731
    %v764 = vcvt.s32.f32 %v732
    %v765 = vcvt.s32.f32 %v733
    %v766 = vcvt.s32.f32 %v734
    %v767 = vcvt.s32.f32 %v735
    %v768 = vcvt.s32.f32 %v736
    %v769 = vcvt.s32.f32 %v737
    %v770 = vcvt.s32.f32 %v738
    %v771 = vpack.c.bf16 %v740, %v739
    %v772 = vpack.c.bf16 %v742, %v741
    %v773 = vpack.c.bf16 %v744, %v743
    %v774 = vpack.c.bf16 %v746, %v745
    %v775 = vpack.c.bf16 %v748, %v747
    %v776 = vpack.c.bf16 %v750, %v749
    %v777 = vpack.c.bf16 %v752, %v751
    %v778 = vpack.c.bf16 %v754, %v753
    %v779 = vpack.c.bf16 %v756, %v755
    %v780 = vpack.c.bf16 %v758, %v757
    %v781 = vpack.c.bf16 %v760, %v759
    %v782 = vpack.c.bf16 %v762, %v761
    %v783 = vpack.c.bf16 %v764, %v763
    %v784 = vpack.c.bf16 %v766, %v765
    %v785 = vpack.c.bf16 %v768, %v767
    %v786 = vpack.c.bf16 %v770, %v769
    %v787 = vadd.bf16 %v531, %v771
    %v788 = vadd.bf16 %v532, %v772
    %v789 = vadd.bf16 %v533, %v773
    %v790 = vadd.bf16 %v534, %v774
    %v791 = vadd.bf16 %v535, %v775
    %v792 = vadd.bf16 %v536, %v776
    %v793 = vadd.bf16 %v537, %v777
    %v794 = vadd.bf16 %v538, %v778
    %v795 = vadd.bf16 %v539, %v779
    %v796 = vadd.bf16 %v540, %v780
    %v797 = vadd.bf16 %v541, %v781
    %v798 = vadd.bf16 %v542, %v782
    %v799 = vadd.bf16 %v543, %v783
    %v800 = vadd.bf16 %v544, %v784
    %v801 = vadd.bf16 %v545, %v785
    %v802 = vadd.bf16 %v546, %v786
    %v803 = vld [vmem:[%s1] sm:$0xff]
    %v804 = vld [vmem:[%s1 + $0x8] sm:$0xff]
    %v805 = vld [vmem:[%s1 + $0x10] sm:$0xff]
    %v806 = vld [vmem:[%s1 + $0x18] sm:$0xff]
    %v807 = vld [vmem:[%s1 + $0x20] sm:$0xff]
    %v808 = vld [vmem:[%s1 + $0x28] sm:$0xff]
    %v809 = vld [vmem:[%s1 + $0x30] sm:$0xff]
    %v810 = vld [vmem:[%s1 + $0x38] sm:$0xff]
    %v811 = vld [vmem:[%s1 + $0x40] sm:$0xff]
    %v812 = vld [vmem:[%s1 + $0x48] sm:$0xff]
    %v813 = vld [vmem:[%s1 + $0x50] sm:$0xff]
    %v814 = vld [vmem:[%s1 + $0x58] sm:$0xff]
    %v815 = vld [vmem:[%s1 + $0x60] sm:$0xff]
    %v816 = vld [vmem:[%s1 + $0x68] sm:$0xff]
    %v817 = vld [vmem:[%s1 + $0x70] sm:$0xff]
    %v818 = vld [vmem:[%s1 + $0x78] sm:$0xff]
    %v819 = vld [vmem:[%s1 + $0x80] sm:$0xff]
    %v820 = vld [vmem:[%s1 + $0x88] sm:$0xff]
    %v821 = vld [vmem:[%s1 + $0x90] sm:$0xff]
    %v822 = vld [vmem:[%s1 + $0x98] sm:$0xff]
    %v823 = vld [vmem:[%s1 + $0xa0] sm:$0xff]
    %v824 = vld [vmem:[%s1 + $0xa8] sm:$0xff]
    %v825 = vld [vmem:[%s1 + $0xb0] sm:$0xff]
    %v826 = vld [vmem:[%s1 + $0xb8] sm:$0xff]
    %v827 = vld [vmem:[%s1 + $0xc0] sm:$0xff]
    %v828 = vld [vmem:[%s1 + $0xc8] sm:$0xff]
    %v829 = vld [vmem:[%s1 + $0xd0] sm:$0xff]
    %v830 = vld [vmem:[%s1 + $0xd8] sm:$0xff]
    %v831 = vld [vmem:[%s1 + $0xe0] sm:$0xff]
    %v832 = vld [vmem:[%s1 + $0xe8] sm:$0xff]
    %v833 = vld [vmem:[%s1 + $0xf0] sm:$0xff]
    %v834 = vld [vmem:[%s1 + $0xf8] sm:$0xff]
    %v835 = vpack.c.bf16 %v804, %v803
    %v836 = vpack.c.bf16 %v806, %v805
    %v837 = vpack.c.bf16 %v808, %v807
    %v838 = vpack.c.bf16 %v810, %v809
    %v839 = vpack.c.bf16 %v812, %v811
    %v840 = vpack.c.bf16 %v814, %v813
    %v841 = vpack.c.bf16 %v816, %v815
    %v842 = vpack.c.bf16 %v818, %v817
    %v843 = vpack.c.bf16 %v820, %v819
    %v844 = vpack.c.bf16 %v822, %v821
    %v845 = vpack.c.bf16 %v824, %v823
    %v846 = vpack.c.bf16 %v826, %v825
    %v847 = vpack.c.bf16 %v828, %v827
    %v848 = vpack.c.bf16 %v830, %v829
    %v849 = vpack.c.bf16 %v832, %v831
    %v850 = vpack.c.bf16 %v834, %v833
    %vm851 = vcmp.eq.s32.totalorder %v34, 24
    %853 = vset.pattern.permute.xlu0 0
    %854 = vperm.xlu0 %853, %v835
    %v855 = vpop.permute.xlu0 %854
    %858 = vset.pattern.permute.xlu0 0
    %859 = vperm.xlu0 %858, %v836
    %v860 = vpop.permute.xlu0 %859
    %863 = vset.pattern.permute.xlu0 0
    %864 = vperm.xlu0 %863, %v837
    %v865 = vpop.permute.xlu0 %864
    %868 = vset.pattern.permute.xlu0 0
    %869 = vperm.xlu0 %868, %v838
    %v870 = vpop.permute.xlu0 %869
    %873 = vset.pattern.permute.xlu0 0
    %874 = vperm.xlu0 %873, %v839
    %v875 = vpop.permute.xlu0 %874
    %878 = vset.pattern.permute.xlu0 0
    %879 = vperm.xlu0 %878, %v840
    %v880 = vpop.permute.xlu0 %879
    %883 = vset.pattern.permute.xlu0 0
    %884 = vperm.xlu0 %883, %v841
    %v885 = vpop.permute.xlu0 %884
    %888 = vset.pattern.permute.xlu0 0
    %889 = vperm.xlu0 %888, %v842
    %v890 = vpop.permute.xlu0 %889
    %893 = vset.pattern.permute.xlu0 0
    %894 = vperm.xlu0 %893, %v843
    %v895 = vpop.permute.xlu0 %894
    %898 = vset.pattern.permute.xlu0 0
    %899 = vperm.xlu0 %898, %v844
    %v900 = vpop.permute.xlu0 %899
    %903 = vset.pattern.permute.xlu0 0
    %904 = vperm.xlu0 %903, %v845
    %v905 = vpop.permute.xlu0 %904
    %908 = vset.pattern.permute.xlu0 0
    %909 = vperm.xlu0 %908, %v846
    %v910 = vpop.permute.xlu0 %909
    %913 = vset.pattern.permute.xlu0 0
    %914 = vperm.xlu0 %913, %v847
    %v915 = vpop.permute.xlu0 %914
    %918 = vset.pattern.permute.xlu0 0
    %919 = vperm.xlu0 %918, %v848
    %v920 = vpop.permute.xlu0 %919
    %923 = vset.pattern.permute.xlu0 0
    %924 = vperm.xlu0 %923, %v849
    %v925 = vpop.permute.xlu0 %924
    %928 = vset.pattern.permute.xlu0 0
    %929 = vperm.xlu0 %928, %v850
    %v930 = vpop.permute.xlu0 %929
    %vm932 = vmpackc.low %vm851, %vm851
    %v933 = vsel %vm932, 65537, 0
    %v934 = vlaneseq
    %v935 = vshrl.u32 %v934, 7
    %v936 = vsub.s32 0, %v935
    %v937 = vrot.slane %v933, %v936
    %vm938 = vcmp.ne.s16.totalorder %v937, 0
    %v939 = vsel %vm938, %v855, %v787
    %v940 = vsel %vm938, %v860, %v788
    %v941 = vsel %vm938, %v865, %v789
    %v942 = vsel %vm938, %v870, %v790
    %v943 = vsel %vm938, %v875, %v791
    %v944 = vsel %vm938, %v880, %v792
    %v945 = vsel %vm938, %v885, %v793
    %v946 = vsel %vm938, %v890, %v794
    %v947 = vsel %vm938, %v895, %v795
    %v948 = vsel %vm938, %v900, %v796
    %v949 = vsel %vm938, %v905, %v797
    %v950 = vsel %vm938, %v910, %v798
    %v951 = vsel %vm938, %v915, %v799
    %v952 = vsel %vm938, %v920, %v800
    %v953 = vsel %vm938, %v925, %v801
    %v954 = vsel %vm938, %v930, %v802
    %vm955 = vcmp.eq.s32.totalorder %v34, 25
    %956 = vset.pattern.permute.xlu0 1
    %957 = vperm.xlu0 %956, %v835
    %v958 = vpop.permute.xlu0 %957
    %960 = vset.pattern.permute.xlu0 1
    %961 = vperm.xlu0 %960, %v836
    %v962 = vpop.permute.xlu0 %961
    %964 = vset.pattern.permute.xlu0 1
    %965 = vperm.xlu0 %964, %v837
    %v966 = vpop.permute.xlu0 %965
    %968 = vset.pattern.permute.xlu0 1
    %969 = vperm.xlu0 %968, %v838
    %v970 = vpop.permute.xlu0 %969
    %972 = vset.pattern.permute.xlu0 1
    %973 = vperm.xlu0 %972, %v839
    %v974 = vpop.permute.xlu0 %973
    %976 = vset.pattern.permute.xlu0 1
    %977 = vperm.xlu0 %976, %v840
    %v978 = vpop.permute.xlu0 %977
    %980 = vset.pattern.permute.xlu0 1
    %981 = vperm.xlu0 %980, %v841
    %v982 = vpop.permute.xlu0 %981
    %984 = vset.pattern.permute.xlu0 1
    %985 = vperm.xlu0 %984, %v842
    %v986 = vpop.permute.xlu0 %985
    %988 = vset.pattern.permute.xlu0 1
    %989 = vperm.xlu0 %988, %v843
    %v990 = vpop.permute.xlu0 %989
    %992 = vset.pattern.permute.xlu0 1
    %993 = vperm.xlu0 %992, %v844
    %v994 = vpop.permute.xlu0 %993
    %996 = vset.pattern.permute.xlu0 1
    %997 = vperm.xlu0 %996, %v845
    %v998 = vpop.permute.xlu0 %997
    %1000 = vset.pattern.permute.xlu0 1
    %1001 = vperm.xlu0 %1000, %v846
    %v1002 = vpop.permute.xlu0 %1001
    %1004 = vset.pattern.permute.xlu0 1
    %1005 = vperm.xlu0 %1004, %v847
    %v1006 = vpop.permute.xlu0 %1005
    %1008 = vset.pattern.permute.xlu0 1
    %1009 = vperm.xlu0 %1008, %v848
    %v1010 = vpop.permute.xlu0 %1009
    %1012 = vset.pattern.permute.xlu0 1
    %1013 = vperm.xlu0 %1012, %v849
    %v1014 = vpop.permute.xlu0 %1013
    %1016 = vset.pattern.permute.xlu0 1
    %1017 = vperm.xlu0 %1016, %v850
    %v1018 = vpop.permute.xlu0 %1017
    %vm1020 = vmpackc.low %vm955, %vm955
    %v1021 = vsel %vm1020, 65537, 0
    %v1022 = vlaneseq
    %v1023 = vshrl.u32 %v1022, 7
    %v1024 = vsub.s32 0, %v1023
    %v1025 = vrot.slane %v1021, %v1024
    %vm1026 = vcmp.ne.s16.totalorder %v1025, 0
    %v1027 = vsel %vm1026, %v958, %v939
    %v1028 = vsel %vm1026, %v962, %v940
    %v1029 = vsel %vm1026, %v966, %v941
    %v1030 = vsel %vm1026, %v970, %v942
    %v1031 = vsel %vm1026, %v974, %v943
    %v1032 = vsel %vm1026, %v978, %v944
    %v1033 = vsel %vm1026, %v982, %v945
    %v1034 = vsel %vm1026, %v986, %v946
    %v1035 = vsel %vm1026, %v990, %v947
    %v1036 = vsel %vm1026, %v994, %v948
    %v1037 = vsel %vm1026, %v998, %v949
    %v1038 = vsel %vm1026, %v1002, %v950
    %v1039 = vsel %vm1026, %v1006, %v951
    %v1040 = vsel %vm1026, %v1010, %v952
    %v1041 = vsel %vm1026, %v1014, %v953
    %v1042 = vsel %vm1026, %v1018, %v954
    %vm1043 = vcmp.eq.s32.totalorder %v34, 26
    %1044 = vset.pattern.permute.xlu0 2
    %1045 = vperm.xlu0 %1044, %v835
    %v1046 = vpop.permute.xlu0 %1045
    %1048 = vset.pattern.permute.xlu0 2
    %1049 = vperm.xlu0 %1048, %v836
    %v1050 = vpop.permute.xlu0 %1049
    %1052 = vset.pattern.permute.xlu0 2
    %1053 = vperm.xlu0 %1052, %v837
    %v1054 = vpop.permute.xlu0 %1053
    %1056 = vset.pattern.permute.xlu0 2
    %1057 = vperm.xlu0 %1056, %v838
    %v1058 = vpop.permute.xlu0 %1057
    %1060 = vset.pattern.permute.xlu0 2
    %1061 = vperm.xlu0 %1060, %v839
    %v1062 = vpop.permute.xlu0 %1061
    %1064 = vset.pattern.permute.xlu0 2
    %1065 = vperm.xlu0 %1064, %v840
    %v1066 = vpop.permute.xlu0 %1065
    %1068 = vset.pattern.permute.xlu0 2
    %1069 = vperm.xlu0 %1068, %v841
    %v1070 = vpop.permute.xlu0 %1069
    %1072 = vset.pattern.permute.xlu0 2
    %1073 = vperm.xlu0 %1072, %v842
    %v1074 = vpop.permute.xlu0 %1073
    %1076 = vset.pattern.permute.xlu0 2
    %1077 = vperm.xlu0 %1076, %v843
    %v1078 = vpop.permute.xlu0 %1077
    %1080 = vset.pattern.permute.xlu0 2
    %1081 = vperm.xlu0 %1080, %v844
    %v1082 = vpop.permute.xlu0 %1081
    %1084 = vset.pattern.permute.xlu0 2
    %1085 = vperm.xlu0 %1084, %v845
    %v1086 = vpop.permute.xlu0 %1085
    %1088 = vset.pattern.permute.xlu0 2
    %1089 = vperm.xlu0 %1088, %v846
    %v1090 = vpop.permute.xlu0 %1089
    %1092 = vset.pattern.permute.xlu0 2
    %1093 = vperm.xlu0 %1092, %v847
    %v1094 = vpop.permute.xlu0 %1093
    %1096 = vset.pattern.permute.xlu0 2
    %1097 = vperm.xlu0 %1096, %v848
    %v1098 = vpop.permute.xlu0 %1097
    %1100 = vset.pattern.permute.xlu0 2
    %1101 = vperm.xlu0 %1100, %v849
    %v1102 = vpop.permute.xlu0 %1101
    %1104 = vset.pattern.permute.xlu0 2
    %1105 = vperm.xlu0 %1104, %v850
    %v1106 = vpop.permute.xlu0 %1105
    %vm1108 = vmpackc.low %vm1043, %vm1043
    %v1109 = vsel %vm1108, 65537, 0
    %v1110 = vlaneseq
    %v1111 = vshrl.u32 %v1110, 7
    %v1112 = vsub.s32 0, %v1111
    %v1113 = vrot.slane %v1109, %v1112
    %vm1114 = vcmp.ne.s16.totalorder %v1113, 0
    %v1115 = vsel %vm1114, %v1046, %v1027
    %v1116 = vsel %vm1114, %v1050, %v1028
    %v1117 = vsel %vm1114, %v1054, %v1029
    %v1118 = vsel %vm1114, %v1058, %v1030
    %v1119 = vsel %vm1114, %v1062, %v1031
    %v1120 = vsel %vm1114, %v1066, %v1032
    %v1121 = vsel %vm1114, %v1070, %v1033
    %v1122 = vsel %vm1114, %v1074, %v1034
    %v1123 = vsel %vm1114, %v1078, %v1035
    %v1124 = vsel %vm1114, %v1082, %v1036
    %v1125 = vsel %vm1114, %v1086, %v1037
    %v1126 = vsel %vm1114, %v1090, %v1038
    %v1127 = vsel %vm1114, %v1094, %v1039
    %v1128 = vsel %vm1114, %v1098, %v1040
    %v1129 = vsel %vm1114, %v1102, %v1041
    %v1130 = vsel %vm1114, %v1106, %v1042
    %vm1131 = vcmp.eq.s32.totalorder %v34, 27
    %1132 = vset.pattern.permute.xlu0 3
    %1133 = vperm.xlu0 %1132, %v835
    %v1134 = vpop.permute.xlu0 %1133
    %1136 = vset.pattern.permute.xlu0 3
    %1137 = vperm.xlu0 %1136, %v836
    %v1138 = vpop.permute.xlu0 %1137
    %1140 = vset.pattern.permute.xlu0 3
    %1141 = vperm.xlu0 %1140, %v837
    %v1142 = vpop.permute.xlu0 %1141
    %1144 = vset.pattern.permute.xlu0 3
    %1145 = vperm.xlu0 %1144, %v838
    %v1146 = vpop.permute.xlu0 %1145
    %1148 = vset.pattern.permute.xlu0 3
    %1149 = vperm.xlu0 %1148, %v839
    %v1150 = vpop.permute.xlu0 %1149
    %1152 = vset.pattern.permute.xlu0 3
    %1153 = vperm.xlu0 %1152, %v840
    %v1154 = vpop.permute.xlu0 %1153
    %1156 = vset.pattern.permute.xlu0 3
    %1157 = vperm.xlu0 %1156, %v841
    %v1158 = vpop.permute.xlu0 %1157
    %1160 = vset.pattern.permute.xlu0 3
    %1161 = vperm.xlu0 %1160, %v842
    %v1162 = vpop.permute.xlu0 %1161
    %1164 = vset.pattern.permute.xlu0 3
    %1165 = vperm.xlu0 %1164, %v843
    %v1166 = vpop.permute.xlu0 %1165
    %1168 = vset.pattern.permute.xlu0 3
    %1169 = vperm.xlu0 %1168, %v844
    %v1170 = vpop.permute.xlu0 %1169
    %1172 = vset.pattern.permute.xlu0 3
    %1173 = vperm.xlu0 %1172, %v845
    %v1174 = vpop.permute.xlu0 %1173
    %1176 = vset.pattern.permute.xlu0 3
    %1177 = vperm.xlu0 %1176, %v846
    %v1178 = vpop.permute.xlu0 %1177
    %1180 = vset.pattern.permute.xlu0 3
    %1181 = vperm.xlu0 %1180, %v847
    %v1182 = vpop.permute.xlu0 %1181
    %1184 = vset.pattern.permute.xlu0 3
    %1185 = vperm.xlu0 %1184, %v848
    %v1186 = vpop.permute.xlu0 %1185
    %1188 = vset.pattern.permute.xlu0 3
    %1189 = vperm.xlu0 %1188, %v849
    %v1190 = vpop.permute.xlu0 %1189
    %1192 = vset.pattern.permute.xlu0 3
    %1193 = vperm.xlu0 %1192, %v850
    %v1194 = vpop.permute.xlu0 %1193
    %vm1196 = vmpackc.low %vm1131, %vm1131
    %v1197 = vsel %vm1196, 65537, 0
    %v1198 = vlaneseq
    %v1199 = vshrl.u32 %v1198, 7
    %v1200 = vsub.s32 0, %v1199
    %v1201 = vrot.slane %v1197, %v1200
    %vm1202 = vcmp.ne.s16.totalorder %v1201, 0
    %v1203 = vsel %vm1202, %v1134, %v1115
    %v1204 = vsel %vm1202, %v1138, %v1116
    %v1205 = vsel %vm1202, %v1142, %v1117
    %v1206 = vsel %vm1202, %v1146, %v1118
    %v1207 = vsel %vm1202, %v1150, %v1119
    %v1208 = vsel %vm1202, %v1154, %v1120
    %v1209 = vsel %vm1202, %v1158, %v1121
    %v1210 = vsel %vm1202, %v1162, %v1122
    %v1211 = vsel %vm1202, %v1166, %v1123
    %v1212 = vsel %vm1202, %v1170, %v1124
    %v1213 = vsel %vm1202, %v1174, %v1125
    %v1214 = vsel %vm1202, %v1178, %v1126
    %v1215 = vsel %vm1202, %v1182, %v1127
    %v1216 = vsel %vm1202, %v1186, %v1128
    %v1217 = vsel %vm1202, %v1190, %v1129
    %v1218 = vsel %vm1202, %v1194, %v1130
    %v1219 = vld [vmem:[%s2] sm:$0xf]
    %v1220 = vld [vmem:[%s2 + $0x4] sm:$0xf]
    %v1221 = vld [vmem:[%s2 + $0x8] sm:$0xf]
    %v1222 = vld [vmem:[%s2 + $0xc] sm:$0xf]
    %v1223 = vld [vmem:[%s2 + $0x10] sm:$0xf]
    %v1224 = vld [vmem:[%s2 + $0x14] sm:$0xf]
    %v1225 = vld [vmem:[%s2 + $0x18] sm:$0xf]
    %v1226 = vld [vmem:[%s2 + $0x1c] sm:$0xf]
    %v1227 = vld [vmem:[%s2 + $0x20] sm:$0xf]
    %v1228 = vld [vmem:[%s2 + $0x24] sm:$0xf]
    %v1229 = vld [vmem:[%s2 + $0x28] sm:$0xf]
    %v1230 = vld [vmem:[%s2 + $0x2c] sm:$0xf]
    %v1231 = vld [vmem:[%s2 + $0x30] sm:$0xf]
    %v1232 = vld [vmem:[%s2 + $0x34] sm:$0xf]
    %v1233 = vld [vmem:[%s2 + $0x38] sm:$0xf]
    %v1234 = vld [vmem:[%s2 + $0x3c] sm:$0xf]
    %v1235 = vld [vmem:[%s3] sm:$0x1]
    %v1237 = vlaneseq
    %v1238 = vshrl.u32 %v1237, 7
    %v1239 = vsub.s32 0, %v1238
    %v1240 = vrot.slane %v1235, %v1239
    %v1258 = vunpack.c.l.b16 %v1219
    %v1259 = vunpack.c.l.b16 %v1220
    %v1260 = vunpack.c.l.b16 %v1221
    %v1261 = vunpack.c.l.b16 %v1222
    %v1262 = vunpack.c.l.b16 %v1223
    %v1263 = vunpack.c.l.b16 %v1224
    %v1264 = vunpack.c.l.b16 %v1225
    %v1265 = vunpack.c.l.b16 %v1226
    %v1266 = vunpack.c.l.b16 %v1227
    %v1267 = vunpack.c.l.b16 %v1228
    %v1268 = vunpack.c.l.b16 %v1229
    %v1269 = vunpack.c.l.b16 %v1230
    %v1270 = vunpack.c.l.b16 %v1231
    %v1271 = vunpack.c.l.b16 %v1232
    %v1272 = vunpack.c.l.b16 %v1233
    %v1273 = vunpack.c.l.b16 %v1234
    %v1274 = vpack.c.b16 %v1259, %v1258
    %v1275 = vpack.c.b16 %v1261, %v1260
    %v1276 = vpack.c.b16 %v1263, %v1262
    %v1277 = vpack.c.b16 %v1265, %v1264
    %v1278 = vpack.c.b16 %v1267, %v1266
    %v1279 = vpack.c.b16 %v1269, %v1268
    %v1280 = vpack.c.b16 %v1271, %v1270
    %v1281 = vpack.c.b16 %v1273, %v1272
    %1290 = vmatprep.subr.bf16.mxu0 0
    %1291 = vmatpush1.bf16.msra.mxu0 %v1274
    %1292 = vmatprep.subr.bf16.mxu0 0
    %1293 = vmatpush1.bf16.msra.mxu0 %v1275
    %1294 = vmatprep.subr.bf16.mxu0 0
    %1295 = vmatpush1.bf16.msra.mxu0 %v1276
    %1296 = vmatprep.subr.bf16.mxu0 0
    %1297 = vmatpush1.bf16.msra.mxu0 %v1277
    %1298 = vmatprep.subr.bf16.mxu0 0
    %1299 = vmatpush1.bf16.msra.mxu0 %v1278
    %1300 = vmatprep.subr.bf16.mxu0 0
    %1301 = vmatpush1.bf16.msra.mxu0 %v1279
    %1302 = vmatprep.subr.bf16.mxu0 0
    %1303 = vmatpush1.bf16.msra.mxu0 %v1280
    %1304 = vmatprep.subr.bf16.mxu0 0
    %1305 = vmatpush1.bf16.msra.mxu0 %v1281
    %1306 = vmatprep.subr.bf16.mxu0 0
    %1307 = vmatpush1.bf16.msra.mxu0 0
    %1308 = vmatprep.subr.bf16.mxu0 0
    %1309 = vmatpush1.bf16.msra.mxu0 0
    %1310 = vmatprep.subr.bf16.mxu0 0
    %1311 = vmatpush1.bf16.msra.mxu0 0
    %1312 = vmatprep.subr.bf16.mxu0 0
    %1313 = vmatpush1.bf16.msra.mxu0 0
    %1314 = vmatprep.subr.bf16.mxu0 0
    %1315 = vmatpush1.bf16.msra.mxu0 0
    %1316 = vmatprep.subr.bf16.mxu0 0
    %1317 = vmatpush1.bf16.msra.mxu0 0
    %1318 = vmatprep.subr.bf16.mxu0 0
    %1319 = vmatpush1.bf16.msra.mxu0 0
    %1320 = vmatprep.subr.bf16.mxu0 0
    %1321 = vmatpush1.bf16.msra.mxu0 0
    %1322 = vmatprep.mubr.bf16.mxu0 0
    %1323 = vmatmul.mubr.bf16.gmra.mrb[0].mxu0 %v1203
    %v1324 = vpop.f32.mrb[0].mxu0
    %v1325 = vadd.f32 %v1240, %v1324
    %v1326 = vpop.f32.mrb[0].mxu0
    %v1327 = vpop.f32.mrb[0].mxu0
    %v1328 = vadd.f32 %v1240, %v1327
    %v1329 = vpop.f32.mrb[0].mxu0
    %1330 = vmatprep.mubr.bf16.mxu0 0
    %1331 = vmatmul.mubr.bf16.gmra.mrb[0].mxu0 %v1204
    %v1332 = vpop.f32.mrb[0].mxu0
    %v1333 = vadd.f32 %v1240, %v1332
    %v1334 = vpop.f32.mrb[0].mxu0
    %v1335 = vpop.f32.mrb[0].mxu0
    %v1336 = vadd.f32 %v1240, %v1335
    %v1337 = vpop.f32.mrb[0].mxu0
    %1338 = vmatprep.mubr.bf16.mxu0 0
    %1339 = vmatmul.mubr.bf16.gmra.mrb[0].mxu0 %v1205
    %v1340 = vpop.f32.mrb[0].mxu0
    %v1341 = vadd.f32 %v1240, %v1340
    %v1342 = vpop.f32.mrb[0].mxu0
    %v1343 = vpop.f32.mrb[0].mxu0
    %v1344 = vadd.f32 %v1240, %v1343
    %v1345 = vpop.f32.mrb[0].mxu0
    %1346 = vmatprep.mubr.bf16.mxu0 0
    %1347 = vmatmul.mubr.bf16.gmra.mrb[0].mxu0 %v1206
    %v1348 = vpop.f32.mrb[0].mxu0
    %v1349 = vadd.f32 %v1240, %v1348
    %v1350 = vpop.f32.mrb[0].mxu0
    %v1351 = vpop.f32.mrb[0].mxu0
    %v1352 = vadd.f32 %v1240, %v1351
    %v1353 = vpop.f32.mrb[0].mxu0
    %1354 = vmatprep.mubr.bf16.mxu0 0
    %1355 = vmatmul.mubr.bf16.gmra.mrb[0].mxu0 %v1207
    %v1356 = vpop.f32.mrb[0].mxu0
    %v1357 = vadd.f32 %v1240, %v1356
    %v1358 = vpop.f32.mrb[0].mxu0
    %v1359 = vpop.f32.mrb[0].mxu0
    %v1360 = vadd.f32 %v1240, %v1359
    %v1361 = vpop.f32.mrb[0].mxu0
    %1362 = vmatprep.mubr.bf16.mxu0 0
    %1363 = vmatmul.mubr.bf16.gmra.mrb[0].mxu0 %v1208
    %v1364 = vpop.f32.mrb[0].mxu0
    %v1365 = vadd.f32 %v1240, %v1364
    %v1366 = vpop.f32.mrb[0].mxu0
    %v1367 = vpop.f32.mrb[0].mxu0
    %v1368 = vadd.f32 %v1240, %v1367
    %v1369 = vpop.f32.mrb[0].mxu0
    %1370 = vmatprep.mubr.bf16.mxu0 0
    %1371 = vmatmul.mubr.bf16.gmra.mrb[0].mxu0 %v1209
    %v1372 = vpop.f32.mrb[0].mxu0
    %v1373 = vadd.f32 %v1240, %v1372
    %v1374 = vpop.f32.mrb[0].mxu0
    %v1375 = vpop.f32.mrb[0].mxu0
    %v1376 = vadd.f32 %v1240, %v1375
    %v1377 = vpop.f32.mrb[0].mxu0
    %1378 = vmatprep.mubr.bf16.mxu0 0
    %1379 = vmatmul.mubr.bf16.gmra.mrb[0].mxu0 %v1210
    %v1380 = vpop.f32.mrb[0].mxu0
    %v1381 = vadd.f32 %v1240, %v1380
    %v1382 = vpop.f32.mrb[0].mxu0
    %v1383 = vpop.f32.mrb[0].mxu0
    %v1384 = vadd.f32 %v1240, %v1383
    %v1385 = vpop.f32.mrb[0].mxu0
    %1386 = vmatprep.mubr.bf16.mxu0 0
    %1387 = vmatmul.mubr.bf16.gmra.mrb[0].mxu0 %v1211
    %v1388 = vpop.f32.mrb[0].mxu0
    %v1389 = vadd.f32 %v1240, %v1388
    %v1390 = vpop.f32.mrb[0].mxu0
    %v1391 = vpop.f32.mrb[0].mxu0
    %v1392 = vadd.f32 %v1240, %v1391
    %v1393 = vpop.f32.mrb[0].mxu0
    %1394 = vmatprep.mubr.bf16.mxu0 0
    %1395 = vmatmul.mubr.bf16.gmra.mrb[0].mxu0 %v1212
    %v1396 = vpop.f32.mrb[0].mxu0
    %v1397 = vadd.f32 %v1240, %v1396
    %v1398 = vpop.f32.mrb[0].mxu0
    %v1399 = vpop.f32.mrb[0].mxu0
    %v1400 = vadd.f32 %v1240, %v1399
    %v1401 = vpop.f32.mrb[0].mxu0
    %1402 = vmatprep.mubr.bf16.mxu0 0
    %1403 = vmatmul.mubr.bf16.gmra.mrb[0].mxu0 %v1213
    %v1404 = vpop.f32.mrb[0].mxu0
    %v1405 = vadd.f32 %v1240, %v1404
    %v1406 = vpop.f32.mrb[0].mxu0
    %v1407 = vpop.f32.mrb[0].mxu0
    %v1408 = vadd.f32 %v1240, %v1407
    %v1409 = vpop.f32.mrb[0].mxu0
    %1410 = vmatprep.mubr.bf16.mxu0 0
    %1411 = vmatmul.mubr.bf16.gmra.mrb[0].mxu0 %v1214
    %v1412 = vpop.f32.mrb[0].mxu0
    %v1413 = vadd.f32 %v1240, %v1412
    %v1414 = vpop.f32.mrb[0].mxu0
    %v1415 = vpop.f32.mrb[0].mxu0
    %v1416 = vadd.f32 %v1240, %v1415
    %v1417 = vpop.f32.mrb[0].mxu0
    %1418 = vmatprep.mubr.bf16.mxu0 0
    %1419 = vmatmul.mubr.bf16.gmra.mrb[0].mxu0 %v1215
    %v1420 = vpop.f32.mrb[0].mxu0
    %v1421 = vadd.f32 %v1240, %v1420
    %v1422 = vpop.f32.mrb[0].mxu0
    %v1423 = vpop.f32.mrb[0].mxu0
    %v1424 = vadd.f32 %v1240, %v1423
    %v1425 = vpop.f32.mrb[0].mxu0
    %1426 = vmatprep.mubr.bf16.mxu0 0
    %1427 = vmatmul.mubr.bf16.gmra.mrb[0].mxu0 %v1216
    %v1428 = vpop.f32.mrb[0].mxu0
    %v1429 = vadd.f32 %v1240, %v1428
    %v1430 = vpop.f32.mrb[0].mxu0
    %v1431 = vpop.f32.mrb[0].mxu0
    %v1432 = vadd.f32 %v1240, %v1431
    %v1433 = vpop.f32.mrb[0].mxu0
    %1434 = vmatprep.mubr.bf16.mxu0 0
    %1435 = vmatmul.mubr.bf16.gmra.mrb[0].mxu0 %v1217
    %v1436 = vpop.f32.mrb[0].mxu0
    %v1437 = vadd.f32 %v1240, %v1436
    %v1438 = vpop.f32.mrb[0].mxu0
    %v1439 = vpop.f32.mrb[0].mxu0
    %v1440 = vadd.f32 %v1240, %v1439
    %v1441 = vpop.f32.mrb[0].mxu0
    %1442 = vmatprep.mubr.bf16.mxu0 0
    %1443 = vmatmul.mubr.bf16.gmra.mrb[0].mxu0 %v1218
    %v1444 = vpop.f32.mrb[0].mxu0
    %v1445 = vadd.f32 %v1240, %v1444
    %v1446 = vpop.f32.mrb[0].mxu0
    %v1447 = vpop.f32.mrb[0].mxu0
    %v1448 = vadd.f32 %v1240, %v1447
    %v1449 = vpop.f32.mrb[0].mxu0
    %1450 = vdwg.mxu0
    %v1451 = vmax.f32 %v1325, 0.0
    %v1452 = vmax.f32 %v1328, 0.0
    %v1453 = vmax.f32 %v1333, 0.0
    %v1454 = vmax.f32 %v1336, 0.0
    %v1455 = vmax.f32 %v1341, 0.0
    %v1456 = vmax.f32 %v1344, 0.0
    %v1457 = vmax.f32 %v1349, 0.0
    %v1458 = vmax.f32 %v1352, 0.0
    %v1459 = vmax.f32 %v1357, 0.0
    %v1460 = vmax.f32 %v1360, 0.0
    %v1461 = vmax.f32 %v1365, 0.0
    %v1462 = vmax.f32 %v1368, 0.0
    %v1463 = vmax.f32 %v1373, 0.0
    %v1464 = vmax.f32 %v1376, 0.0
    %v1465 = vmax.f32 %v1381, 0.0
    %v1466 = vmax.f32 %v1384, 0.0
    %v1467 = vmax.f32 %v1389, 0.0
    %v1468 = vmax.f32 %v1392, 0.0
    %v1469 = vmax.f32 %v1397, 0.0
    %v1470 = vmax.f32 %v1400, 0.0
    %v1471 = vmax.f32 %v1405, 0.0
    %v1472 = vmax.f32 %v1408, 0.0
    %v1473 = vmax.f32 %v1413, 0.0
    %v1474 = vmax.f32 %v1416, 0.0
    %v1475 = vmax.f32 %v1421, 0.0
    %v1476 = vmax.f32 %v1424, 0.0
    %v1477 = vmax.f32 %v1429, 0.0
    %v1478 = vmax.f32 %v1432, 0.0
    %v1479 = vmax.f32 %v1437, 0.0
    %v1480 = vmax.f32 %v1440, 0.0
    %v1481 = vmax.f32 %v1445, 0.0
    %v1482 = vmax.f32 %v1448, 0.0
    %v1483 = vpack.c.bf16 %v1452, %v1451
    %v1484 = vpack.c.bf16 %v1454, %v1453
    %v1485 = vpack.c.bf16 %v1456, %v1455
    %v1486 = vpack.c.bf16 %v1458, %v1457
    %v1487 = vpack.c.bf16 %v1460, %v1459
    %v1488 = vpack.c.bf16 %v1462, %v1461
    %v1489 = vpack.c.bf16 %v1464, %v1463
    %v1490 = vpack.c.bf16 %v1466, %v1465
    %v1491 = vpack.c.bf16 %v1468, %v1467
    %v1492 = vpack.c.bf16 %v1470, %v1469
    %v1493 = vpack.c.bf16 %v1472, %v1471
    %v1494 = vpack.c.bf16 %v1474, %v1473
    %v1495 = vpack.c.bf16 %v1476, %v1475
    %v1496 = vpack.c.bf16 %v1478, %v1477
    %v1497 = vpack.c.bf16 %v1480, %v1479
    %v1498 = vpack.c.bf16 %v1482, %v1481
    %v1499 = vld [vmem:[%s4] sm:$0xf]
    %v1500 = vld [vmem:[%s4 + $0x4] sm:$0xf]
    %v1501 = vld [vmem:[%s4 + $0x8] sm:$0xf]
    %v1502 = vld [vmem:[%s4 + $0xc] sm:$0xf]
    %v1503 = vld [vmem:[%s4 + $0x10] sm:$0xf]
    %v1504 = vld [vmem:[%s4 + $0x14] sm:$0xf]
    %v1505 = vld [vmem:[%s4 + $0x18] sm:$0xf]
    %v1506 = vld [vmem:[%s4 + $0x1c] sm:$0xf]
    %v1507 = vld [vmem:[%s4 + $0x20] sm:$0xf]
    %v1508 = vld [vmem:[%s4 + $0x24] sm:$0xf]
    %v1509 = vld [vmem:[%s4 + $0x28] sm:$0xf]
    %v1510 = vld [vmem:[%s4 + $0x2c] sm:$0xf]
    %v1511 = vld [vmem:[%s4 + $0x30] sm:$0xf]
    %v1512 = vld [vmem:[%s4 + $0x34] sm:$0xf]
    %v1513 = vld [vmem:[%s4 + $0x38] sm:$0xf]
    %v1514 = vld [vmem:[%s4 + $0x3c] sm:$0xf]
    %v1515 = vld [vmem:[%s5] sm:$0x1]
    %v1517 = vlaneseq
    %v1518 = vshrl.u32 %v1517, 7
    %v1519 = vsub.s32 0, %v1518
    %v1520 = vrot.slane %v1515, %v1519
    %v1538 = vunpack.c.l.b16 %v1499
    %v1539 = vunpack.c.l.b16 %v1500
    %v1540 = vunpack.c.l.b16 %v1501
    %v1541 = vunpack.c.l.b16 %v1502
    %v1542 = vunpack.c.l.b16 %v1503
    %v1543 = vunpack.c.l.b16 %v1504
    %v1544 = vunpack.c.l.b16 %v1505
    %v1545 = vunpack.c.l.b16 %v1506
    %v1546 = vunpack.c.l.b16 %v1507
    %v1547 = vunpack.c.l.b16 %v1508
    %v1548 = vunpack.c.l.b16 %v1509
    %v1549 = vunpack.c.l.b16 %v1510
    %v1550 = vunpack.c.l.b16 %v1511
    %v1551 = vunpack.c.l.b16 %v1512
    %v1552 = vunpack.c.l.b16 %v1513
    %v1553 = vunpack.c.l.b16 %v1514
    %v1554 = vpack.c.b16 %v1539, %v1538
    %v1555 = vpack.c.b16 %v1541, %v1540
    %v1556 = vpack.c.b16 %v1543, %v1542
    %v1557 = vpack.c.b16 %v1545, %v1544
    %v1558 = vpack.c.b16 %v1547, %v1546
    %v1559 = vpack.c.b16 %v1549, %v1548
    %v1560 = vpack.c.b16 %v1551, %v1550
    %v1561 = vpack.c.b16 %v1553, %v1552
    %1570 = vmatprep.subr.bf16.mxu0 0
    %1571 = vmatpush1.bf16.msra.mxu0 %v1554
    %1572 = vmatprep.subr.bf16.mxu0 0
    %1573 = vmatpush1.bf16.msra.mxu0 %v1555
    %1574 = vmatprep.subr.bf16.mxu0 0
    %1575 = vmatpush1.bf16.msra.mxu0 %v1556
    %1576 = vmatprep.subr.bf16.mxu0 0
    %1577 = vmatpush1.bf16.msra.mxu0 %v1557
    %1578 = vmatprep.subr.bf16.mxu0 0
    %1579 = vmatpush1.bf16.msra.mxu0 %v1558
    %1580 = vmatprep.subr.bf16.mxu0 0
    %1581 = vmatpush1.bf16.msra.mxu0 %v1559
    %1582 = vmatprep.subr.bf16.mxu0 0
    %1583 = vmatpush1.bf16.msra.mxu0 %v1560
    %1584 = vmatprep.subr.bf16.mxu0 0
    %1585 = vmatpush1.bf16.msra.mxu0 %v1561
    %1586 = vmatprep.subr.bf16.mxu0 0
    %1587 = vmatpush1.bf16.msra.mxu0 0
    %1588 = vmatprep.subr.bf16.mxu0 0
    %1589 = vmatpush1.bf16.msra.mxu0 0
    %1590 = vmatprep.subr.bf16.mxu0 0
    %1591 = vmatpush1.bf16.msra.mxu0 0
    %1592 = vmatprep.subr.bf16.mxu0 0
    %1593 = vmatpush1.bf16.msra.mxu0 0
    %1594 = vmatprep.subr.bf16.mxu0 0
    %1595 = vmatpush1.bf16.msra.mxu0 0
    %1596 = vmatprep.subr.bf16.mxu0 0
    %1597 = vmatpush1.bf16.msra.mxu0 0
    %1598 = vmatprep.subr.bf16.mxu0 0
    %1599 = vmatpush1.bf16.msra.mxu0 0
    %1600 = vmatprep.subr.bf16.mxu0 0
    %1601 = vmatpush1.bf16.msra.mxu0 0
    %1602 = vmatprep.mubr.bf16.mxu0 0
    %1603 = vmatmul.mubr.bf16.gmra.mrb[0].mxu0 %v1483
    %v1604 = vpop.f32.mrb[0].mxu0
    %v1605 = vadd.f32 %v1520, %v1604
    %v1606 = vpop.f32.mrb[0].mxu0
    %v1607 = vpop.f32.mrb[0].mxu0
    %v1608 = vadd.f32 %v1520, %v1607
    %v1609 = vpop.f32.mrb[0].mxu0
    %1610 = vmatprep.mubr.bf16.mxu0 0
    %1611 = vmatmul.mubr.bf16.gmra.mrb[0].mxu0 %v1484
    %v1612 = vpop.f32.mrb[0].mxu0
    %v1613 = vadd.f32 %v1520, %v1612
    %v1614 = vpop.f32.mrb[0].mxu0
    %v1615 = vpop.f32.mrb[0].mxu0
    %v1616 = vadd.f32 %v1520, %v1615
    %v1617 = vpop.f32.mrb[0].mxu0
    %1618 = vmatprep.mubr.bf16.mxu0 0
    %1619 = vmatmul.mubr.bf16.gmra.mrb[0].mxu0 %v1485
    %v1620 = vpop.f32.mrb[0].mxu0
    %v1621 = vadd.f32 %v1520, %v1620
    %v1622 = vpop.f32.mrb[0].mxu0
    %v1623 = vpop.f32.mrb[0].mxu0
    %v1624 = vadd.f32 %v1520, %v1623
    %v1625 = vpop.f32.mrb[0].mxu0
    %1626 = vmatprep.mubr.bf16.mxu0 0
    %1627 = vmatmul.mubr.bf16.gmra.mrb[0].mxu0 %v1486
    %v1628 = vpop.f32.mrb[0].mxu0
    %v1629 = vadd.f32 %v1520, %v1628
    %v1630 = vpop.f32.mrb[0].mxu0
    %v1631 = vpop.f32.mrb[0].mxu0
    %v1632 = vadd.f32 %v1520, %v1631
    %v1633 = vpop.f32.mrb[0].mxu0
    %1634 = vmatprep.mubr.bf16.mxu0 0
    %1635 = vmatmul.mubr.bf16.gmra.mrb[0].mxu0 %v1487
    %v1636 = vpop.f32.mrb[0].mxu0
    %v1637 = vadd.f32 %v1520, %v1636
    %v1638 = vpop.f32.mrb[0].mxu0
    %v1639 = vpop.f32.mrb[0].mxu0
    %v1640 = vadd.f32 %v1520, %v1639
    %v1641 = vpop.f32.mrb[0].mxu0
    %1642 = vmatprep.mubr.bf16.mxu0 0
    %1643 = vmatmul.mubr.bf16.gmra.mrb[0].mxu0 %v1488
    %v1644 = vpop.f32.mrb[0].mxu0
    %v1645 = vadd.f32 %v1520, %v1644
    %v1646 = vpop.f32.mrb[0].mxu0
    %v1647 = vpop.f32.mrb[0].mxu0
    %v1648 = vadd.f32 %v1520, %v1647
    %v1649 = vpop.f32.mrb[0].mxu0
    %1650 = vmatprep.mubr.bf16.mxu0 0
    %1651 = vmatmul.mubr.bf16.gmra.mrb[0].mxu0 %v1489
    %v1652 = vpop.f32.mrb[0].mxu0
    %v1653 = vadd.f32 %v1520, %v1652
    %v1654 = vpop.f32.mrb[0].mxu0
    %v1655 = vpop.f32.mrb[0].mxu0
    %v1656 = vadd.f32 %v1520, %v1655
    %v1657 = vpop.f32.mrb[0].mxu0
    %1658 = vmatprep.mubr.bf16.mxu0 0
    %1659 = vmatmul.mubr.bf16.gmra.mrb[0].mxu0 %v1490
    %v1660 = vpop.f32.mrb[0].mxu0
    %v1661 = vadd.f32 %v1520, %v1660
    %v1662 = vpop.f32.mrb[0].mxu0
    %v1663 = vpop.f32.mrb[0].mxu0
    %v1664 = vadd.f32 %v1520, %v1663
    %v1665 = vpop.f32.mrb[0].mxu0
    %1666 = vmatprep.mubr.bf16.mxu0 0
    %1667 = vmatmul.mubr.bf16.gmra.mrb[0].mxu0 %v1491
    %v1668 = vpop.f32.mrb[0].mxu0
    %v1669 = vadd.f32 %v1520, %v1668
    %v1670 = vpop.f32.mrb[0].mxu0
    %v1671 = vpop.f32.mrb[0].mxu0
    %v1672 = vadd.f32 %v1520, %v1671
    %v1673 = vpop.f32.mrb[0].mxu0
    %1674 = vmatprep.mubr.bf16.mxu0 0
    %1675 = vmatmul.mubr.bf16.gmra.mrb[0].mxu0 %v1492
    %v1676 = vpop.f32.mrb[0].mxu0
    %v1677 = vadd.f32 %v1520, %v1676
    %v1678 = vpop.f32.mrb[0].mxu0
    %v1679 = vpop.f32.mrb[0].mxu0
    %v1680 = vadd.f32 %v1520, %v1679
    %v1681 = vpop.f32.mrb[0].mxu0
    %1682 = vmatprep.mubr.bf16.mxu0 0
    %1683 = vmatmul.mubr.bf16.gmra.mrb[0].mxu0 %v1493
    %v1684 = vpop.f32.mrb[0].mxu0
    %v1685 = vadd.f32 %v1520, %v1684
    %v1686 = vpop.f32.mrb[0].mxu0
    %v1687 = vpop.f32.mrb[0].mxu0
    %v1688 = vadd.f32 %v1520, %v1687
    %v1689 = vpop.f32.mrb[0].mxu0
    %1690 = vmatprep.mubr.bf16.mxu0 0
    %1691 = vmatmul.mubr.bf16.gmra.mrb[0].mxu0 %v1494
    %v1692 = vpop.f32.mrb[0].mxu0
    %v1693 = vadd.f32 %v1520, %v1692
    %v1694 = vpop.f32.mrb[0].mxu0
    %v1695 = vpop.f32.mrb[0].mxu0
    %v1696 = vadd.f32 %v1520, %v1695
    %v1697 = vpop.f32.mrb[0].mxu0
    %1698 = vmatprep.mubr.bf16.mxu0 0
    %1699 = vmatmul.mubr.bf16.gmra.mrb[0].mxu0 %v1495
    %v1700 = vpop.f32.mrb[0].mxu0
    %v1701 = vadd.f32 %v1520, %v1700
    %v1702 = vpop.f32.mrb[0].mxu0
    %v1703 = vpop.f32.mrb[0].mxu0
    %v1704 = vadd.f32 %v1520, %v1703
    %v1705 = vpop.f32.mrb[0].mxu0
    %1706 = vmatprep.mubr.bf16.mxu0 0
    %1707 = vmatmul.mubr.bf16.gmra.mrb[0].mxu0 %v1496
    %v1708 = vpop.f32.mrb[0].mxu0
    %v1709 = vadd.f32 %v1520, %v1708
    %v1710 = vpop.f32.mrb[0].mxu0
    %v1711 = vpop.f32.mrb[0].mxu0
    %v1712 = vadd.f32 %v1520, %v1711
    %v1713 = vpop.f32.mrb[0].mxu0
    %1714 = vmatprep.mubr.bf16.mxu0 0
    %1715 = vmatmul.mubr.bf16.gmra.mrb[0].mxu0 %v1497
    %v1716 = vpop.f32.mrb[0].mxu0
    %v1717 = vadd.f32 %v1520, %v1716
    %v1718 = vpop.f32.mrb[0].mxu0
    %v1719 = vpop.f32.mrb[0].mxu0
    %v1720 = vadd.f32 %v1520, %v1719
    %v1721 = vpop.f32.mrb[0].mxu0
    %1722 = vmatprep.mubr.bf16.mxu0 0
    %1723 = vmatmul.mubr.bf16.gmra.mrb[0].mxu0 %v1498
    %v1724 = vpop.f32.mrb[0].mxu0
    %v1725 = vadd.f32 %v1520, %v1724
    %v1726 = vpop.f32.mrb[0].mxu0
    %v1727 = vpop.f32.mrb[0].mxu0
    %v1728 = vadd.f32 %v1520, %v1727
    %v1729 = vpop.f32.mrb[0].mxu0
    %1730 = vdwg.mxu0
    %v1731 = vmax.f32 %v1605, 0.0
    %v1732 = vmax.f32 %v1608, 0.0
    %v1733 = vmax.f32 %v1613, 0.0
    %v1734 = vmax.f32 %v1616, 0.0
    %v1735 = vmax.f32 %v1621, 0.0
    %v1736 = vmax.f32 %v1624, 0.0
    %v1737 = vmax.f32 %v1629, 0.0
    %v1738 = vmax.f32 %v1632, 0.0
    %v1739 = vmax.f32 %v1637, 0.0
    %v1740 = vmax.f32 %v1640, 0.0
    %v1741 = vmax.f32 %v1645, 0.0
    %v1742 = vmax.f32 %v1648, 0.0
    %v1743 = vmax.f32 %v1653, 0.0
    %v1744 = vmax.f32 %v1656, 0.0
    %v1745 = vmax.f32 %v1661, 0.0
    %v1746 = vmax.f32 %v1664, 0.0
    %v1747 = vmax.f32 %v1669, 0.0
    %v1748 = vmax.f32 %v1672, 0.0
    %v1749 = vmax.f32 %v1677, 0.0
    %v1750 = vmax.f32 %v1680, 0.0
    %v1751 = vmax.f32 %v1685, 0.0
    %v1752 = vmax.f32 %v1688, 0.0
    %v1753 = vmax.f32 %v1693, 0.0
    %v1754 = vmax.f32 %v1696, 0.0
    %v1755 = vmax.f32 %v1701, 0.0
    %v1756 = vmax.f32 %v1704, 0.0
    %v1757 = vmax.f32 %v1709, 0.0
    %v1758 = vmax.f32 %v1712, 0.0
    %v1759 = vmax.f32 %v1717, 0.0
    %v1760 = vmax.f32 %v1720, 0.0
    %v1761 = vmax.f32 %v1725, 0.0
    %v1762 = vmax.f32 %v1728, 0.0
    %v1763 = vpack.c.bf16 %v1732, %v1731
    %v1764 = vpack.c.bf16 %v1734, %v1733
    %v1765 = vpack.c.bf16 %v1736, %v1735
    %v1766 = vpack.c.bf16 %v1738, %v1737
    %v1767 = vpack.c.bf16 %v1740, %v1739
    %v1768 = vpack.c.bf16 %v1742, %v1741
    %v1769 = vpack.c.bf16 %v1744, %v1743
    %v1770 = vpack.c.bf16 %v1746, %v1745
    %v1771 = vpack.c.bf16 %v1748, %v1747
    %v1772 = vpack.c.bf16 %v1750, %v1749
    %v1773 = vpack.c.bf16 %v1752, %v1751
    %v1774 = vpack.c.bf16 %v1754, %v1753
    %v1775 = vpack.c.bf16 %v1756, %v1755
    %v1776 = vpack.c.bf16 %v1758, %v1757
    %v1777 = vpack.c.bf16 %v1760, %v1759
    %v1778 = vpack.c.bf16 %v1762, %v1761
    %v1779 = vld [vmem:[%s6] sm:$0xf]
    %v1780 = vld [vmem:[%s6 + $0x4] sm:$0xf]
    %v1781 = vld [vmem:[%s6 + $0x8] sm:$0xf]
    %v1782 = vld [vmem:[%s6 + $0xc] sm:$0xf]
    %v1783 = vld [vmem:[%s6 + $0x10] sm:$0xf]
    %v1784 = vld [vmem:[%s6 + $0x14] sm:$0xf]
    %v1785 = vld [vmem:[%s6 + $0x18] sm:$0xf]
    %v1786 = vld [vmem:[%s6 + $0x1c] sm:$0xf]
    %v1787 = vld [vmem:[%s6 + $0x20] sm:$0xf]
    %v1788 = vld [vmem:[%s6 + $0x24] sm:$0xf]
    %v1789 = vld [vmem:[%s6 + $0x28] sm:$0xf]
    %v1790 = vld [vmem:[%s6 + $0x2c] sm:$0xf]
    %v1791 = vld [vmem:[%s6 + $0x30] sm:$0xf]
    %v1792 = vld [vmem:[%s6 + $0x34] sm:$0xf]
    %v1793 = vld [vmem:[%s6 + $0x38] sm:$0xf]
    %v1794 = vld [vmem:[%s6 + $0x3c] sm:$0xf]
    %v1795 = vld [vmem:[%s7] sm:$0x1]
    %v1797 = vlaneseq
    %v1798 = vshrl.u32 %v1797, 7
    %v1799 = vsub.s32 0, %v1798
    %v1800 = vrot.slane %v1795, %v1799
    %v1818 = vunpack.c.l.b16 %v1779
    %v1819 = vunpack.c.l.b16 %v1780
    %v1820 = vunpack.c.l.b16 %v1781
    %v1821 = vunpack.c.l.b16 %v1782
    %v1822 = vunpack.c.l.b16 %v1783
    %v1823 = vunpack.c.l.b16 %v1784
    %v1824 = vunpack.c.l.b16 %v1785
    %v1825 = vunpack.c.l.b16 %v1786
    %v1826 = vunpack.c.l.b16 %v1787
    %v1827 = vunpack.c.l.b16 %v1788
    %v1828 = vunpack.c.l.b16 %v1789
    %v1829 = vunpack.c.l.b16 %v1790
    %v1830 = vunpack.c.l.b16 %v1791
    %v1831 = vunpack.c.l.b16 %v1792
    %v1832 = vunpack.c.l.b16 %v1793
    %v1833 = vunpack.c.l.b16 %v1794
    %v1834 = vpack.c.b16 %v1819, %v1818
    %v1835 = vpack.c.b16 %v1821, %v1820
    %v1836 = vpack.c.b16 %v1823, %v1822
    %v1837 = vpack.c.b16 %v1825, %v1824
    %v1838 = vpack.c.b16 %v1827, %v1826
    %v1839 = vpack.c.b16 %v1829, %v1828
    %v1840 = vpack.c.b16 %v1831, %v1830
    %v1841 = vpack.c.b16 %v1833, %v1832
    %1850 = vmatprep.subr.bf16.mxu0 0
    %1851 = vmatpush1.bf16.msra.mxu0 %v1834
    %1852 = vmatprep.subr.bf16.mxu0 0
    %1853 = vmatpush1.bf16.msra.mxu0 %v1835
    %1854 = vmatprep.subr.bf16.mxu0 0
    %1855 = vmatpush1.bf16.msra.mxu0 %v1836
    %1856 = vmatprep.subr.bf16.mxu0 0
    %1857 = vmatpush1.bf16.msra.mxu0 %v1837
    %1858 = vmatprep.subr.bf16.mxu0 0
    %1859 = vmatpush1.bf16.msra.mxu0 %v1838
    %1860 = vmatprep.subr.bf16.mxu0 0
    %1861 = vmatpush1.bf16.msra.mxu0 %v1839
    %1862 = vmatprep.subr.bf16.mxu0 0
    %1863 = vmatpush1.bf16.msra.mxu0 %v1840
    %1864 = vmatprep.subr.bf16.mxu0 0
    %1865 = vmatpush1.bf16.msra.mxu0 %v1841
    %1866 = vmatprep.subr.bf16.mxu0 0
    %1867 = vmatpush1.bf16.msra.mxu0 0
    %1868 = vmatprep.subr.bf16.mxu0 0
    %1869 = vmatpush1.bf16.msra.mxu0 0
    %1870 = vmatprep.subr.bf16.mxu0 0
    %1871 = vmatpush1.bf16.msra.mxu0 0
    %1872 = vmatprep.subr.bf16.mxu0 0
    %1873 = vmatpush1.bf16.msra.mxu0 0
    %1874 = vmatprep.subr.bf16.mxu0 0
    %1875 = vmatpush1.bf16.msra.mxu0 0
    %1876 = vmatprep.subr.bf16.mxu0 0
    %1877 = vmatpush1.bf16.msra.mxu0 0
    %1878 = vmatprep.subr.bf16.mxu0 0
    %1879 = vmatpush1.bf16.msra.mxu0 0
    %1880 = vmatprep.subr.bf16.mxu0 0
    %1881 = vmatpush1.bf16.msra.mxu0 0
    %1882 = vmatprep.mubr.bf16.mxu0 0
    %1883 = vmatmul.mubr.bf16.gmra.mrb[0].mxu0 %v1763
    %v1884 = vpop.f32.mrb[0].mxu0
    %v1885 = vadd.f32 %v1800, %v1884
    %v1886 = vpop.f32.mrb[0].mxu0
    %v1887 = vpop.f32.mrb[0].mxu0
    %v1888 = vadd.f32 %v1800, %v1887
    %v1889 = vpop.f32.mrb[0].mxu0
    %1890 = vmatprep.mubr.bf16.mxu0 0
    %1891 = vmatmul.mubr.bf16.gmra.mrb[0].mxu0 %v1764
    %v1892 = vpop.f32.mrb[0].mxu0
    %v1893 = vadd.f32 %v1800, %v1892
    %v1894 = vpop.f32.mrb[0].mxu0
    %v1895 = vpop.f32.mrb[0].mxu0
    %v1896 = vadd.f32 %v1800, %v1895
    %v1897 = vpop.f32.mrb[0].mxu0
    %1898 = vmatprep.mubr.bf16.mxu0 0
    %1899 = vmatmul.mubr.bf16.gmra.mrb[0].mxu0 %v1765
    %v1900 = vpop.f32.mrb[0].mxu0
    %v1901 = vadd.f32 %v1800, %v1900
    %v1902 = vpop.f32.mrb[0].mxu0
    %v1903 = vpop.f32.mrb[0].mxu0
    %v1904 = vadd.f32 %v1800, %v1903
    %v1905 = vpop.f32.mrb[0].mxu0
    %1906 = vmatprep.mubr.bf16.mxu0 0
    %1907 = vmatmul.mubr.bf16.gmra.mrb[0].mxu0 %v1766
    %v1908 = vpop.f32.mrb[0].mxu0
    %v1909 = vadd.f32 %v1800, %v1908
    %v1910 = vpop.f32.mrb[0].mxu0
    %v1911 = vpop.f32.mrb[0].mxu0
    %v1912 = vadd.f32 %v1800, %v1911
    %v1913 = vpop.f32.mrb[0].mxu0
    %1914 = vmatprep.mubr.bf16.mxu0 0
    %1915 = vmatmul.mubr.bf16.gmra.mrb[0].mxu0 %v1767
    %v1916 = vpop.f32.mrb[0].mxu0
    %v1917 = vadd.f32 %v1800, %v1916
    %v1918 = vpop.f32.mrb[0].mxu0
    %v1919 = vpop.f32.mrb[0].mxu0
    %v1920 = vadd.f32 %v1800, %v1919
    %v1921 = vpop.f32.mrb[0].mxu0
    %1922 = vmatprep.mubr.bf16.mxu0 0
    %1923 = vmatmul.mubr.bf16.gmra.mrb[0].mxu0 %v1768
    %v1924 = vpop.f32.mrb[0].mxu0
    %v1925 = vadd.f32 %v1800, %v1924
    %v1926 = vpop.f32.mrb[0].mxu0
    %v1927 = vpop.f32.mrb[0].mxu0
    %v1928 = vadd.f32 %v1800, %v1927
    %v1929 = vpop.f32.mrb[0].mxu0
    %1930 = vmatprep.mubr.bf16.mxu0 0
    %1931 = vmatmul.mubr.bf16.gmra.mrb[0].mxu0 %v1769
    %v1932 = vpop.f32.mrb[0].mxu0
    %v1933 = vadd.f32 %v1800, %v1932
    %v1934 = vpop.f32.mrb[0].mxu0
    %v1935 = vpop.f32.mrb[0].mxu0
    %v1936 = vadd.f32 %v1800, %v1935
    %v1937 = vpop.f32.mrb[0].mxu0
    %1938 = vmatprep.mubr.bf16.mxu0 0
    %1939 = vmatmul.mubr.bf16.gmra.mrb[0].mxu0 %v1770
    %v1940 = vpop.f32.mrb[0].mxu0
    %v1941 = vadd.f32 %v1800, %v1940
    %v1942 = vpop.f32.mrb[0].mxu0
    %v1943 = vpop.f32.mrb[0].mxu0
    %v1944 = vadd.f32 %v1800, %v1943
    %v1945 = vpop.f32.mrb[0].mxu0
    %1946 = vmatprep.mubr.bf16.mxu0 0
    %1947 = vmatmul.mubr.bf16.gmra.mrb[0].mxu0 %v1771
    %v1948 = vpop.f32.mrb[0].mxu0
    %v1949 = vadd.f32 %v1800, %v1948
    %v1950 = vpop.f32.mrb[0].mxu0
    %v1951 = vpop.f32.mrb[0].mxu0
    %v1952 = vadd.f32 %v1800, %v1951
    %v1953 = vpop.f32.mrb[0].mxu0
    %1954 = vmatprep.mubr.bf16.mxu0 0
    %1955 = vmatmul.mubr.bf16.gmra.mrb[0].mxu0 %v1772
    %v1956 = vpop.f32.mrb[0].mxu0
    %v1957 = vadd.f32 %v1800, %v1956
    %v1958 = vpop.f32.mrb[0].mxu0
    %v1959 = vpop.f32.mrb[0].mxu0
    %v1960 = vadd.f32 %v1800, %v1959
    %v1961 = vpop.f32.mrb[0].mxu0
    %1962 = vmatprep.mubr.bf16.mxu0 0
    %1963 = vmatmul.mubr.bf16.gmra.mrb[0].mxu0 %v1773
    %v1964 = vpop.f32.mrb[0].mxu0
    %v1965 = vadd.f32 %v1800, %v1964
    %v1966 = vpop.f32.mrb[0].mxu0
    %v1967 = vpop.f32.mrb[0].mxu0
    %v1968 = vadd.f32 %v1800, %v1967
    %v1969 = vpop.f32.mrb[0].mxu0
    %1970 = vmatprep.mubr.bf16.mxu0 0
    %1971 = vmatmul.mubr.bf16.gmra.mrb[0].mxu0 %v1774
    %v1972 = vpop.f32.mrb[0].mxu0
    %v1973 = vadd.f32 %v1800, %v1972
    %v1974 = vpop.f32.mrb[0].mxu0
    %v1975 = vpop.f32.mrb[0].mxu0
    %v1976 = vadd.f32 %v1800, %v1975
    %v1977 = vpop.f32.mrb[0].mxu0
    %1978 = vmatprep.mubr.bf16.mxu0 0
    %1979 = vmatmul.mubr.bf16.gmra.mrb[0].mxu0 %v1775
    %v1980 = vpop.f32.mrb[0].mxu0
    %v1981 = vadd.f32 %v1800, %v1980
    %v1982 = vpop.f32.mrb[0].mxu0
    %v1983 = vpop.f32.mrb[0].mxu0
    %v1984 = vadd.f32 %v1800, %v1983
    %v1985 = vpop.f32.mrb[0].mxu0
    %1986 = vmatprep.mubr.bf16.mxu0 0
    %1987 = vmatmul.mubr.bf16.gmra.mrb[0].mxu0 %v1776
    %v1988 = vpop.f32.mrb[0].mxu0
    %v1989 = vadd.f32 %v1800, %v1988
    %v1990 = vpop.f32.mrb[0].mxu0
    %v1991 = vpop.f32.mrb[0].mxu0
    %v1992 = vadd.f32 %v1800, %v1991
    %v1993 = vpop.f32.mrb[0].mxu0
    %1994 = vmatprep.mubr.bf16.mxu0 0
    %1995 = vmatmul.mubr.bf16.gmra.mrb[0].mxu0 %v1777
    %v1996 = vpop.f32.mrb[0].mxu0
    %v1997 = vadd.f32 %v1800, %v1996
    %v1998 = vpop.f32.mrb[0].mxu0
    %v1999 = vpop.f32.mrb[0].mxu0
    %v2000 = vadd.f32 %v1800, %v1999
    %v2001 = vpop.f32.mrb[0].mxu0
    %2002 = vmatprep.mubr.bf16.mxu0 0
    %2003 = vmatmul.mubr.bf16.gmra.mrb[0].mxu0 %v1778
    %v2004 = vpop.f32.mrb[0].mxu0
    %v2005 = vadd.f32 %v1800, %v2004
    %v2006 = vpop.f32.mrb[0].mxu0
    %v2007 = vpop.f32.mrb[0].mxu0
    %v2008 = vadd.f32 %v1800, %v2007
    %v2009 = vpop.f32.mrb[0].mxu0
    %2010 = vdwg.mxu0
    %v2011 = vpack.c.bf16 %v1888, %v1885
    %v2012 = vpack.c.bf16 %v1896, %v1893
    %v2013 = vpack.c.bf16 %v1904, %v1901
    %v2014 = vpack.c.bf16 %v1912, %v1909
    %v2015 = vpack.c.bf16 %v1920, %v1917
    %v2016 = vpack.c.bf16 %v1928, %v1925
    %v2017 = vpack.c.bf16 %v1936, %v1933
    %v2018 = vpack.c.bf16 %v1944, %v1941
    %v2019 = vpack.c.bf16 %v1952, %v1949
    %v2020 = vpack.c.bf16 %v1960, %v1957
    %v2021 = vpack.c.bf16 %v1968, %v1965
    %v2022 = vpack.c.bf16 %v1976, %v1973
    %v2023 = vpack.c.bf16 %v1984, %v1981
    %v2024 = vpack.c.bf16 %v1992, %v1989
    %v2025 = vpack.c.bf16 %v2000, %v1997
    %v2026 = vpack.c.bf16 %v2008, %v2005
    %v2043 = vunpack.c.l.b16 %v2011
    %v2044 = vunpack.c.h.b16 %v2011
    %v2045 = vunpack.c.l.b16 %v2012
    %v2046 = vunpack.c.h.b16 %v2012
    %v2047 = vunpack.c.l.b16 %v2013
    %v2048 = vunpack.c.h.b16 %v2013
    %v2049 = vunpack.c.l.b16 %v2014
    %v2050 = vunpack.c.h.b16 %v2014
    %v2051 = vunpack.c.l.b16 %v2015
    %v2052 = vunpack.c.h.b16 %v2015
    %v2053 = vunpack.c.l.b16 %v2016
    %v2054 = vunpack.c.h.b16 %v2016
    %v2055 = vunpack.c.l.b16 %v2017
    %v2056 = vunpack.c.h.b16 %v2017
    %v2057 = vunpack.c.l.b16 %v2018
    %v2058 = vunpack.c.h.b16 %v2018
    %v2059 = vunpack.c.l.b16 %v2019
    %v2060 = vunpack.c.h.b16 %v2019
    %v2061 = vunpack.c.l.b16 %v2020
    %v2062 = vunpack.c.h.b16 %v2020
    %v2063 = vunpack.c.l.b16 %v2021
    %v2064 = vunpack.c.h.b16 %v2021
    %v2065 = vunpack.c.l.b16 %v2022
    %v2066 = vunpack.c.h.b16 %v2022
    %v2067 = vunpack.c.l.b16 %v2023
    %v2068 = vunpack.c.h.b16 %v2023
    %v2069 = vunpack.c.l.b16 %v2024
    %v2070 = vunpack.c.h.b16 %v2024
    %v2071 = vunpack.c.l.b16 %v2025
    %v2072 = vunpack.c.h.b16 %v2025
    %v2073 = vunpack.c.l.b16 %v2026
    %v2074 = vunpack.c.h.b16 %v2026
    %v2075 = vpack.c.b16 %v2043, %v2043
    %v2076 = vpack.c.b16 %v2044, %v2044
    %v2077 = vpack.c.b16 %v2045, %v2045
    %v2078 = vpack.c.b16 %v2046, %v2046
    %v2079 = vpack.c.b16 %v2047, %v2047
    %v2080 = vpack.c.b16 %v2048, %v2048
    %v2081 = vpack.c.b16 %v2049, %v2049
    %v2082 = vpack.c.b16 %v2050, %v2050
    %v2083 = vpack.c.b16 %v2051, %v2051
    %v2084 = vpack.c.b16 %v2052, %v2052
    %v2085 = vpack.c.b16 %v2053, %v2053
    %v2086 = vpack.c.b16 %v2054, %v2054
    %v2087 = vpack.c.b16 %v2055, %v2055
    %v2088 = vpack.c.b16 %v2056, %v2056
    %v2089 = vpack.c.b16 %v2057, %v2057
    %v2090 = vpack.c.b16 %v2058, %v2058
    %v2091 = vpack.c.b16 %v2059, %v2059
    %v2092 = vpack.c.b16 %v2060, %v2060
    %v2093 = vpack.c.b16 %v2061, %v2061
    %v2094 = vpack.c.b16 %v2062, %v2062
    %v2095 = vpack.c.b16 %v2063, %v2063
    %v2096 = vpack.c.b16 %v2064, %v2064
    %v2097 = vpack.c.b16 %v2065, %v2065
    %v2098 = vpack.c.b16 %v2066, %v2066
    %v2099 = vpack.c.b16 %v2067, %v2067
    %v2100 = vpack.c.b16 %v2068, %v2068
    %v2101 = vpack.c.b16 %v2069, %v2069
    %v2102 = vpack.c.b16 %v2070, %v2070
    %v2103 = vpack.c.b16 %v2071, %v2071
    %v2104 = vpack.c.b16 %v2072, %v2072
    %v2105 = vpack.c.b16 %v2073, %v2073
    %v2106 = vpack.c.b16 %v2074, %v2074
    %2139 = vst [vmem:[#allocation2] sm:$0xf] %v2075
    %2140 = vst [vmem:[#allocation2 + $0x4] sm:$0xf] %v2076
    %2141 = vst [vmem:[#allocation2 + $0x8] sm:$0xf] %v2077
    %2142 = vst [vmem:[#allocation2 + $0xc] sm:$0xf] %v2078
    %2143 = vst [vmem:[#allocation2 + $0x10] sm:$0xf] %v2079
    %2144 = vst [vmem:[#allocation2 + $0x14] sm:$0xf] %v2080
    %2145 = vst [vmem:[#allocation2 + $0x18] sm:$0xf] %v2081
    %2146 = vst [vmem:[#allocation2 + $0x1c] sm:$0xf] %v2082
    %2147 = vst [vmem:[#allocation2 + $0x20] sm:$0xf] %v2083
    %2148 = vst [vmem:[#allocation2 + $0x24] sm:$0xf] %v2084
    %2149 = vst [vmem:[#allocation2 + $0x28] sm:$0xf] %v2085
    %2150 = vst [vmem:[#allocation2 + $0x2c] sm:$0xf] %v2086
    %2151 = vst [vmem:[#allocation2 + $0x30] sm:$0xf] %v2087
    %2152 = vst [vmem:[#allocation2 + $0x34] sm:$0xf] %v2088
    %2153 = vst [vmem:[#allocation2 + $0x38] sm:$0xf] %v2089
    %2154 = vst [vmem:[#allocation2 + $0x3c] sm:$0xf] %v2090
    %2155 = vst [vmem:[#allocation2 + $0x40] sm:$0xf] %v2091
    %2156 = vst [vmem:[#allocation2 + $0x44] sm:$0xf] %v2092
    %2157 = vst [vmem:[#allocation2 + $0x48] sm:$0xf] %v2093
    %2158 = vst [vmem:[#allocation2 + $0x4c] sm:$0xf] %v2094
    %2159 = vst [vmem:[#allocation2 + $0x50] sm:$0xf] %v2095
    %2160 = vst [vmem:[#allocation2 + $0x54] sm:$0xf] %v2096
    %2161 = vst [vmem:[#allocation2 + $0x58] sm:$0xf] %v2097
    %2162 = vst [vmem:[#allocation2 + $0x5c] sm:$0xf] %v2098
    %2163 = vst [vmem:[#allocation2 + $0x60] sm:$0xf] %v2099
    %2164 = vst [vmem:[#allocation2 + $0x64] sm:$0xf] %v2100
    %2165 = vst [vmem:[#allocation2 + $0x68] sm:$0xf] %v2101
    %2166 = vst [vmem:[#allocation2 + $0x6c] sm:$0xf] %v2102
    %2167 = vst [vmem:[#allocation2 + $0x70] sm:$0xf] %v2103
    %2168 = vst [vmem:[#allocation2 + $0x74] sm:$0xf] %v2104
    %2169 = vst [vmem:[#allocation2 + $0x78] sm:$0xf] %v2105
    %2170 = vst [vmem:[#allocation2 + $0x7c] sm:$0xf] %v2106
    // Predicated region
    $region34: #{tpu_custom_call.1} parent=1 // pred_check
      _
    $region35: #{tpu_custom_call.1} parent=1 // pred_check_branch
      %2172 = sbr.rel (0) target = $region37
    $region36: #{tpu_custom_call.1} parent=1 // pred_region
      %s2174 = ssub.s32 2048, 2048
      %2175 = vsyncadd [#allocation3], %s2174
      %s2176 = sshll.u32 [#allocation2], 4
      %s2177 = int_to_ptr.vmem [resolvable:$true] %s2176
      %2182 = dma.vmem_to_hbm [thread:$0]  %s2177, 2048, %s8, [#allocation3], 64, 64, 4
    $region37: #{tpu_custom_call.1} parent=1 // pred_fallthru
      _
    // Predicated region
    $region38: #{tpu_custom_call.1} parent=1 // pred_check
      _
    $region39: #{tpu_custom_call.1} parent=1 // pred_check_branch
      %2184 = sbr.rel (0) target = $region41
    $region40: #{tpu_custom_call.1} parent=1 // pred_region
      %2185 = dma.done [#allocation3], 2048
    $region41: #{tpu_custom_call.1} parent=1 // pred_fallthru
      _
    %2186 = vsyncpa [#allocation3], 1

// kernel: tpu_custom_call.1
$region0: #{tpu_custom_call.1}
  #allocation0 [shape = 'u32[]', space=smem, size = 0x4, offset = 0x4, fixed_abs, tag = 'smem constant byte address 0x4 - core index']
  #allocation1 [shape = 'u32[144,128]{1,0:T(1,128)}', space=vmem, size = 0x12000, scoped, tag = 'internal scratch']
  %s0 = inlined_call_operand.vmem [shape: s32[256,3], index: 0, kind: input, shape index: {}]
  %s1 = inlined_call_operand.vmem [shape: f32[256,4], index: 1, kind: input, shape index: {}]
  %s2 = inlined_call_operand.vmem [shape: bf16[128,128], index: 2, kind: input, shape index: {}]
  %s3 = inlined_call_operand.vmem [shape: f32[1,128], index: 3, kind: input, shape index: {}]
  %s4 = inlined_call_operand.vmem [shape: bf16[128,128], index: 4, kind: input, shape index: {}]
  %s5 = inlined_call_operand.vmem [shape: f32[1,128], index: 5, kind: input, shape index: {}]
  %s6 = inlined_call_operand.vmem [shape: bf16[128,128], index: 6, kind: input, shape index: {}]
  %s7 = inlined_call_operand.vmem [shape: f32[1,128], index: 7, kind: input, shape index: {}]
  %s8 = inlined_call_operand.hbm [shape: bf16[256,128], index: 8, kind: output, shape index: {}]
  %s9 = sld [smem:[#allocation0]]
  $region42: #{tpu_custom_call.1} parent=0
    _
  %s11 = ssub.s32 1, %s9
  %s12 = scalar_select 0, %s11, %s9
  $region1: #{tpu_custom_call.1} parent=0
    #allocation2 [shape = 'u8[65536]{0}', space=vmem, size = 0x10000, scoped, tag = 'output window, operand 0, single buffered']
    #allocation3 [shape = 's32[1]{0}', space=sflag, size = 0x4, scoped, tag = 'scoped memory for tpu_custom_call.1']
    %13 = vsyncpa [#allocation3], 0
    // Predicated region
    $region2: #{tpu_custom_call.1} parent=1 // pred_check
      _
    $region3: #{tpu_custom_call.1} parent=1 // pred_check_branch
      %15 = sbr.rel (0) target = $region5
    $region4: #{tpu_custom_call.1} parent=1 // pred_region
      _
    $region5: #{tpu_custom_call.1} parent=1 // pred_fallthru
      _
    // Predicated region
    $region6: #{tpu_custom_call.1} parent=1 // pred_check
      _
    $region7: #{tpu_custom_call.1} parent=1 // pred_check_branch
      %17 = sbr.rel (0) target = $region9
    $region8: #{tpu_custom_call.1} parent=1 // pred_region
      _
    $region9: #{tpu_custom_call.1} parent=1 // pred_fallthru
      _
    // Predicated region
    $region10: #{tpu_custom_call.1} parent=1 // pred_check
      _
    $region11: #{tpu_custom_call.1} parent=1 // pred_check_branch
      %19 = sbr.rel (0) target = $region13
    $region12: #{tpu_custom_call.1} parent=1 // pred_region
      _
    $region13: #{tpu_custom_call.1} parent=1 // pred_fallthru
      _
    // Predicated region
    $region14: #{tpu_custom_call.1} parent=1 // pred_check
      _
    $region15: #{tpu_custom_call.1} parent=1 // pred_check_branch
      %21 = sbr.rel (0) target = $region17
    $region16: #{tpu_custom_call.1} parent=1 // pred_region
      _
    $region17: #{tpu_custom_call.1} parent=1 // pred_fallthru
      _
    // Predicated region
    $region18: #{tpu_custom_call.1} parent=1 // pred_check
      _
    $region19: #{tpu_custom_call.1} parent=1 // pred_check_branch
      %23 = sbr.rel (0) target = $region21
    $region20: #{tpu_custom_call.1} parent=1 // pred_region
      _
    $region21: #{tpu_custom_call.1} parent=1 // pred_fallthru
      _
    // Predicated region
    $region22: #{tpu_custom_call.1} parent=1 // pred_check
      _
    $region23: #{tpu_custom_call.1} parent=1 // pred_check_branch
      %25 = sbr.rel (0) target = $region25
    $region24: #{tpu_custom_call.1} parent=1 // pred_region
      _
    $region25: #{tpu_custom_call.1} parent=1 // pred_fallthru
      _
    // Predicated region
    $region26: #{tpu_custom_call.1} parent=1 // pred_check
      _
    $region27: #{tpu_custom_call.1} parent=1 // pred_check_branch
      %27 = sbr.rel (0) target = $region29
    $region28: #{tpu_custom_call.1} parent=1 // pred_region
      _
    $region29: #{tpu_custom_call.1} parent=1 // pred_fallthru
      _
    // Predicated region
    $region30: #{tpu_custom_call.1} parent=1 // pred_check
      _
    $region31: #{tpu_custom_call.1} parent=1 // pred_check_branch
      %29 = sbr.rel (0) target = $region33
    $region32: #{tpu_custom_call.1} parent=1 // pred_region
      _
    $region33: #{tpu_custom_call.1} parent=1 // pred_fallthru
      _
    %v33 = vlaneseq
    %v34 = vand.u32 %v33, 127
    %v35 = vld [vmem:[%s0] sm:$0xff]
    %v36 = vld [vmem:[%s0 + $0x8] sm:$0xff]
    %v37 = vld [vmem:[%s0 + $0x10] sm:$0xff]
    %v38 = vld [vmem:[%s0 + $0x18] sm:$0xff]
    %v39 = vld [vmem:[%s0 + $0x20] sm:$0xff]
    %v40 = vld [vmem:[%s0 + $0x28] sm:$0xff]
    %v41 = vld [vmem:[%s0 + $0x30] sm:$0xff]
    %v42 = vld [vmem:[%s0 + $0x38] sm:$0xff]
    %v43 = vld [vmem:[%s0 + $0x40] sm:$0xff]
    %v44 = vld [vmem:[%s0 + $0x48] sm:$0xff]
    %v45 = vld [vmem:[%s0 + $0x50] sm:$0xff]
    %v46 = vld [vmem:[%s0 + $0x58] sm:$0xff]
    %v47 = vld [vmem:[%s0 + $0x60] sm:$0xff]
    %v48 = vld [vmem:[%s0 + $0x68] sm:$0xff]
    %v49 = vld [vmem:[%s0 + $0x70] sm:$0xff]
    %v50 = vld [vmem:[%s0 + $0x78] sm:$0xff]
    %v51 = vld [vmem:[%s0 + $0x80] sm:$0xff]
    %v52 = vld [vmem:[%s0 + $0x88] sm:$0xff]
    %v53 = vld [vmem:[%s0 + $0x90] sm:$0xff]
    %v54 = vld [vmem:[%s0 + $0x98] sm:$0xff]
    %v55 = vld [vmem:[%s0 + $0xa0] sm:$0xff]
    %v56 = vld [vmem:[%s0 + $0xa8] sm:$0xff]
    %v57 = vld [vmem:[%s0 + $0xb0] sm:$0xff]
    %v58 = vld [vmem:[%s0 + $0xb8] sm:$0xff]
    %v59 = vld [vmem:[%s0 + $0xc0] sm:$0xff]
    %v60 = vld [vmem:[%s0 + $0xc8] sm:$0xff]
    %v61 = vld [vmem:[%s0 + $0xd0] sm:$0xff]
    %v62 = vld [vmem:[%s0 + $0xd8] sm:$0xff]
    %v63 = vld [vmem:[%s0 + $0xe0] sm:$0xff]
    %v64 = vld [vmem:[%s0 + $0xe8] sm:$0xff]
    %v65 = vld [vmem:[%s0 + $0xf0] sm:$0xff]
    %v66 = vld [vmem:[%s0 + $0xf8] sm:$0xff]
    %67 = vset.pattern.permute.xlu0 0
    %68 = vperm.xlu0 %67, %v35
    %v69 = vpop.permute.xlu0 %68
    %70 = vset.pattern.permute.xlu0 0
    %71 = vperm.xlu0 %70, %v36
    %v72 = vpop.permute.xlu0 %71
    %73 = vset.pattern.permute.xlu0 0
    %74 = vperm.xlu0 %73, %v37
    %v75 = vpop.permute.xlu0 %74
    %76 = vset.pattern.permute.xlu0 0
    %77 = vperm.xlu0 %76, %v38
    %v78 = vpop.permute.xlu0 %77
    %79 = vset.pattern.permute.xlu0 0
    %80 = vperm.xlu0 %79, %v39
    %v81 = vpop.permute.xlu0 %80
    %82 = vset.pattern.permute.xlu0 0
    %83 = vperm.xlu0 %82, %v40
    %v84 = vpop.permute.xlu0 %83
    %85 = vset.pattern.permute.xlu0 0
    %86 = vperm.xlu0 %85, %v41
    %v87 = vpop.permute.xlu0 %86
    %88 = vset.pattern.permute.xlu0 0
    %89 = vperm.xlu0 %88, %v42
    %v90 = vpop.permute.xlu0 %89
    %91 = vset.pattern.permute.xlu0 0
    %92 = vperm.xlu0 %91, %v43
    %v93 = vpop.permute.xlu0 %92
    %94 = vset.pattern.permute.xlu0 0
    %95 = vperm.xlu0 %94, %v44
    %v96 = vpop.permute.xlu0 %95
    %97 = vset.pattern.permute.xlu0 0
    %98 = vperm.xlu0 %97, %v45
    %v99 = vpop.permute.xlu0 %98
    %100 = vset.pattern.permute.xlu0 0
    %101 = vperm.xlu0 %100, %v46
    %v102 = vpop.permute.xlu0 %101
    %103 = vset.pattern.permute.xlu0 0
    %104 = vperm.xlu0 %103, %v47
    %v105 = vpop.permute.xlu0 %104
    %106 = vset.pattern.permute.xlu0 0
    %107 = vperm.xlu0 %106, %v48
    %v108 = vpop.permute.xlu0 %107
    %109 = vset.pattern.permute.xlu0 0
    %110 = vperm.xlu0 %109, %v49
    %v111 = vpop.permute.xlu0 %110
    %112 = vset.pattern.permute.xlu0 0
    %113 = vperm.xlu0 %112, %v50
    %v114 = vpop.permute.xlu0 %113
    %115 = vset.pattern.permute.xlu0 0
    %116 = vperm.xlu0 %115, %v51
    %v117 = vpop.permute.xlu0 %116
    %118 = vset.pattern.permute.xlu0 0
    %119 = vperm.xlu0 %118, %v52
    %v120 = vpop.permute.xlu0 %119
    %121 = vset.pattern.permute.xlu0 0
    %122 = vperm.xlu0 %121, %v53
    %v123 = vpop.permute.xlu0 %122
    %124 = vset.pattern.permute.xlu0 0
    %125 = vperm.xlu0 %124, %v54
    %v126 = vpop.permute.xlu0 %125
    %127 = vset.pattern.permute.xlu0 0
    %128 = vperm.xlu0 %127, %v55
    %v129 = vpop.permute.xlu0 %128
    %130 = vset.pattern.permute.xlu0 0
    %131 = vperm.xlu0 %130, %v56
    %v132 = vpop.permute.xlu0 %131
    %133 = vset.pattern.permute.xlu0 0
    %134 = vperm.xlu0 %133, %v57
    %v135 = vpop.permute.xlu0 %134
    %136 = vset.pattern.permute.xlu0 0
    %137 = vperm.xlu0 %136, %v58
    %v138 = vpop.permute.xlu0 %137
    %139 = vset.pattern.permute.xlu0 0
    %140 = vperm.xlu0 %139, %v59
    %v141 = vpop.permute.xlu0 %140
    %142 = vset.pattern.permute.xlu0 0
    %143 = vperm.xlu0 %142, %v60
    %v144 = vpop.permute.xlu0 %143
    %145 = vset.pattern.permute.xlu0 0
    %146 = vperm.xlu0 %145, %v61
    %v147 = vpop.permute.xlu0 %146
    %148 = vset.pattern.permute.xlu0 0
    %149 = vperm.xlu0 %148, %v62
    %v150 = vpop.permute.xlu0 %149
    %151 = vset.pattern.permute.xlu0 0
    %152 = vperm.xlu0 %151, %v63
    %v153 = vpop.permute.xlu0 %152
    %154 = vset.pattern.permute.xlu0 0
    %155 = vperm.xlu0 %154, %v64
    %v156 = vpop.permute.xlu0 %155
    %157 = vset.pattern.permute.xlu0 0
    %158 = vperm.xlu0 %157, %v65
    %v159 = vpop.permute.xlu0 %158
    %160 = vset.pattern.permute.xlu0 0
    %161 = vperm.xlu0 %160, %v66
    %v162 = vpop.permute.xlu0 %161
    %vm163 = vcmp.eq.s32.totalorder %v34, %v69
    %vm164 = vcmp.eq.s32.totalorder %v34, %v72
    %vm165 = vcmp.eq.s32.totalorder %v34, %v75
    %vm166 = vcmp.eq.s32.totalorder %v34, %v78
    %vm167 = vcmp.eq.s32.totalorder %v34, %v81
    %vm168 = vcmp.eq.s32.totalorder %v34, %v84
    %vm169 = vcmp.eq.s32.totalorder %v34, %v87
    %vm170 = vcmp.eq.s32.totalorder %v34, %v90
    %vm171 = vcmp.eq.s32.totalorder %v34, %v93
    %vm172 = vcmp.eq.s32.totalorder %v34, %v96
    %vm173 = vcmp.eq.s32.totalorder %v34, %v99
    %vm174 = vcmp.eq.s32.totalorder %v34, %v102
    %vm175 = vcmp.eq.s32.totalorder %v34, %v105
    %vm176 = vcmp.eq.s32.totalorder %v34, %v108
    %vm177 = vcmp.eq.s32.totalorder %v34, %v111
    %vm178 = vcmp.eq.s32.totalorder %v34, %v114
    %vm179 = vcmp.eq.s32.totalorder %v34, %v117
    %vm180 = vcmp.eq.s32.totalorder %v34, %v120
    %vm181 = vcmp.eq.s32.totalorder %v34, %v123
    %vm182 = vcmp.eq.s32.totalorder %v34, %v126
    %vm183 = vcmp.eq.s32.totalorder %v34, %v129
    %vm184 = vcmp.eq.s32.totalorder %v34, %v132
    %vm185 = vcmp.eq.s32.totalorder %v34, %v135
    %vm186 = vcmp.eq.s32.totalorder %v34, %v138
    %vm187 = vcmp.eq.s32.totalorder %v34, %v141
    %vm188 = vcmp.eq.s32.totalorder %v34, %v144
    %vm189 = vcmp.eq.s32.totalorder %v34, %v147
    %vm190 = vcmp.eq.s32.totalorder %v34, %v150
    %vm191 = vcmp.eq.s32.totalorder %v34, %v153
    %vm192 = vcmp.eq.s32.totalorder %v34, %v156
    %vm193 = vcmp.eq.s32.totalorder %v34, %v159
    %vm194 = vcmp.eq.s32.totalorder %v34, %v162
    %v195 = vsel %vm163, 1, 0
    %v196 = vsel %vm164, 1, 0
    %v197 = vsel %vm165, 1, 0
    %v198 = vsel %vm166, 1, 0
    %v199 = vsel %vm167, 1, 0
    %v200 = vsel %vm168, 1, 0
    %v201 = vsel %vm169, 1, 0
    %v202 = vsel %vm170, 1, 0
    %v203 = vsel %vm171, 1, 0
    %v204 = vsel %vm172, 1, 0
    %v205 = vsel %vm173, 1, 0
    %v206 = vsel %vm174, 1, 0
    %v207 = vsel %vm175, 1, 0
    %v208 = vsel %vm176, 1, 0
    %v209 = vsel %vm177, 1, 0
    %v210 = vsel %vm178, 1, 0
    %v211 = vsel %vm179, 1, 0
    %v212 = vsel %vm180, 1, 0
    %v213 = vsel %vm181, 1, 0
    %v214 = vsel %vm182, 1, 0
    %v215 = vsel %vm183, 1, 0
    %v216 = vsel %vm184, 1, 0
    %v217 = vsel %vm185, 1, 0
    %v218 = vsel %vm186, 1, 0
    %v219 = vsel %vm187, 1, 0
    %v220 = vsel %vm188, 1, 0
    %v221 = vsel %vm189, 1, 0
    %v222 = vsel %vm190, 1, 0
    %v223 = vsel %vm191, 1, 0
    %v224 = vsel %vm192, 1, 0
    %v225 = vsel %vm193, 1, 0
    %v226 = vsel %vm194, 1, 0
    %v227 = vcvt.s32.f32 %v195
    %v228 = vcvt.s32.f32 %v196
    %v229 = vcvt.s32.f32 %v197
    %v230 = vcvt.s32.f32 %v198
    %v231 = vcvt.s32.f32 %v199
    %v232 = vcvt.s32.f32 %v200
    %v233 = vcvt.s32.f32 %v201
    %v234 = vcvt.s32.f32 %v202
    %v235 = vcvt.s32.f32 %v203
    %v236 = vcvt.s32.f32 %v204
    %v237 = vcvt.s32.f32 %v205
    %v238 = vcvt.s32.f32 %v206
    %v239 = vcvt.s32.f32 %v207
    %v240 = vcvt.s32.f32 %v208
    %v241 = vcvt.s32.f32 %v209
    %v242 = vcvt.s32.f32 %v210
    %v243 = vcvt.s32.f32 %v211
    %v244 = vcvt.s32.f32 %v212
    %v245 = vcvt.s32.f32 %v213
    %v246 = vcvt.s32.f32 %v214
    %v247 = vcvt.s32.f32 %v215
    %v248 = vcvt.s32.f32 %v216
    %v249 = vcvt.s32.f32 %v217
    %v250 = vcvt.s32.f32 %v218
    %v251 = vcvt.s32.f32 %v219
    %v252 = vcvt.s32.f32 %v220
    %v253 = vcvt.s32.f32 %v221
    %v254 = vcvt.s32.f32 %v222
    %v255 = vcvt.s32.f32 %v223
    %v256 = vcvt.s32.f32 %v224
    %v257 = vcvt.s32.f32 %v225
    %v258 = vcvt.s32.f32 %v226
    %v259 = vpack.c.bf16 %v228, %v227
    %v260 = vpack.c.bf16 %v230, %v229
    %v261 = vpack.c.bf16 %v232, %v231
    %v262 = vpack.c.bf16 %v234, %v233
    %v263 = vpack.c.bf16 %v236, %v235
    %v264 = vpack.c.bf16 %v238, %v237
    %v265 = vpack.c.bf16 %v240, %v239
    %v266 = vpack.c.bf16 %v242, %v241
    %v267 = vpack.c.bf16 %v244, %v243
    %v268 = vpack.c.bf16 %v246, %v245
    %v269 = vpack.c.bf16 %v248, %v247
    %v270 = vpack.c.bf16 %v250, %v249
    %v271 = vpack.c.bf16 %v252, %v251
    %v272 = vpack.c.bf16 %v254, %v253
    %v273 = vpack.c.bf16 %v256, %v255
    %v274 = vpack.c.bf16 %v258, %v257
    %v275 = vadd.bf16 %v259, 0
    %v276 = vadd.bf16 %v260, 0
    %v277 = vadd.bf16 %v261, 0
    %v278 = vadd.bf16 %v262, 0
    %v279 = vadd.bf16 %v263, 0
    %v280 = vadd.bf16 %v264, 0
    %v281 = vadd.bf16 %v265, 0
    %v282 = vadd.bf16 %v266, 0
    %v283 = vadd.bf16 %v267, 0
    %v284 = vadd.bf16 %v268, 0
    %v285 = vadd.bf16 %v269, 0
    %v286 = vadd.bf16 %v270, 0
    %v287 = vadd.bf16 %v271, 0
    %v288 = vadd.bf16 %v272, 0
    %v289 = vadd.bf16 %v273, 0
    %v290 = vadd.bf16 %v274, 0
    %v291 = vadd.s32 %v35, 10
    %v292 = vadd.s32 %v36, 10
    %v293 = vadd.s32 %v37, 10
    %v294 = vadd.s32 %v38, 10
    %v295 = vadd.s32 %v39, 10
    %v296 = vadd.s32 %v40, 10
    %v297 = vadd.s32 %v41, 10
    %v298 = vadd.s32 %v42, 10
    %v299 = vadd.s32 %v43, 10
    %v300 = vadd.s32 %v44, 10
    %v301 = vadd.s32 %v45, 10
    %v302 = vadd.s32 %v46, 10
    %v303 = vadd.s32 %v47, 10
    %v304 = vadd.s32 %v48, 10
    %v305 = vadd.s32 %v49, 10
    %v306 = vadd.s32 %v50, 10
    %v307 = vadd.s32 %v51, 10
    %v308 = vadd.s32 %v52, 10
    %v309 = vadd.s32 %v53, 10
    %v310 = vadd.s32 %v54, 10
    %v311 = vadd.s32 %v55, 10
    %v312 = vadd.s32 %v56, 10
    %v313 = vadd.s32 %v57, 10
    %v314 = vadd.s32 %v58, 10
    %v315 = vadd.s32 %v59, 10
    %v316 = vadd.s32 %v60, 10
    %v317 = vadd.s32 %v61, 10
    %v318 = vadd.s32 %v62, 10
    %v319 = vadd.s32 %v63, 10
    %v320 = vadd.s32 %v64, 10
    %v321 = vadd.s32 %v65, 10
    %v322 = vadd.s32 %v66, 10
    %323 = vset.pattern.permute.xlu0 1
    %324 = vperm.xlu0 %323, %v291
    %v325 = vpop.permute.xlu0 %324
    %326 = vset.pattern.permute.xlu0 1
    %327 = vperm.xlu0 %326, %v292
    %v328 = vpop.permute.xlu0 %327
    %329 = vset.pattern.permute.xlu0 1
    %330 = vperm.xlu0 %329, %v293
    %v331 = vpop.permute.xlu0 %330
    %332 = vset.pattern.permute.xlu0 1
    %333 = vperm.xlu0 %332, %v294
    %v334 = vpop.permute.xlu0 %333
    %335 = vset.pattern.permute.xlu0 1
    %336 = vperm.xlu0 %335, %v295
    %v337 = vpop.permute.xlu0 %336
    %338 = vset.pattern.permute.xlu0 1
    %339 = vperm.xlu0 %338, %v296
    %v340 = vpop.permute.xlu0 %339
    %341 = vset.pattern.permute.xlu0 1
    %342 = vperm.xlu0 %341, %v297
    %v343 = vpop.permute.xlu0 %342
    %344 = vset.pattern.permute.xlu0 1
    %345 = vperm.xlu0 %344, %v298
    %v346 = vpop.permute.xlu0 %345
    %347 = vset.pattern.permute.xlu0 1
    %348 = vperm.xlu0 %347, %v299
    %v349 = vpop.permute.xlu0 %348
    %350 = vset.pattern.permute.xlu0 1
    %351 = vperm.xlu0 %350, %v300
    %v352 = vpop.permute.xlu0 %351
    %353 = vset.pattern.permute.xlu0 1
    %354 = vperm.xlu0 %353, %v301
    %v355 = vpop.permute.xlu0 %354
    %356 = vset.pattern.permute.xlu0 1
    %357 = vperm.xlu0 %356, %v302
    %v358 = vpop.permute.xlu0 %357
    %359 = vset.pattern.permute.xlu0 1
    %360 = vperm.xlu0 %359, %v303
    %v361 = vpop.permute.xlu0 %360
    %362 = vset.pattern.permute.xlu0 1
    %363 = vperm.xlu0 %362, %v304
    %v364 = vpop.permute.xlu0 %363
    %365 = vset.pattern.permute.xlu0 1
    %366 = vperm.xlu0 %365, %v305
    %v367 = vpop.permute.xlu0 %366
    %368 = vset.pattern.permute.xlu0 1
    %369 = vperm.xlu0 %368, %v306
    %v370 = vpop.permute.xlu0 %369
    %371 = vset.pattern.permute.xlu0 1
    %372 = vperm.xlu0 %371, %v307
    %v373 = vpop.permute.xlu0 %372
    %374 = vset.pattern.permute.xlu0 1
    %375 = vperm.xlu0 %374, %v308
    %v376 = vpop.permute.xlu0 %375
    %377 = vset.pattern.permute.xlu0 1
    %378 = vperm.xlu0 %377, %v309
    %v379 = vpop.permute.xlu0 %378
    %380 = vset.pattern.permute.xlu0 1
    %381 = vperm.xlu0 %380, %v310
    %v382 = vpop.permute.xlu0 %381
    %383 = vset.pattern.permute.xlu0 1
    %384 = vperm.xlu0 %383, %v311
    %v385 = vpop.permute.xlu0 %384
    %386 = vset.pattern.permute.xlu0 1
    %387 = vperm.xlu0 %386, %v312
    %v388 = vpop.permute.xlu0 %387
    %389 = vset.pattern.permute.xlu0 1
    %390 = vperm.xlu0 %389, %v313
    %v391 = vpop.permute.xlu0 %390
    %392 = vset.pattern.permute.xlu0 1
    %393 = vperm.xlu0 %392, %v314
    %v394 = vpop.permute.xlu0 %393
    %395 = vset.pattern.permute.xlu0 1
    %396 = vperm.xlu0 %395, %v315
    %v397 = vpop.permute.xlu0 %396
    %398 = vset.pattern.permute.xlu0 1
    %399 = vperm.xlu0 %398, %v316
    %v400 = vpop.permute.xlu0 %399
    %401 = vset.pattern.permute.xlu0 1
    %402 = vperm.xlu0 %401, %v317
    %v403 = vpop.permute.xlu0 %402
    %404 = vset.pattern.permute.xlu0 1
    %405 = vperm.xlu0 %404, %v318
    %v406 = vpop.permute.xlu0 %405
    %407 = vset.pattern.permute.xlu0 1
    %408 = vperm.xlu0 %407, %v319
    %v409 = vpop.permute.xlu0 %408
    %410 = vset.pattern.permute.xlu0 1
    %411 = vperm.xlu0 %410, %v320
    %v412 = vpop.permute.xlu0 %411
    %413 = vset.pattern.permute.xlu0 1
    %414 = vperm.xlu0 %413, %v321
    %v415 = vpop.permute.xlu0 %414
    %416 = vset.pattern.permute.xlu0 1
    %417 = vperm.xlu0 %416, %v322
    %v418 = vpop.permute.xlu0 %417
    %vm419 = vcmp.eq.s32.totalorder %v34, %v325
    %vm420 = vcmp.eq.s32.totalorder %v34, %v328
    %vm421 = vcmp.eq.s32.totalorder %v34, %v331
    %vm422 = vcmp.eq.s32.totalorder %v34, %v334
    %vm423 = vcmp.eq.s32.totalorder %v34, %v337
    %vm424 = vcmp.eq.s32.totalorder %v34, %v340
    %vm425 = vcmp.eq.s32.totalorder %v34, %v343
    %vm426 = vcmp.eq.s32.totalorder %v34, %v346
    %vm427 = vcmp.eq.s32.totalorder %v34, %v349
    %vm428 = vcmp.eq.s32.totalorder %v34, %v352
    %vm429 = vcmp.eq.s32.totalorder %v34, %v355
    %vm430 = vcmp.eq.s32.totalorder %v34, %v358
    %vm431 = vcmp.eq.s32.totalorder %v34, %v361
    %vm432 = vcmp.eq.s32.totalorder %v34, %v364
    %vm433 = vcmp.eq.s32.totalorder %v34, %v367
    %vm434 = vcmp.eq.s32.totalorder %v34, %v370
    %vm435 = vcmp.eq.s32.totalorder %v34, %v373
    %vm436 = vcmp.eq.s32.totalorder %v34, %v376
    %vm437 = vcmp.eq.s32.totalorder %v34, %v379
    %vm438 = vcmp.eq.s32.totalorder %v34, %v382
    %vm439 = vcmp.eq.s32.totalorder %v34, %v385
    %vm440 = vcmp.eq.s32.totalorder %v34, %v388
    %vm441 = vcmp.eq.s32.totalorder %v34, %v391
    %vm442 = vcmp.eq.s32.totalorder %v34, %v394
    %vm443 = vcmp.eq.s32.totalorder %v34, %v397
    %vm444 = vcmp.eq.s32.totalorder %v34, %v400
    %vm445 = vcmp.eq.s32.totalorder %v34, %v403
    %vm446 = vcmp.eq.s32.totalorder %v34, %v406
    %vm447 = vcmp.eq.s32.totalorder %v34, %v409
    %vm448 = vcmp.eq.s32.totalorder %v34, %v412
    %vm449 = vcmp.eq.s32.totalorder %v34, %v415
    %vm450 = vcmp.eq.s32.totalorder %v34, %v418
    %v451 = vsel %vm419, 1, 0
    %v452 = vsel %vm420, 1, 0
    %v453 = vsel %vm421, 1, 0
    %v454 = vsel %vm422, 1, 0
    %v455 = vsel %vm423, 1, 0
    %v456 = vsel %vm424, 1, 0
    %v457 = vsel %vm425, 1, 0
    %v458 = vsel %vm426, 1, 0
    %v459 = vsel %vm427, 1, 0
    %v460 = vsel %vm428, 1, 0
    %v461 = vsel %vm429, 1, 0
    %v462 = vsel %vm430, 1, 0
    %v463 = vsel %vm431, 1, 0
    %v464 = vsel %vm432, 1, 0
    %v465 = vsel %vm433, 1, 0
    %v466 = vsel %vm434, 1, 0
    %v467 = vsel %vm435, 1, 0
    %v468 = vsel %vm436, 1, 0
    %v469 = vsel %vm437, 1, 0
    %v470 = vsel %vm438, 1, 0
    %v471 = vsel %vm439, 1, 0
    %v472 = vsel %vm440, 1, 0
    %v473 = vsel %vm441, 1, 0
    %v474 = vsel %vm442, 1, 0
    %v475 = vsel %vm443, 1, 0
    %v476 = vsel %vm444, 1, 0
    %v477 = vsel %vm445, 1, 0
    %v478 = vsel %vm446, 1, 0
    %v479 = vsel %vm447, 1, 0
    %v480 = vsel %vm448, 1, 0
    %v481 = vsel %vm449, 1, 0
    %v482 = vsel %vm450, 1, 0
    %v483 = vcvt.s32.f32 %v451
    %v484 = vcvt.s32.f32 %v452
    %v485 = vcvt.s32.f32 %v453
    %v486 = vcvt.s32.f32 %v454
    %v487 = vcvt.s32.f32 %v455
    %v488 = vcvt.s32.f32 %v456
    %v489 = vcvt.s32.f32 %v457
    %v490 = vcvt.s32.f32 %v458
    %v491 = vcvt.s32.f32 %v459
    %v492 = vcvt.s32.f32 %v460
    %v493 = vcvt.s32.f32 %v461
    %v494 = vcvt.s32.f32 %v462
    %v495 = vcvt.s32.f32 %v463
    %v496 = vcvt.s32.f32 %v464
    %v497 = vcvt.s32.f32 %v465
    %v498 = vcvt.s32.f32 %v466
    %v499 = vcvt.s32.f32 %v467
    %v500 = vcvt.s32.f32 %v468
    %v501 = vcvt.s32.f32 %v469
    %v502 = vcvt.s32.f32 %v470
    %v503 = vcvt.s32.f32 %v471
    %v504 = vcvt.s32.f32 %v472
    %v505 = vcvt.s32.f32 %v473
    %v506 = vcvt.s32.f32 %v474
    %v507 = vcvt.s32.f32 %v475
    %v508 = vcvt.s32.f32 %v476
    %v509 = vcvt.s32.f32 %v477
    %v510 = vcvt.s32.f32 %v478
    %v511 = vcvt.s32.f32 %v479
    %v512 = vcvt.s32.f32 %v480
    %v513 = vcvt.s32.f32 %v481
    %v514 = vcvt.s32.f32 %v482
    %v515 = vpack.c.bf16 %v484, %v483
    %v516 = vpack.c.bf16 %v486, %v485
    %v517 = vpack.c.bf16 %v488, %v487
    %v518 = vpack.c.bf16 %v490, %v489
    %v519 = vpack.c.bf16 %v492, %v491
    %v520 = vpack.c.bf16 %v494, %v493
    %v521 = vpack.c.bf16 %v496, %v495
    %v522 = vpack.c.bf16 %v498, %v497
    %v523 = vpack.c.bf16 %v500, %v499
    %v524 = vpack.c.bf16 %v502, %v501
    %v525 = vpack.c.bf16 %v504, %v503
    %v526 = vpack.c.bf16 %v506, %v505
    %v527 = vpack.c.bf16 %v508, %v507
    %v528 = vpack.c.bf16 %v510, %v509
    %v529 = vpack.c.bf16 %v512, %v511
    %v530 = vpack.c.bf16 %v514, %v513
    %v531 = vadd.bf16 %v275, %v515
    %v532 = vadd.bf16 %v276, %v516
    %v533 = vadd.bf16 %v277, %v517
    %v534 = vadd.bf16 %v278, %v518
    %v535 = vadd.bf16 %v279, %v519
    %v536 = vadd.bf16 %v280, %v520
    %v537 = vadd.bf16 %v281, %v521
    %v538 = vadd.bf16 %v282, %v522
    %v539 = vadd.bf16 %v283, %v523
    %v540 = vadd.bf16 %v284, %v524
    %v541 = vadd.bf16 %v285, %v525
    %v542 = vadd.bf16 %v286, %v526
    %v543 = vadd.bf16 %v287, %v527
    %v544 = vadd.bf16 %v288, %v528
    %v545 = vadd.bf16 %v289, %v529
    %v546 = vadd.bf16 %v290, %v530
    %v547 = vadd.s32 %v35, 18
    %v548 = vadd.s32 %v36, 18
    %v549 = vadd.s32 %v37, 18
    %v550 = vadd.s32 %v38, 18
    %v551 = vadd.s32 %v39, 18
    %v552 = vadd.s32 %v40, 18
    %v553 = vadd.s32 %v41, 18
    %v554 = vadd.s32 %v42, 18
    %v555 = vadd.s32 %v43, 18
    %v556 = vadd.s32 %v44, 18
    %v557 = vadd.s32 %v45, 18
    %v558 = vadd.s32 %v46, 18
    %v559 = vadd.s32 %v47, 18
    %v560 = vadd.s32 %v48, 18
    %v561 = vadd.s32 %v49, 18
    %v562 = vadd.s32 %v50, 18
    %v563 = vadd.s32 %v51, 18
    %v564 = vadd.s32 %v52, 18
    %v565 = vadd.s32 %v53, 18
    %v566 = vadd.s32 %v54, 18
    %v567 = vadd.s32 %v55, 18
    %v568 = vadd.s32 %v56, 18
    %v569 = vadd.s32 %v57, 18
    %v570 = vadd.s32 %v58, 18
    %v571 = vadd.s32 %v59, 18
    %v572 = vadd.s32 %v60, 18
    %v573 = vadd.s32 %v61, 18
    %v574 = vadd.s32 %v62, 18
    %v575 = vadd.s32 %v63, 18
    %v576 = vadd.s32 %v64, 18
    %v577 = vadd.s32 %v65, 18
    %v578 = vadd.s32 %v66, 18
    %579 = vset.pattern.permute.xlu0 2
    %580 = vperm.xlu0 %579, %v547
    %v581 = vpop.permute.xlu0 %580
    %582 = vset.pattern.permute.xlu0 2
    %583 = vperm.xlu0 %582, %v548
    %v584 = vpop.permute.xlu0 %583
    %585 = vset.pattern.permute.xlu0 2
    %586 = vperm.xlu0 %585, %v549
    %v587 = vpop.permute.xlu0 %586
    %588 = vset.pattern.permute.xlu0 2
    %589 = vperm.xlu0 %588, %v550
    %v590 = vpop.permute.xlu0 %589
    %591 = vset.pattern.permute.xlu0 2
    %592 = vperm.xlu0 %591, %v551
    %v593 = vpop.permute.xlu0 %592
    %594 = vset.pattern.permute.xlu0 2
    %595 = vperm.xlu0 %594, %v552
    %v596 = vpop.permute.xlu0 %595
    %597 = vset.pattern.permute.xlu0 2
    %598 = vperm.xlu0 %597, %v553
    %v599 = vpop.permute.xlu0 %598
    %600 = vset.pattern.permute.xlu0 2
    %601 = vperm.xlu0 %600, %v554
    %v602 = vpop.permute.xlu0 %601
    %603 = vset.pattern.permute.xlu0 2
    %604 = vperm.xlu0 %603, %v555
    %v605 = vpop.permute.xlu0 %604
    %606 = vset.pattern.permute.xlu0 2
    %607 = vperm.xlu0 %606, %v556
    %v608 = vpop.permute.xlu0 %607
    %609 = vset.pattern.permute.xlu0 2
    %610 = vperm.xlu0 %609, %v557
    %v611 = vpop.permute.xlu0 %610
    %612 = vset.pattern.permute.xlu0 2
    %613 = vperm.xlu0 %612, %v558
    %v614 = vpop.permute.xlu0 %613
    %615 = vset.pattern.permute.xlu0 2
    %616 = vperm.xlu0 %615, %v559
    %v617 = vpop.permute.xlu0 %616
    %618 = vset.pattern.permute.xlu0 2
    %619 = vperm.xlu0 %618, %v560
    %v620 = vpop.permute.xlu0 %619
    %621 = vset.pattern.permute.xlu0 2
    %622 = vperm.xlu0 %621, %v561
    %v623 = vpop.permute.xlu0 %622
    %624 = vset.pattern.permute.xlu0 2
    %625 = vperm.xlu0 %624, %v562
    %v626 = vpop.permute.xlu0 %625
    %627 = vset.pattern.permute.xlu0 2
    %628 = vperm.xlu0 %627, %v563
    %v629 = vpop.permute.xlu0 %628
    %630 = vset.pattern.permute.xlu0 2
    %631 = vperm.xlu0 %630, %v564
    %v632 = vpop.permute.xlu0 %631
    %633 = vset.pattern.permute.xlu0 2
    %634 = vperm.xlu0 %633, %v565
    %v635 = vpop.permute.xlu0 %634
    %636 = vset.pattern.permute.xlu0 2
    %637 = vperm.xlu0 %636, %v566
    %v638 = vpop.permute.xlu0 %637
    %639 = vset.pattern.permute.xlu0 2
    %640 = vperm.xlu0 %639, %v567
    %v641 = vpop.permute.xlu0 %640
    %642 = vset.pattern.permute.xlu0 2
    %643 = vperm.xlu0 %642, %v568
    %v644 = vpop.permute.xlu0 %643
    %645 = vset.pattern.permute.xlu0 2
    %646 = vperm.xlu0 %645, %v569
    %v647 = vpop.permute.xlu0 %646
    %648 = vset.pattern.permute.xlu0 2
    %649 = vperm.xlu0 %648, %v570
    %v650 = vpop.permute.xlu0 %649
    %651 = vset.pattern.permute.xlu0 2
    %652 = vperm.xlu0 %651, %v571
    %v653 = vpop.permute.xlu0 %652
    %654 = vset.pattern.permute.xlu0 2
    %655 = vperm.xlu0 %654, %v572
    %v656 = vpop.permute.xlu0 %655
    %657 = vset.pattern.permute.xlu0 2
    %658 = vperm.xlu0 %657, %v573
    %v659 = vpop.permute.xlu0 %658
    %660 = vset.pattern.permute.xlu0 2
    %661 = vperm.xlu0 %660, %v574
    %v662 = vpop.permute.xlu0 %661
    %663 = vset.pattern.permute.xlu0 2
    %664 = vperm.xlu0 %663, %v575
    %v665 = vpop.permute.xlu0 %664
    %666 = vset.pattern.permute.xlu0 2
    %667 = vperm.xlu0 %666, %v576
    %v668 = vpop.permute.xlu0 %667
    %669 = vset.pattern.permute.xlu0 2
    %670 = vperm.xlu0 %669, %v577
    %v671 = vpop.permute.xlu0 %670
    %672 = vset.pattern.permute.xlu0 2
    %673 = vperm.xlu0 %672, %v578
    %v674 = vpop.permute.xlu0 %673
    %vm675 = vcmp.eq.s32.totalorder %v34, %v581
    %vm676 = vcmp.eq.s32.totalorder %v34, %v584
    %vm677 = vcmp.eq.s32.totalorder %v34, %v587
    %vm678 = vcmp.eq.s32.totalorder %v34, %v590
    %vm679 = vcmp.eq.s32.totalorder %v34, %v593
    %vm680 = vcmp.eq.s32.totalorder %v34, %v596
    %vm681 = vcmp.eq.s32.totalorder %v34, %v599
    %vm682 = vcmp.eq.s32.totalorder %v34, %v602
    %vm683 = vcmp.eq.s32.totalorder %v34, %v605
    %vm684 = vcmp.eq.s32.totalorder %v34, %v608
    %vm685 = vcmp.eq.s32.totalorder %v34, %v611
    %vm686 = vcmp.eq.s32.totalorder %v34, %v614
    %vm687 = vcmp.eq.s32.totalorder %v34, %v617
    %vm688 = vcmp.eq.s32.totalorder %v34, %v620
    %vm689 = vcmp.eq.s32.totalorder %v34, %v623
    %vm690 = vcmp.eq.s32.totalorder %v34, %v626
    %vm691 = vcmp.eq.s32.totalorder %v34, %v629
    %vm692 = vcmp.eq.s32.totalorder %v34, %v632
    %vm693 = vcmp.eq.s32.totalorder %v34, %v635
    %vm694 = vcmp.eq.s32.totalorder %v34, %v638
    %vm695 = vcmp.eq.s32.totalorder %v34, %v641
    %vm696 = vcmp.eq.s32.totalorder %v34, %v644
    %vm697 = vcmp.eq.s32.totalorder %v34, %v647
    %vm698 = vcmp.eq.s32.totalorder %v34, %v650
    %vm699 = vcmp.eq.s32.totalorder %v34, %v653
    %vm700 = vcmp.eq.s32.totalorder %v34, %v656
    %vm701 = vcmp.eq.s32.totalorder %v34, %v659
    %vm702 = vcmp.eq.s32.totalorder %v34, %v662
    %vm703 = vcmp.eq.s32.totalorder %v34, %v665
    %vm704 = vcmp.eq.s32.totalorder %v34, %v668
    %vm705 = vcmp.eq.s32.totalorder %v34, %v671
    %vm706 = vcmp.eq.s32.totalorder %v34, %v674
    %v707 = vsel %vm675, 1, 0
    %v708 = vsel %vm676, 1, 0
    %v709 = vsel %vm677, 1, 0
    %v710 = vsel %vm678, 1, 0
    %v711 = vsel %vm679, 1, 0
    %v712 = vsel %vm680, 1, 0
    %v713 = vsel %vm681, 1, 0
    %v714 = vsel %vm682, 1, 0
    %v715 = vsel %vm683, 1, 0
    %v716 = vsel %vm684, 1, 0
    %v717 = vsel %vm685, 1, 0
    %v718 = vsel %vm686, 1, 0
    %v719 = vsel %vm687, 1, 0
    %v720 = vsel %vm688, 1, 0
    %v721 = vsel %vm689, 1, 0
    %v722 = vsel %vm690, 1, 0
    %v723 = vsel %vm691, 1, 0
    %v724 = vsel %vm692, 1, 0
    %v725 = vsel %vm693, 1, 0
    %v726 = vsel %vm694, 1, 0
    %v727 = vsel %vm695, 1, 0
    %v728 = vsel %vm696, 1, 0
    %v729 = vsel %vm697, 1, 0
    %v730 = vsel %vm698, 1, 0
    %v731 = vsel %vm699, 1, 0
    %v732 = vsel %vm700, 1, 0
    %v733 = vsel %vm701, 1, 0
    %v734 = vsel %vm702, 1, 0
    %v735 = vsel %vm703, 1, 0
    %v736 = vsel %vm704, 1, 0
    %v737 = vsel %vm705, 1, 0
    %v738 = vsel %vm706, 1, 0
    %v739 = vcvt.s32.f32 %v707
    %v740 = vcvt.s32.f32 %v708
    %v741 = vcvt.s32.f32 %v709
    %v742 = vcvt.s32.f32 %v710
    %v743 = vcvt.s32.f32 %v711
    %v744 = vcvt.s32.f32 %v712
    %v745 = vcvt.s32.f32 %v713
    %v746 = vcvt.s32.f32 %v714
    %v747 = vcvt.s32.f32 %v715
    %v748 = vcvt.s32.f32 %v716
    %v749 = vcvt.s32.f32 %v717
    %v750 = vcvt.s32.f32 %v718
    %v751 = vcvt.s32.f32 %v719
    %v752 = vcvt.s32.f32 %v720
    %v753 = vcvt.s32.f32 %v721
    %v754 = vcvt.s32.f32 %v722
    %v755 = vcvt.s32.f32 %v723
    %v756 = vcvt.s32.f32 %v724
    %v757 = vcvt.s32.f32 %v725
    %v758 = vcvt.s32.f32 %v726
    %v759 = vcvt.s32.f32 %v727
    %v760 = vcvt.s32.f32 %v728
    %v761 = vcvt.s32.f32 %v729
    %v762 = vcvt.s32.f32 %v730
    %v763 = vcvt.s32.f32 %v731
    %v764 = vcvt.s32.f32 %v732
    %v765 = vcvt.s32.f32 %v733
    %v766 = vcvt.s32.f32 %v734
    %v767 = vcvt.s32.f32 %v735
    %v768 = vcvt.s32.f32 %v736
    %v769 = vcvt.s32.f32 %v737
    %v770 = vcvt.s32.f32 %v738
    %v771 = vpack.c.bf16 %v740, %v739
    %v772 = vpack.c.bf16 %v742, %v741
    %v773 = vpack.c.bf16 %v744, %v743
    %v774 = vpack.c.bf16 %v746, %v745
    %v775 = vpack.c.bf16 %v748, %v747
    %v776 = vpack.c.bf16 %v750, %v749
    %v777 = vpack.c.bf16 %v752, %v751
    %v778 = vpack.c.bf16 %v754, %v753
    %v779 = vpack.c.bf16 %v756, %v755
    %v780 = vpack.c.bf16 %v758, %v757
    %v781 = vpack.c.bf16 %v760, %v759
    %v782 = vpack.c.bf16 %v762, %v761
    %v783 = vpack.c.bf16 %v764, %v763
    %v784 = vpack.c.bf16 %v766, %v765
    %v785 = vpack.c.bf16 %v768, %v767
    %v786 = vpack.c.bf16 %v770, %v769
    %v787 = vadd.bf16 %v531, %v771
    %v788 = vadd.bf16 %v532, %v772
    %v789 = vadd.bf16 %v533, %v773
    %v790 = vadd.bf16 %v534, %v774
    %v791 = vadd.bf16 %v535, %v775
    %v792 = vadd.bf16 %v536, %v776
    %v793 = vadd.bf16 %v537, %v777
    %v794 = vadd.bf16 %v538, %v778
    %v795 = vadd.bf16 %v539, %v779
    %v796 = vadd.bf16 %v540, %v780
    %v797 = vadd.bf16 %v541, %v781
    %v798 = vadd.bf16 %v542, %v782
    %v799 = vadd.bf16 %v543, %v783
    %v800 = vadd.bf16 %v544, %v784
    %v801 = vadd.bf16 %v545, %v785
    %v802 = vadd.bf16 %v546, %v786
    %v803 = vld [vmem:[%s1] sm:$0xff]
    %v804 = vld [vmem:[%s1 + $0x8] sm:$0xff]
    %v805 = vld [vmem:[%s1 + $0x10] sm:$0xff]
    %v806 = vld [vmem:[%s1 + $0x18] sm:$0xff]
    %v807 = vld [vmem:[%s1 + $0x20] sm:$0xff]
    %v808 = vld [vmem:[%s1 + $0x28] sm:$0xff]
    %v809 = vld [vmem:[%s1 + $0x30] sm:$0xff]
    %v810 = vld [vmem:[%s1 + $0x38] sm:$0xff]
    %v811 = vld [vmem:[%s1 + $0x40] sm:$0xff]
    %v812 = vld [vmem:[%s1 + $0x48] sm:$0xff]
    %v813 = vld [vmem:[%s1 + $0x50] sm:$0xff]
    %v814 = vld [vmem:[%s1 + $0x58] sm:$0xff]
    %v815 = vld [vmem:[%s1 + $0x60] sm:$0xff]
    %v816 = vld [vmem:[%s1 + $0x68] sm:$0xff]
    %v817 = vld [vmem:[%s1 + $0x70] sm:$0xff]
    %v818 = vld [vmem:[%s1 + $0x78] sm:$0xff]
    %v819 = vld [vmem:[%s1 + $0x80] sm:$0xff]
    %v820 = vld [vmem:[%s1 + $0x88] sm:$0xff]
    %v821 = vld [vmem:[%s1 + $0x90] sm:$0xff]
    %v822 = vld [vmem:[%s1 + $0x98] sm:$0xff]
    %v823 = vld [vmem:[%s1 + $0xa0] sm:$0xff]
    %v824 = vld [vmem:[%s1 + $0xa8] sm:$0xff]
    %v825 = vld [vmem:[%s1 + $0xb0] sm:$0xff]
    %v826 = vld [vmem:[%s1 + $0xb8] sm:$0xff]
    %v827 = vld [vmem:[%s1 + $0xc0] sm:$0xff]
    %v828 = vld [vmem:[%s1 + $0xc8] sm:$0xff]
    %v829 = vld [vmem:[%s1 + $0xd0] sm:$0xff]
    %v830 = vld [vmem:[%s1 + $0xd8] sm:$0xff]
    %v831 = vld [vmem:[%s1 + $0xe0] sm:$0xff]
    %v832 = vld [vmem:[%s1 + $0xe8] sm:$0xff]
    %v833 = vld [vmem:[%s1 + $0xf0] sm:$0xff]
    %v834 = vld [vmem:[%s1 + $0xf8] sm:$0xff]
    %v835 = vpack.c.bf16 %v804, %v803
    %v836 = vpack.c.bf16 %v806, %v805
    %v837 = vpack.c.bf16 %v808, %v807
    %v838 = vpack.c.bf16 %v810, %v809
    %v839 = vpack.c.bf16 %v812, %v811
    %v840 = vpack.c.bf16 %v814, %v813
    %v841 = vpack.c.bf16 %v816, %v815
    %v842 = vpack.c.bf16 %v818, %v817
    %v843 = vpack.c.bf16 %v820, %v819
    %v844 = vpack.c.bf16 %v822, %v821
    %v845 = vpack.c.bf16 %v824, %v823
    %v846 = vpack.c.bf16 %v826, %v825
    %v847 = vpack.c.bf16 %v828, %v827
    %v848 = vpack.c.bf16 %v830, %v829
    %v849 = vpack.c.bf16 %v832, %v831
    %v850 = vpack.c.bf16 %v834, %v833
    %vm851 = vcmp.eq.s32.totalorder %v34, 24
    %853 = vset.pattern.permute.xlu0 0
    %854 = vperm.xlu0 %853, %v835
    %v855 = vpop.permute.xlu0 %854
    %858 = vset.pattern.permute.xlu0 0
    %859 = vperm.xlu0 %858, %v836
    %v860 = vpop.permute.xlu0 %859
    %863 = vset.pattern.permute.xlu0 0
    %864 = vperm.xlu0 %863, %v837
    %v865 = vpop.permute.xlu0 %864
    %868 = vset.pattern.permute.xlu0 0
    %869 = vperm.xlu0 %868, %v838
    %v870 = vpop.permute.xlu0 %869
    %873 = vset.pattern.permute.xlu0 0
    %874 = vperm.xlu0 %873, %v839
    %v875 = vpop.permute.xlu0 %874
    %878 = vset.pattern.permute.xlu0 0
    %879 = vperm.xlu0 %878, %v840
    %v880 = vpop.permute.xlu0 %879
    %883 = vset.pattern.permute.xlu0 0
    %884 = vperm.xlu0 %883, %v841
    %v885 = vpop.permute.xlu0 %884
    %888 = vset.pattern.permute.xlu0 0
    %889 = vperm.xlu0 %888, %v842
    %v890 = vpop.permute.xlu0 %889
    %893 = vset.pattern.permute.xlu0 0
    %894 = vperm.xlu0 %893, %v843
    %v895 = vpop.permute.xlu0 %894
    %898 = vset.pattern.permute.xlu0 0
    %899 = vperm.xlu0 %898, %v844
    %v900 = vpop.permute.xlu0 %899
    %903 = vset.pattern.permute.xlu0 0
    %904 = vperm.xlu0 %903, %v845
    %v905 = vpop.permute.xlu0 %904
    %908 = vset.pattern.permute.xlu0 0
    %909 = vperm.xlu0 %908, %v846
    %v910 = vpop.permute.xlu0 %909
    %913 = vset.pattern.permute.xlu0 0
    %914 = vperm.xlu0 %913, %v847
    %v915 = vpop.permute.xlu0 %914
    %918 = vset.pattern.permute.xlu0 0
    %919 = vperm.xlu0 %918, %v848
    %v920 = vpop.permute.xlu0 %919
    %923 = vset.pattern.permute.xlu0 0
    %924 = vperm.xlu0 %923, %v849
    %v925 = vpop.permute.xlu0 %924
    %928 = vset.pattern.permute.xlu0 0
    %929 = vperm.xlu0 %928, %v850
    %v930 = vpop.permute.xlu0 %929
    %vm932 = vmpackc.low %vm851, %vm851
    %v933 = vsel %vm932, 65537, 0
    %v934 = vlaneseq
    %v935 = vshrl.u32 %v934, 7
    %v936 = vsub.s32 0, %v935
    %v937 = vrot.slane %v933, %v936
    %vm938 = vcmp.ne.s16.totalorder %v937, 0
    %v939 = vsel %vm938, %v855, %v787
    %v940 = vsel %vm938, %v860, %v788
    %v941 = vsel %vm938, %v865, %v789
    %v942 = vsel %vm938, %v870, %v790
    %v943 = vsel %vm938, %v875, %v791
    %v944 = vsel %vm938, %v880, %v792
    %v945 = vsel %vm938, %v885, %v793
    %v946 = vsel %vm938, %v890, %v794
    %v947 = vsel %vm938, %v895, %v795
    %v948 = vsel %vm938, %v900, %v796
    %v949 = vsel %vm938, %v905, %v797
    %v950 = vsel %vm938, %v910, %v798
    %v951 = vsel %vm938, %v915, %v799
    %v952 = vsel %vm938, %v920, %v800
    %v953 = vsel %vm938, %v925, %v801
    %v954 = vsel %vm938, %v930, %v802
    %vm955 = vcmp.eq.s32.totalorder %v34, 25
    %956 = vset.pattern.permute.xlu0 1
    %957 = vperm.xlu0 %956, %v835
    %v958 = vpop.permute.xlu0 %957
    %960 = vset.pattern.permute.xlu0 1
    %961 = vperm.xlu0 %960, %v836
    %v962 = vpop.permute.xlu0 %961
    %964 = vset.pattern.permute.xlu0 1
    %965 = vperm.xlu0 %964, %v837
    %v966 = vpop.permute.xlu0 %965
    %968 = vset.pattern.permute.xlu0 1
    %969 = vperm.xlu0 %968, %v838
    %v970 = vpop.permute.xlu0 %969
    %972 = vset.pattern.permute.xlu0 1
    %973 = vperm.xlu0 %972, %v839
    %v974 = vpop.permute.xlu0 %973
    %976 = vset.pattern.permute.xlu0 1
    %977 = vperm.xlu0 %976, %v840
    %v978 = vpop.permute.xlu0 %977
    %980 = vset.pattern.permute.xlu0 1
    %981 = vperm.xlu0 %980, %v841
    %v982 = vpop.permute.xlu0 %981
    %984 = vset.pattern.permute.xlu0 1
    %985 = vperm.xlu0 %984, %v842
    %v986 = vpop.permute.xlu0 %985
    %988 = vset.pattern.permute.xlu0 1
    %989 = vperm.xlu0 %988, %v843
    %v990 = vpop.permute.xlu0 %989
    %992 = vset.pattern.permute.xlu0 1
    %993 = vperm.xlu0 %992, %v844
    %v994 = vpop.permute.xlu0 %993
    %996 = vset.pattern.permute.xlu0 1
    %997 = vperm.xlu0 %996, %v845
    %v998 = vpop.permute.xlu0 %997
    %1000 = vset.pattern.permute.xlu0 1
    %1001 = vperm.xlu0 %1000, %v846
    %v1002 = vpop.permute.xlu0 %1001
    %1004 = vset.pattern.permute.xlu0 1
    %1005 = vperm.xlu0 %1004, %v847
    %v1006 = vpop.permute.xlu0 %1005
    %1008 = vset.pattern.permute.xlu0 1
    %1009 = vperm.xlu0 %1008, %v848
    %v1010 = vpop.permute.xlu0 %1009
    %1012 = vset.pattern.permute.xlu0 1
    %1013 = vperm.xlu0 %1012, %v849
    %v1014 = vpop.permute.xlu0 %1013
    %1016 = vset.pattern.permute.xlu0 1
    %1017 = vperm.xlu0 %1016, %v850
    %v1018 = vpop.permute.xlu0 %1017
    %vm1020 = vmpackc.low %vm955, %vm955
    %v1021 = vsel %vm1020, 65537, 0
    %v1022 = vlaneseq
    %v1023 = vshrl.u32 %v1022, 7
    %v1024 = vsub.s32 0, %v1023
    %v1025 = vrot.slane %v1021, %v1024
    %vm1026 = vcmp.ne.s16.totalorder %v1025, 0
    %v1027 = vsel %vm1026, %v958, %v939
    %v1028 = vsel %vm1026, %v962, %v940
    %v1029 = vsel %vm1026, %v966, %v941
    %v1030 = vsel %vm1026, %v970, %v942
    %v1031 = vsel %vm1026, %v974, %v943
    %v1032 = vsel %vm1026, %v978, %v944
    %v1033 = vsel %vm1026, %v982, %v945
    %v1034 = vsel %vm1026, %v986, %v946
    %v1035 = vsel %vm1026, %v990, %v947
    %v1036 = vsel %vm1026, %v994, %v948
    %v1037 = vsel %vm1026, %v998, %v949
    %v1038 = vsel %vm1026, %v1002, %v950
    %v1039 = vsel %vm1026, %v1006, %v951
    %v1040 = vsel %vm1026, %v1010, %v952
    %v1041 = vsel %vm1026, %v1014, %v953
    %v1042 = vsel %vm1026, %v1018, %v954
    %vm1043 = vcmp.eq.s32.totalorder %v34, 26
    %1044 = vset.pattern.permute.xlu0 2
    %1045 = vperm.xlu0 %1044, %v835
    %v1046 = vpop.permute.xlu0 %1045
    %1048 = vset.pattern.permute.xlu0 2
    %1049 = vperm.xlu0 %1048, %v836
    %v1050 = vpop.permute.xlu0 %1049
    %1052 = vset.pattern.permute.xlu0 2
    %1053 = vperm.xlu0 %1052, %v837
    %v1054 = vpop.permute.xlu0 %1053
    %1056 = vset.pattern.permute.xlu0 2
    %1057 = vperm.xlu0 %1056, %v838
    %v1058 = vpop.permute.xlu0 %1057
    %1060 = vset.pattern.permute.xlu0 2
    %1061 = vperm.xlu0 %1060, %v839
    %v1062 = vpop.permute.xlu0 %1061
    %1064 = vset.pattern.permute.xlu0 2
    %1065 = vperm.xlu0 %1064, %v840
    %v1066 = vpop.permute.xlu0 %1065
    %1068 = vset.pattern.permute.xlu0 2
    %1069 = vperm.xlu0 %1068, %v841
    %v1070 = vpop.permute.xlu0 %1069
    %1072 = vset.pattern.permute.xlu0 2
    %1073 = vperm.xlu0 %1072, %v842
    %v1074 = vpop.permute.xlu0 %1073
    %1076 = vset.pattern.permute.xlu0 2
    %1077 = vperm.xlu0 %1076, %v843
    %v1078 = vpop.permute.xlu0 %1077
    %1080 = vset.pattern.permute.xlu0 2
    %1081 = vperm.xlu0 %1080, %v844
    %v1082 = vpop.permute.xlu0 %1081
    %1084 = vset.pattern.permute.xlu0 2
    %1085 = vperm.xlu0 %1084, %v845
    %v1086 = vpop.permute.xlu0 %1085
    %1088 = vset.pattern.permute.xlu0 2
    %1089 = vperm.xlu0 %1088, %v846
    %v1090 = vpop.permute.xlu0 %1089
    %1092 = vset.pattern.permute.xlu0 2
    %1093 = vperm.xlu0 %1092, %v847
    %v1094 = vpop.permute.xlu0 %1093
    %1096 = vset.pattern.permute.xlu0 2
    %1097 = vperm.xlu0 %1096, %v848
    %v1098 = vpop.permute.xlu0 %1097
    %1100 = vset.pattern.permute.xlu0 2
    %1101 = vperm.xlu0 %1100, %v849
    %v1102 = vpop.permute.xlu0 %1101
    %1104 = vset.pattern.permute.xlu0 2
    %1105 = vperm.xlu0 %1104, %v850
    %v1106 = vpop.permute.xlu0 %1105
    %vm1108 = vmpackc.low %vm1043, %vm1043
    %v1109 = vsel %vm1108, 65537, 0
    %v1110 = vlaneseq
    %v1111 = vshrl.u32 %v1110, 7
    %v1112 = vsub.s32 0, %v1111
    %v1113 = vrot.slane %v1109, %v1112
    %vm1114 = vcmp.ne.s16.totalorder %v1113, 0
    %v1115 = vsel %vm1114, %v1046, %v1027
    %v1116 = vsel %vm1114, %v1050, %v1028
    %v1117 = vsel %vm1114, %v1054, %v1029
    %v1118 = vsel %vm1114, %v1058, %v1030
    %v1119 = vsel %vm1114, %v1062, %v1031
    %v1120 = vsel %vm1114, %v1066, %v1032
    %v1121 = vsel %vm1114, %v1070, %v1033
    %v1122 = vsel %vm1114, %v1074, %v1034
    %v1123 = vsel %vm1114, %v1078, %v1035
    %v1124 = vsel %vm1114, %v1082, %v1036
    %v1125 = vsel %vm1114, %v1086, %v1037
    %v1126 = vsel %vm1114, %v1090, %v1038
    %v1127 = vsel %vm1114, %v1094, %v1039
    %v1128 = vsel %vm1114, %v1098, %v1040
    %v1129 = vsel %vm1114, %v1102, %v1041
    %v1130 = vsel %vm1114, %v1106, %v1042
    %vm1131 = vcmp.eq.s32.totalorder %v34, 27
    %1132 = vset.pattern.permute.xlu0 3
    %1133 = vperm.xlu0 %1132, %v835
    %v1134 = vpop.permute.xlu0 %1133
    %1136 = vset.pattern.permute.xlu0 3
    %1137 = vperm.xlu0 %1136, %v836
    %v1138 = vpop.permute.xlu0 %1137
    %1140 = vset.pattern.permute.xlu0 3
    %1141 = vperm.xlu0 %1140, %v837
    %v1142 = vpop.permute.xlu0 %1141
    %1144 = vset.pattern.permute.xlu0 3
    %1145 = vperm.xlu0 %1144, %v838
    %v1146 = vpop.permute.xlu0 %1145
    %1148 = vset.pattern.permute.xlu0 3
    %1149 = vperm.xlu0 %1148, %v839
    %v1150 = vpop.permute.xlu0 %1149
    %1152 = vset.pattern.permute.xlu0 3
    %1153 = vperm.xlu0 %1152, %v840
    %v1154 = vpop.permute.xlu0 %1153
    %1156 = vset.pattern.permute.xlu0 3
    %1157 = vperm.xlu0 %1156, %v841
    %v1158 = vpop.permute.xlu0 %1157
    %1160 = vset.pattern.permute.xlu0 3
    %1161 = vperm.xlu0 %1160, %v842
    %v1162 = vpop.permute.xlu0 %1161
    %1164 = vset.pattern.permute.xlu0 3
    %1165 = vperm.xlu0 %1164, %v843
    %v1166 = vpop.permute.xlu0 %1165
    %1168 = vset.pattern.permute.xlu0 3
    %1169 = vperm.xlu0 %1168, %v844
    %v1170 = vpop.permute.xlu0 %1169
    %1172 = vset.pattern.permute.xlu0 3
    %1173 = vperm.xlu0 %1172, %v845
    %v1174 = vpop.permute.xlu0 %1173
    %1176 = vset.pattern.permute.xlu0 3
    %1177 = vperm.xlu0 %1176, %v846
    %v1178 = vpop.permute.xlu0 %1177
    %1180 = vset.pattern.permute.xlu0 3
    %1181 = vperm.xlu0 %1180, %v847
    %v1182 = vpop.permute.xlu0 %1181
    %1184 = vset.pattern.permute.xlu0 3
    %1185 = vperm.xlu0 %1184, %v848
    %v1186 = vpop.permute.xlu0 %1185
    %1188 = vset.pattern.permute.xlu0 3
    %1189 = vperm.xlu0 %1188, %v849
    %v1190 = vpop.permute.xlu0 %1189
    %1192 = vset.pattern.permute.xlu0 3
    %1193 = vperm.xlu0 %1192, %v850
    %v1194 = vpop.permute.xlu0 %1193
    %vm1196 = vmpackc.low %vm1131, %vm1131
    %v1197 = vsel %vm1196, 65537, 0
    %v1198 = vlaneseq
    %v1199 = vshrl.u32 %v1198, 7
    %v1200 = vsub.s32 0, %v1199
    %v1201 = vrot.slane %v1197, %v1200
    %vm1202 = vcmp.ne.s16.totalorder %v1201, 0
    %v1203 = vsel %vm1202, %v1134, %v1115
    %v1204 = vsel %vm1202, %v1138, %v1116
    %v1205 = vsel %vm1202, %v1142, %v1117
    %v1206 = vsel %vm1202, %v1146, %v1118
    %v1207 = vsel %vm1202, %v1150, %v1119
    %v1208 = vsel %vm1202, %v1154, %v1120
    %v1209 = vsel %vm1202, %v1158, %v1121
    %v1210 = vsel %vm1202, %v1162, %v1122
    %v1211 = vsel %vm1202, %v1166, %v1123
    %v1212 = vsel %vm1202, %v1170, %v1124
    %v1213 = vsel %vm1202, %v1174, %v1125
    %v1214 = vsel %vm1202, %v1178, %v1126
    %v1215 = vsel %vm1202, %v1182, %v1127
    %v1216 = vsel %vm1202, %v1186, %v1128
    %v1217 = vsel %vm1202, %v1190, %v1129
    %v1218 = vsel %vm1202, %v1194, %v1130
    %v1219 = vld [vmem:[%s2] sm:$0xf]
    %v1220 = vld [vmem:[%s2 + $0x4] sm:$0xf]
    %v1221 = vld [vmem:[%s2 + $0x8] sm:$0xf]
    %v1222 = vld [vmem:[%s2 + $0xc] sm:$0xf]
    %v1223 = vld [vmem:[%s2 + $0x10] sm:$0xf]
    %v1224 = vld [vmem:[%s2 + $0x14] sm:$0xf]
    %v1225 = vld [vmem:[%s2 + $0x18] sm:$0xf]
    %v1226 = vld [vmem:[%s2 + $0x1c] sm:$0xf]
    %v1227 = vld [vmem:[%s2 + $0x20] sm:$0xf]
    %v1228 = vld [vmem:[%s2 + $0x24] sm:$0xf]
    %v1229 = vld [vmem:[%s2 + $0x28] sm:$0xf]
    %v1230 = vld [vmem:[%s2 + $0x2c] sm:$0xf]
    %v1231 = vld [vmem:[%s2 + $0x30] sm:$0xf]
    %v1232 = vld [vmem:[%s2 + $0x34] sm:$0xf]
    %v1233 = vld [vmem:[%s2 + $0x38] sm:$0xf]
    %v1234 = vld [vmem:[%s2 + $0x3c] sm:$0xf]
    %v1235 = vld [vmem:[%s3] sm:$0x1]
    %v1237 = vlaneseq
    %v1238 = vshrl.u32 %v1237, 7
    %v1239 = vsub.s32 0, %v1238
    %v1240 = vrot.slane %v1235, %v1239
    %v1258 = vunpack.c.l.b16 %v1219
    %v1259 = vunpack.c.l.b16 %v1220
    %v1260 = vunpack.c.l.b16 %v1221
    %v1261 = vunpack.c.l.b16 %v1222
    %v1262 = vunpack.c.l.b16 %v1223
    %v1263 = vunpack.c.l.b16 %v1224
    %v1264 = vunpack.c.l.b16 %v1225
    %v1265 = vunpack.c.l.b16 %v1226
    %v1266 = vunpack.c.l.b16 %v1227
    %v1267 = vunpack.c.l.b16 %v1228
    %v1268 = vunpack.c.l.b16 %v1229
    %v1269 = vunpack.c.l.b16 %v1230
    %v1270 = vunpack.c.l.b16 %v1231
    %v1271 = vunpack.c.l.b16 %v1232
    %v1272 = vunpack.c.l.b16 %v1233
    %v1273 = vunpack.c.l.b16 %v1234
    %v1274 = vpack.c.b16 %v1259, %v1258
    %v1275 = vpack.c.b16 %v1261, %v1260
    %v1276 = vpack.c.b16 %v1263, %v1262
    %v1277 = vpack.c.b16 %v1265, %v1264
    %v1278 = vpack.c.b16 %v1267, %v1266
    %v1279 = vpack.c.b16 %v1269, %v1268
    %v1280 = vpack.c.b16 %v1271, %v1270
    %v1281 = vpack.c.b16 %v1273, %v1272
    %1290 = vmatprep.subr.bf16.mxu0 0
    %1291 = vmatpush1.bf16.msra.mxu0 %v1274
    %1292 = vmatprep.subr.bf16.mxu0 0
    %1293 = vmatpush1.bf16.msra.mxu0 %v1275
    %1294 = vmatprep.subr.bf16.mxu0 0
    %1295 = vmatpush1.bf16.msra.mxu0 %v1276
    %1296 = vmatprep.subr.bf16.mxu0 0
    %1297 = vmatpush1.bf16.msra.mxu0 %v1277
    %1298 = vmatprep.subr.bf16.mxu0 0
    %1299 = vmatpush1.bf16.msra.mxu0 %v1278
    %1300 = vmatprep.subr.bf16.mxu0 0
    %1301 = vmatpush1.bf16.msra.mxu0 %v1279
    %1302 = vmatprep.subr.bf16.mxu0 0
    %1303 = vmatpush1.bf16.msra.mxu0 %v1280
    %1304 = vmatprep.subr.bf16.mxu0 0
    %1305 = vmatpush1.bf16.msra.mxu0 %v1281
    %1306 = vmatprep.subr.bf16.mxu0 0
    %1307 = vmatpush1.bf16.msra.mxu0 0
    %1308 = vmatprep.subr.bf16.mxu0 0
    %1309 = vmatpush1.bf16.msra.mxu0 0
    %1310 = vmatprep.subr.bf16.mxu0 0
    %1311 = vmatpush1.bf16.msra.mxu0 0
    %1312 = vmatprep.subr.bf16.mxu0 0
    %1313 = vmatpush1.bf16.msra.mxu0 0
    %1314 = vmatprep.subr.bf16.mxu0 0
    %1315 = vmatpush1.bf16.msra.mxu0 0
    %1316 = vmatprep.subr.bf16.mxu0 0
    %1317 = vmatpush1.bf16.msra.mxu0 0
    %1318 = vmatprep.subr.bf16.mxu0 0
    %1319 = vmatpush1.bf16.msra.mxu0 0
    %1320 = vmatprep.subr.bf16.mxu0 0
    %1321 = vmatpush1.bf16.msra.mxu0 0
    %1322 = vmatprep.mubr.bf16.mxu0 0
    %1323 = vmatmul.mubr.bf16.gmra.mrb[0].mxu0 %v1203
    %v1324 = vpop.f32.mrb[0].mxu0
    %v1325 = vadd.f32 %v1240, %v1324
    %v1326 = vpop.f32.mrb[0].mxu0
    %v1327 = vpop.f32.mrb[0].mxu0
    %v1328 = vadd.f32 %v1240, %v1327
    %v1329 = vpop.f32.mrb[0].mxu0
    %1330 = vmatprep.mubr.bf16.mxu0 0
    %1331 = vmatmul.mubr.bf16.gmra.mrb[0].mxu0 %v1204
    %v1332 = vpop.f32.mrb[0].mxu0
    %v1333 = vadd.f32 %v1240, %v1332
    %v1334 = vpop.f32.mrb[0].mxu0
    %v1335 = vpop.f32.mrb[0].mxu0
    %v1336 = vadd.f32 %v1240, %v1335
    %v1337 = vpop.f32.mrb[0].mxu0
    %1338 = vmatprep.mubr.bf16.mxu0 0
    %1339 = vmatmul.mubr.bf16.gmra.mrb[0].mxu0 %v1205
    %v1340 = vpop.f32.mrb[0].mxu0
    %v1341 = vadd.f32 %v1240, %v1340
    %v1342 = vpop.f32.mrb[0].mxu0
    %v1343 = vpop.f32.mrb[0].mxu0
    %v1344 = vadd.f32 %v1240, %v1343
    %v1345 = vpop.f32.mrb[0].mxu0
    %1346 = vmatprep.mubr.bf16.mxu0 0
    %1347 = vmatmul.mubr.bf16.gmra.mrb[0].mxu0 %v1206
    %v1348 = vpop.f32.mrb[0].mxu0
    %v1349 = vadd.f32 %v1240, %v1348
    %v1350 = vpop.f32.mrb[0].mxu0
    %v1351 = vpop.f32.mrb[0].mxu0
    %v1352 = vadd.f32 %v1240, %v1351
    %v1353 = vpop.f32.mrb[0].mxu0
    %1354 = vmatprep.mubr.bf16.mxu0 0
    %1355 = vmatmul.mubr.bf16.gmra.mrb[0].mxu0 %v1207
    %v1356 = vpop.f32.mrb[0].mxu0
    %v1357 = vadd.f32 %v1240, %v1356
    %v1358 = vpop.f32.mrb[0].mxu0
    %v1359 = vpop.f32.mrb[0].mxu0
    %v1360 = vadd.f32 %v1240, %v1359
    %v1361 = vpop.f32.mrb[0].mxu0
    %1362 = vmatprep.mubr.bf16.mxu0 0
    %1363 = vmatmul.mubr.bf16.gmra.mrb[0].mxu0 %v1208
    %v1364 = vpop.f32.mrb[0].mxu0
    %v1365 = vadd.f32 %v1240, %v1364
    %v1366 = vpop.f32.mrb[0].mxu0
    %v1367 = vpop.f32.mrb[0].mxu0
    %v1368 = vadd.f32 %v1240, %v1367
    %v1369 = vpop.f32.mrb[0].mxu0
    %1370 = vmatprep.mubr.bf16.mxu0 0
    %1371 = vmatmul.mubr.bf16.gmra.mrb[0].mxu0 %v1209
    %v1372 = vpop.f32.mrb[0].mxu0
    %v1373 = vadd.f32 %v1240, %v1372
    %v1374 = vpop.f32.mrb[0].mxu0
    %v1375 = vpop.f32.mrb[0].mxu0
    %v1376 = vadd.f32 %v1240, %v1375
    %v1377 = vpop.f32.mrb[0].mxu0
    %1378 = vmatprep.mubr.bf16.mxu0 0
    %1379 = vmatmul.mubr.bf16.gmra.mrb[0].mxu0 %v1210
    %v1380 = vpop.f32.mrb[0].mxu0
    %v1381 = vadd.f32 %v1240, %v1380
    %v1382 = vpop.f32.mrb[0].mxu0
    %v1383 = vpop.f32.mrb[0].mxu0
    %v1384 = vadd.f32 %v1240, %v1383
    %v1385 = vpop.f32.mrb[0].mxu0
    %1386 = vmatprep.mubr.bf16.mxu0 0
    %1387 = vmatmul.mubr.bf16.gmra.mrb[0].mxu0 %v1211
    %v1388 = vpop.f32.mrb[0].mxu0
    %v1389 = vadd.f32 %v1240, %v1388
    %v1390 = vpop.f32.mrb[0].mxu0
    %v1391 = vpop.f32.mrb[0].mxu0
    %v1392 = vadd.f32 %v1240, %v1391
    %v1393 = vpop.f32.mrb[0].mxu0
    %1394 = vmatprep.mubr.bf16.mxu0 0
    %1395 = vmatmul.mubr.bf16.gmra.mrb[0].mxu0 %v1212
    %v1396 = vpop.f32.mrb[0].mxu0
    %v1397 = vadd.f32 %v1240, %v1396
    %v1398 = vpop.f32.mrb[0].mxu0
    %v1399 = vpop.f32.mrb[0].mxu0
    %v1400 = vadd.f32 %v1240, %v1399
    %v1401 = vpop.f32.mrb[0].mxu0
    %1402 = vmatprep.mubr.bf16.mxu0 0
    %1403 = vmatmul.mubr.bf16.gmra.mrb[0].mxu0 %v1213
    %v1404 = vpop.f32.mrb[0].mxu0
    %v1405 = vadd.f32 %v1240, %v1404
    %v1406 = vpop.f32.mrb[0].mxu0
    %v1407 = vpop.f32.mrb[0].mxu0
    %v1408 = vadd.f32 %v1240, %v1407
    %v1409 = vpop.f32.mrb[0].mxu0
    %1410 = vmatprep.mubr.bf16.mxu0 0
    %1411 = vmatmul.mubr.bf16.gmra.mrb[0].mxu0 %v1214
    %v1412 = vpop.f32.mrb[0].mxu0
    %v1413 = vadd.f32 %v1240, %v1412
    %v1414 = vpop.f32.mrb[0].mxu0
    %v1415 = vpop.f32.mrb[0].mxu0
    %v1416 = vadd.f32 %v1240, %v1415
    %v1417 = vpop.f32.mrb[0].mxu0
    %1418 = vmatprep.mubr.bf16.mxu0 0
    %1419 = vmatmul.mubr.bf16.gmra.mrb[0].mxu0 %v1215
    %v1420 = vpop.f32.mrb[0].mxu0
    %v1421 = vadd.f32 %v1240, %v1420
    %v1422 = vpop.f32.mrb[0].mxu0
    %v1423 = vpop.f32.mrb[0].mxu0
    %v1424 = vadd.f32 %v1240, %v1423
    %v1425 = vpop.f32.mrb[0].mxu0
    %1426 = vmatprep.mubr.bf16.mxu0 0
    %1427 = vmatmul.mubr.bf16.gmra.mrb[0].mxu0 %v1216
    %v1428 = vpop.f32.mrb[0].mxu0
    %v1429 = vadd.f32 %v1240, %v1428
    %v1430 = vpop.f32.mrb[0].mxu0
    %v1431 = vpop.f32.mrb[0].mxu0
    %v1432 = vadd.f32 %v1240, %v1431
    %v1433 = vpop.f32.mrb[0].mxu0
    %1434 = vmatprep.mubr.bf16.mxu0 0
    %1435 = vmatmul.mubr.bf16.gmra.mrb[0].mxu0 %v1217
    %v1436 = vpop.f32.mrb[0].mxu0
    %v1437 = vadd.f32 %v1240, %v1436
    %v1438 = vpop.f32.mrb[0].mxu0
    %v1439 = vpop.f32.mrb[0].mxu0
    %v1440 = vadd.f32 %v1240, %v1439
    %v1441 = vpop.f32.mrb[0].mxu0
    %1442 = vmatprep.mubr.bf16.mxu0 0
    %1443 = vmatmul.mubr.bf16.gmra.mrb[0].mxu0 %v1218
    %v1444 = vpop.f32.mrb[0].mxu0
    %v1445 = vadd.f32 %v1240, %v1444
    %v1446 = vpop.f32.mrb[0].mxu0
    %v1447 = vpop.f32.mrb[0].mxu0
    %v1448 = vadd.f32 %v1240, %v1447
    %v1449 = vpop.f32.mrb[0].mxu0
    %1450 = vdwg.mxu0
    %v1451 = vmax.f32 %v1325, 0.0
    %v1452 = vmax.f32 %v1328, 0.0
    %v1453 = vmax.f32 %v1333, 0.0
    %v1454 = vmax.f32 %v1336, 0.0
    %v1455 = vmax.f32 %v1341, 0.0
    %v1456 = vmax.f32 %v1344, 0.0
    %v1457 = vmax.f32 %v1349, 0.0
    %v1458 = vmax.f32 %v1352, 0.0
    %v1459 = vmax.f32 %v1357, 0.0
    %v1460 = vmax.f32 %v1360, 0.0
    %v1461 = vmax.f32 %v1365, 0.0
    %v1462 = vmax.f32 %v1368, 0.0
    %v1463 = vmax.f32 %v1373, 0.0
    %v1464 = vmax.f32 %v1376, 0.0
    %v1465 = vmax.f32 %v1381, 0.0
    %v1466 = vmax.f32 %v1384, 0.0
    %v1467 = vmax.f32 %v1389, 0.0
    %v1468 = vmax.f32 %v1392, 0.0
    %v1469 = vmax.f32 %v1397, 0.0
    %v1470 = vmax.f32 %v1400, 0.0
    %v1471 = vmax.f32 %v1405, 0.0
    %v1472 = vmax.f32 %v1408, 0.0
    %v1473 = vmax.f32 %v1413, 0.0
    %v1474 = vmax.f32 %v1416, 0.0
    %v1475 = vmax.f32 %v1421, 0.0
    %v1476 = vmax.f32 %v1424, 0.0
    %v1477 = vmax.f32 %v1429, 0.0
    %v1478 = vmax.f32 %v1432, 0.0
    %v1479 = vmax.f32 %v1437, 0.0
    %v1480 = vmax.f32 %v1440, 0.0
    %v1481 = vmax.f32 %v1445, 0.0
    %v1482 = vmax.f32 %v1448, 0.0
    %v1483 = vpack.c.bf16 %v1452, %v1451
    %v1484 = vpack.c.bf16 %v1454, %v1453
    %v1485 = vpack.c.bf16 %v1456, %v1455
    %v1486 = vpack.c.bf16 %v1458, %v1457
    %v1487 = vpack.c.bf16 %v1460, %v1459
    %v1488 = vpack.c.bf16 %v1462, %v1461
    %v1489 = vpack.c.bf16 %v1464, %v1463
    %v1490 = vpack.c.bf16 %v1466, %v1465
    %v1491 = vpack.c.bf16 %v1468, %v1467
    %v1492 = vpack.c.bf16 %v1470, %v1469
    %v1493 = vpack.c.bf16 %v1472, %v1471
    %v1494 = vpack.c.bf16 %v1474, %v1473
    %v1495 = vpack.c.bf16 %v1476, %v1475
    %v1496 = vpack.c.bf16 %v1478, %v1477
    %v1497 = vpack.c.bf16 %v1480, %v1479
    %v1498 = vpack.c.bf16 %v1482, %v1481
    %v1499 = vld [vmem:[%s4] sm:$0xf]
    %v1500 = vld [vmem:[%s4 + $0x4] sm:$0xf]
    %v1501 = vld [vmem:[%s4 + $0x8] sm:$0xf]
    %v1502 = vld [vmem:[%s4 + $0xc] sm:$0xf]
    %v1503 = vld [vmem:[%s4 + $0x10] sm:$0xf]
    %v1504 = vld [vmem:[%s4 + $0x14] sm:$0xf]
    %v1505 = vld [vmem:[%s4 + $0x18] sm:$0xf]
    %v1506 = vld [vmem:[%s4 + $0x1c] sm:$0xf]
    %v1507 = vld [vmem:[%s4 + $0x20] sm:$0xf]
    %v1508 = vld [vmem:[%s4 + $0x24] sm:$0xf]
    %v1509 = vld [vmem:[%s4 + $0x28] sm:$0xf]
    %v1510 = vld [vmem:[%s4 + $0x2c] sm:$0xf]
    %v1511 = vld [vmem:[%s4 + $0x30] sm:$0xf]
    %v1512 = vld [vmem:[%s4 + $0x34] sm:$0xf]
    %v1513 = vld [vmem:[%s4 + $0x38] sm:$0xf]
    %v1514 = vld [vmem:[%s4 + $0x3c] sm:$0xf]
    %v1515 = vld [vmem:[%s5] sm:$0x1]
    %v1517 = vlaneseq
    %v1518 = vshrl.u32 %v1517, 7
    %v1519 = vsub.s32 0, %v1518
    %v1520 = vrot.slane %v1515, %v1519
    %v1538 = vunpack.c.l.b16 %v1499
    %v1539 = vunpack.c.l.b16 %v1500
    %v1540 = vunpack.c.l.b16 %v1501
    %v1541 = vunpack.c.l.b16 %v1502
    %v1542 = vunpack.c.l.b16 %v1503
    %v1543 = vunpack.c.l.b16 %v1504
    %v1544 = vunpack.c.l.b16 %v1505
    %v1545 = vunpack.c.l.b16 %v1506
    %v1546 = vunpack.c.l.b16 %v1507
    %v1547 = vunpack.c.l.b16 %v1508
    %v1548 = vunpack.c.l.b16 %v1509
    %v1549 = vunpack.c.l.b16 %v1510
    %v1550 = vunpack.c.l.b16 %v1511
    %v1551 = vunpack.c.l.b16 %v1512
    %v1552 = vunpack.c.l.b16 %v1513
    %v1553 = vunpack.c.l.b16 %v1514
    %v1554 = vpack.c.b16 %v1539, %v1538
    %v1555 = vpack.c.b16 %v1541, %v1540
    %v1556 = vpack.c.b16 %v1543, %v1542
    %v1557 = vpack.c.b16 %v1545, %v1544
    %v1558 = vpack.c.b16 %v1547, %v1546
    %v1559 = vpack.c.b16 %v1549, %v1548
    %v1560 = vpack.c.b16 %v1551, %v1550
    %v1561 = vpack.c.b16 %v1553, %v1552
    %1570 = vmatprep.subr.bf16.mxu0 0
    %1571 = vmatpush1.bf16.msra.mxu0 %v1554
    %1572 = vmatprep.subr.bf16.mxu0 0
    %1573 = vmatpush1.bf16.msra.mxu0 %v1555
    %1574 = vmatprep.subr.bf16.mxu0 0
    %1575 = vmatpush1.bf16.msra.mxu0 %v1556
    %1576 = vmatprep.subr.bf16.mxu0 0
    %1577 = vmatpush1.bf16.msra.mxu0 %v1557
    %1578 = vmatprep.subr.bf16.mxu0 0
    %1579 = vmatpush1.bf16.msra.mxu0 %v1558
    %1580 = vmatprep.subr.bf16.mxu0 0
    %1581 = vmatpush1.bf16.msra.mxu0 %v1559
    %1582 = vmatprep.subr.bf16.mxu0 0
    %1583 = vmatpush1.bf16.msra.mxu0 %v1560
    %1584 = vmatprep.subr.bf16.mxu0 0
    %1585 = vmatpush1.bf16.msra.mxu0 %v1561
    %1586 = vmatprep.subr.bf16.mxu0 0
    %1587 = vmatpush1.bf16.msra.mxu0 0
    %1588 = vmatprep.subr.bf16.mxu0 0
    %1589 = vmatpush1.bf16.msra.mxu0 0
    %1590 = vmatprep.subr.bf16.mxu0 0
    %1591 = vmatpush1.bf16.msra.mxu0 0
    %1592 = vmatprep.subr.bf16.mxu0 0
    %1593 = vmatpush1.bf16.msra.mxu0 0
    %1594 = vmatprep.subr.bf16.mxu0 0
    %1595 = vmatpush1.bf16.msra.mxu0 0
    %1596 = vmatprep.subr.bf16.mxu0 0
    %1597 = vmatpush1.bf16.msra.mxu0 0
    %1598 = vmatprep.subr.bf16.mxu0 0
    %1599 = vmatpush1.bf16.msra.mxu0 0
    %1600 = vmatprep.subr.bf16.mxu0 0
    %1601 = vmatpush1.bf16.msra.mxu0 0
    %1602 = vmatprep.mubr.bf16.mxu0 0
    %1603 = vmatmul.mubr.bf16.gmra.mrb[0].mxu0 %v1483
    %v1604 = vpop.f32.mrb[0].mxu0
    %v1605 = vadd.f32 %v1520, %v1604
    %v1606 = vpop.f32.mrb[0].mxu0
    %v1607 = vpop.f32.mrb[0].mxu0
    %v1608 = vadd.f32 %v1520, %v1607
    %v1609 = vpop.f32.mrb[0].mxu0
    %1610 = vmatprep.mubr.bf16.mxu0 0
    %1611 = vmatmul.mubr.bf16.gmra.mrb[0].mxu0 %v1484
    %v1612 = vpop.f32.mrb[0].mxu0
    %v1613 = vadd.f32 %v1520, %v1612
    %v1614 = vpop.f32.mrb[0].mxu0
    %v1615 = vpop.f32.mrb[0].mxu0
    %v1616 = vadd.f32 %v1520, %v1615
    %v1617 = vpop.f32.mrb[0].mxu0
    %1618 = vmatprep.mubr.bf16.mxu0 0
    %1619 = vmatmul.mubr.bf16.gmra.mrb[0].mxu0 %v1485
    %v1620 = vpop.f32.mrb[0].mxu0
    %v1621 = vadd.f32 %v1520, %v1620
    %v1622 = vpop.f32.mrb[0].mxu0
    %v1623 = vpop.f32.mrb[0].mxu0
    %v1624 = vadd.f32 %v1520, %v1623
    %v1625 = vpop.f32.mrb[0].mxu0
    %1626 = vmatprep.mubr.bf16.mxu0 0
    %1627 = vmatmul.mubr.bf16.gmra.mrb[0].mxu0 %v1486
    %v1628 = vpop.f32.mrb[0].mxu0
    %v1629 = vadd.f32 %v1520, %v1628
    %v1630 = vpop.f32.mrb[0].mxu0
    %v1631 = vpop.f32.mrb[0].mxu0
    %v1632 = vadd.f32 %v1520, %v1631
    %v1633 = vpop.f32.mrb[0].mxu0
    %1634 = vmatprep.mubr.bf16.mxu0 0
    %1635 = vmatmul.mubr.bf16.gmra.mrb[0].mxu0 %v1487
    %v1636 = vpop.f32.mrb[0].mxu0
    %v1637 = vadd.f32 %v1520, %v1636
    %v1638 = vpop.f32.mrb[0].mxu0
    %v1639 = vpop.f32.mrb[0].mxu0
    %v1640 = vadd.f32 %v1520, %v1639
    %v1641 = vpop.f32.mrb[0].mxu0
    %1642 = vmatprep.mubr.bf16.mxu0 0
    %1643 = vmatmul.mubr.bf16.gmra.mrb[0].mxu0 %v1488
    %v1644 = vpop.f32.mrb[0].mxu0
    %v1645 = vadd.f32 %v1520, %v1644
    %v1646 = vpop.f32.mrb[0].mxu0
    %v1647 = vpop.f32.mrb[0].mxu0
    %v1648 = vadd.f32 %v1520, %v1647
    %v1649 = vpop.f32.mrb[0].mxu0
    %1650 = vmatprep.mubr.bf16.mxu0 0
    %1651 = vmatmul.mubr.bf16.gmra.mrb[0].mxu0 %v1489
    %v1652 = vpop.f32.mrb[0].mxu0
    %v1653 = vadd.f32 %v1520, %v1652
    %v1654 = vpop.f32.mrb[0].mxu0
    %v1655 = vpop.f32.mrb[0].mxu0
    %v1656 = vadd.f32 %v1520, %v1655
    %v1657 = vpop.f32.mrb[0].mxu0
    %1658 = vmatprep.mubr.bf16.mxu0 0
    %1659 = vmatmul.mubr.bf16.gmra.mrb[0].mxu0 %v1490
    %v1660 = vpop.f32.mrb[0].mxu0
    %v1661 = vadd.f32 %v1520, %v1660
    %v1662 = vpop.f32.mrb[0].mxu0
    %v1663 = vpop.f32.mrb[0].mxu0
    %v1664 = vadd.f32 %v1520, %v1663
    %v1665 = vpop.f32.mrb[0].mxu0
    %1666 = vmatprep.mubr.bf16.mxu0 0
    %1667 = vmatmul.mubr.bf16.gmra.mrb[0].mxu0 %v1491
    %v1668 = vpop.f32.mrb[0].mxu0
    %v1669 = vadd.f32 %v1520, %v1668
    %v1670 = vpop.f32.mrb[0].mxu0
    %v1671 = vpop.f32.mrb[0].mxu0
    %v1672 = vadd.f32 %v1520, %v1671
    %v1673 = vpop.f32.mrb[0].mxu0
    %1674 = vmatprep.mubr.bf16.mxu0 0
    %1675 = vmatmul.mubr.bf16.gmra.mrb[0].mxu0 %v1492
    %v1676 = vpop.f32.mrb[0].mxu0
    %v1677 = vadd.f32 %v1520, %v1676
    %v1678 = vpop.f32.mrb[0].mxu0
    %v1679 = vpop.f32.mrb[0].mxu0
    %v1680 = vadd.f32 %v1520, %v1679
    %v1681 = vpop.f32.mrb[0].mxu0
    %1682 = vmatprep.mubr.bf16.mxu0 0
    %1683 = vmatmul.mubr.bf16.gmra.mrb[0].mxu0 %v1493
    %v1684 = vpop.f32.mrb[0].mxu0
    %v1685 = vadd.f32 %v1520, %v1684
    %v1686 = vpop.f32.mrb[0].mxu0
    %v1687 = vpop.f32.mrb[0].mxu0
    %v1688 = vadd.f32 %v1520, %v1687
    %v1689 = vpop.f32.mrb[0].mxu0
    %1690 = vmatprep.mubr.bf16.mxu0 0
    %1691 = vmatmul.mubr.bf16.gmra.mrb[0].mxu0 %v1494
    %v1692 = vpop.f32.mrb[0].mxu0
    %v1693 = vadd.f32 %v1520, %v1692
    %v1694 = vpop.f32.mrb[0].mxu0
    %v1695 = vpop.f32.mrb[0].mxu0
    %v1696 = vadd.f32 %v1520, %v1695
    %v1697 = vpop.f32.mrb[0].mxu0
    %1698 = vmatprep.mubr.bf16.mxu0 0
    %1699 = vmatmul.mubr.bf16.gmra.mrb[0].mxu0 %v1495
    %v1700 = vpop.f32.mrb[0].mxu0
    %v1701 = vadd.f32 %v1520, %v1700
    %v1702 = vpop.f32.mrb[0].mxu0
    %v1703 = vpop.f32.mrb[0].mxu0
    %v1704 = vadd.f32 %v1520, %v1703
    %v1705 = vpop.f32.mrb[0].mxu0
    %1706 = vmatprep.mubr.bf16.mxu0 0
    %1707 = vmatmul.mubr.bf16.gmra.mrb[0].mxu0 %v1496
    %v1708 = vpop.f32.mrb[0].mxu0
    %v1709 = vadd.f32 %v1520, %v1708
    %v1710 = vpop.f32.mrb[0].mxu0
    %v1711 = vpop.f32.mrb[0].mxu0
    %v1712 = vadd.f32 %v1520, %v1711
    %v1713 = vpop.f32.mrb[0].mxu0
    %1714 = vmatprep.mubr.bf16.mxu0 0
    %1715 = vmatmul.mubr.bf16.gmra.mrb[0].mxu0 %v1497
    %v1716 = vpop.f32.mrb[0].mxu0
    %v1717 = vadd.f32 %v1520, %v1716
    %v1718 = vpop.f32.mrb[0].mxu0
    %v1719 = vpop.f32.mrb[0].mxu0
    %v1720 = vadd.f32 %v1520, %v1719
    %v1721 = vpop.f32.mrb[0].mxu0
    %1722 = vmatprep.mubr.bf16.mxu0 0
    %1723 = vmatmul.mubr.bf16.gmra.mrb[0].mxu0 %v1498
    %v1724 = vpop.f32.mrb[0].mxu0
    %v1725 = vadd.f32 %v1520, %v1724
    %v1726 = vpop.f32.mrb[0].mxu0
    %v1727 = vpop.f32.mrb[0].mxu0
    %v1728 = vadd.f32 %v1520, %v1727
    %v1729 = vpop.f32.mrb[0].mxu0
    %1730 = vdwg.mxu0
    %v1731 = vmax.f32 %v1605, 0.0
    %v1732 = vmax.f32 %v1608, 0.0
    %v1733 = vmax.f32 %v1613, 0.0
    %v1734 = vmax.f32 %v1616, 0.0
    %v1735 = vmax.f32 %v1621, 0.0
    %v1736 = vmax.f32 %v1624, 0.0
    %v1737 = vmax.f32 %v1629, 0.0
    %v1738 = vmax.f32 %v1632, 0.0
    %v1739 = vmax.f32 %v1637, 0.0
    %v1740 = vmax.f32 %v1640, 0.0
    %v1741 = vmax.f32 %v1645, 0.0
    %v1742 = vmax.f32 %v1648, 0.0
    %v1743 = vmax.f32 %v1653, 0.0
    %v1744 = vmax.f32 %v1656, 0.0
    %v1745 = vmax.f32 %v1661, 0.0
    %v1746 = vmax.f32 %v1664, 0.0
    %v1747 = vmax.f32 %v1669, 0.0
    %v1748 = vmax.f32 %v1672, 0.0
    %v1749 = vmax.f32 %v1677, 0.0
    %v1750 = vmax.f32 %v1680, 0.0
    %v1751 = vmax.f32 %v1685, 0.0
    %v1752 = vmax.f32 %v1688, 0.0
    %v1753 = vmax.f32 %v1693, 0.0
    %v1754 = vmax.f32 %v1696, 0.0
    %v1755 = vmax.f32 %v1701, 0.0
    %v1756 = vmax.f32 %v1704, 0.0
    %v1757 = vmax.f32 %v1709, 0.0
    %v1758 = vmax.f32 %v1712, 0.0
    %v1759 = vmax.f32 %v1717, 0.0
    %v1760 = vmax.f32 %v1720, 0.0
    %v1761 = vmax.f32 %v1725, 0.0
    %v1762 = vmax.f32 %v1728, 0.0
    %v1763 = vpack.c.bf16 %v1732, %v1731
    %v1764 = vpack.c.bf16 %v1734, %v1733
    %v1765 = vpack.c.bf16 %v1736, %v1735
    %v1766 = vpack.c.bf16 %v1738, %v1737
    %v1767 = vpack.c.bf16 %v1740, %v1739
    %v1768 = vpack.c.bf16 %v1742, %v1741
    %v1769 = vpack.c.bf16 %v1744, %v1743
    %v1770 = vpack.c.bf16 %v1746, %v1745
    %v1771 = vpack.c.bf16 %v1748, %v1747
    %v1772 = vpack.c.bf16 %v1750, %v1749
    %v1773 = vpack.c.bf16 %v1752, %v1751
    %v1774 = vpack.c.bf16 %v1754, %v1753
    %v1775 = vpack.c.bf16 %v1756, %v1755
    %v1776 = vpack.c.bf16 %v1758, %v1757
    %v1777 = vpack.c.bf16 %v1760, %v1759
    %v1778 = vpack.c.bf16 %v1762, %v1761
    %v1779 = vld [vmem:[%s6] sm:$0xf]
    %v1780 = vld [vmem:[%s6 + $0x4] sm:$0xf]
    %v1781 = vld [vmem:[%s6 + $0x8] sm:$0xf]
    %v1782 = vld [vmem:[%s6 + $0xc] sm:$0xf]
    %v1783 = vld [vmem:[%s6 + $0x10] sm:$0xf]
    %v1784 = vld [vmem:[%s6 + $0x14] sm:$0xf]
    %v1785 = vld [vmem:[%s6 + $0x18] sm:$0xf]
    %v1786 = vld [vmem:[%s6 + $0x1c] sm:$0xf]
    %v1787 = vld [vmem:[%s6 + $0x20] sm:$0xf]
    %v1788 = vld [vmem:[%s6 + $0x24] sm:$0xf]
    %v1789 = vld [vmem:[%s6 + $0x28] sm:$0xf]
    %v1790 = vld [vmem:[%s6 + $0x2c] sm:$0xf]
    %v1791 = vld [vmem:[%s6 + $0x30] sm:$0xf]
    %v1792 = vld [vmem:[%s6 + $0x34] sm:$0xf]
    %v1793 = vld [vmem:[%s6 + $0x38] sm:$0xf]
    %v1794 = vld [vmem:[%s6 + $0x3c] sm:$0xf]
    %v1795 = vld [vmem:[%s7] sm:$0x1]
    %v1797 = vlaneseq
    %v1798 = vshrl.u32 %v1797, 7
    %v1799 = vsub.s32 0, %v1798
    %v1800 = vrot.slane %v1795, %v1799
    %v1818 = vunpack.c.l.b16 %v1779
    %v1819 = vunpack.c.l.b16 %v1780
    %v1820 = vunpack.c.l.b16 %v1781
    %v1821 = vunpack.c.l.b16 %v1782
    %v1822 = vunpack.c.l.b16 %v1783
    %v1823 = vunpack.c.l.b16 %v1784
    %v1824 = vunpack.c.l.b16 %v1785
    %v1825 = vunpack.c.l.b16 %v1786
    %v1826 = vunpack.c.l.b16 %v1787
    %v1827 = vunpack.c.l.b16 %v1788
    %v1828 = vunpack.c.l.b16 %v1789
    %v1829 = vunpack.c.l.b16 %v1790
    %v1830 = vunpack.c.l.b16 %v1791
    %v1831 = vunpack.c.l.b16 %v1792
    %v1832 = vunpack.c.l.b16 %v1793
    %v1833 = vunpack.c.l.b16 %v1794
    %v1834 = vpack.c.b16 %v1819, %v1818
    %v1835 = vpack.c.b16 %v1821, %v1820
    %v1836 = vpack.c.b16 %v1823, %v1822
    %v1837 = vpack.c.b16 %v1825, %v1824
    %v1838 = vpack.c.b16 %v1827, %v1826
    %v1839 = vpack.c.b16 %v1829, %v1828
    %v1840 = vpack.c.b16 %v1831, %v1830
    %v1841 = vpack.c.b16 %v1833, %v1832
    %1850 = vmatprep.subr.bf16.mxu0 0
    %1851 = vmatpush1.bf16.msra.mxu0 %v1834
    %1852 = vmatprep.subr.bf16.mxu0 0
    %1853 = vmatpush1.bf16.msra.mxu0 %v1835
    %1854 = vmatprep.subr.bf16.mxu0 0
    %1855 = vmatpush1.bf16.msra.mxu0 %v1836
    %1856 = vmatprep.subr.bf16.mxu0 0
    %1857 = vmatpush1.bf16.msra.mxu0 %v1837
    %1858 = vmatprep.subr.bf16.mxu0 0
    %1859 = vmatpush1.bf16.msra.mxu0 %v1838
    %1860 = vmatprep.subr.bf16.mxu0 0
    %1861 = vmatpush1.bf16.msra.mxu0 %v1839
    %1862 = vmatprep.subr.bf16.mxu0 0
    %1863 = vmatpush1.bf16.msra.mxu0 %v1840
    %1864 = vmatprep.subr.bf16.mxu0 0
    %1865 = vmatpush1.bf16.msra.mxu0 %v1841
    %1866 = vmatprep.subr.bf16.mxu0 0
    %1867 = vmatpush1.bf16.msra.mxu0 0
    %1868 = vmatprep.subr.bf16.mxu0 0
    %1869 = vmatpush1.bf16.msra.mxu0 0
    %1870 = vmatprep.subr.bf16.mxu0 0
    %1871 = vmatpush1.bf16.msra.mxu0 0
    %1872 = vmatprep.subr.bf16.mxu0 0
    %1873 = vmatpush1.bf16.msra.mxu0 0
    %1874 = vmatprep.subr.bf16.mxu0 0
    %1875 = vmatpush1.bf16.msra.mxu0 0
    %1876 = vmatprep.subr.bf16.mxu0 0
    %1877 = vmatpush1.bf16.msra.mxu0 0
    %1878 = vmatprep.subr.bf16.mxu0 0
    %1879 = vmatpush1.bf16.msra.mxu0 0
    %1880 = vmatprep.subr.bf16.mxu0 0
    %1881 = vmatpush1.bf16.msra.mxu0 0
    %1882 = vmatprep.mubr.bf16.mxu0 0
    %1883 = vmatmul.mubr.bf16.gmra.mrb[0].mxu0 %v1763
    %v1884 = vpop.f32.mrb[0].mxu0
    %v1885 = vadd.f32 %v1800, %v1884
    %v1886 = vpop.f32.mrb[0].mxu0
    %v1887 = vpop.f32.mrb[0].mxu0
    %v1888 = vadd.f32 %v1800, %v1887
    %v1889 = vpop.f32.mrb[0].mxu0
    %1890 = vmatprep.mubr.bf16.mxu0 0
    %1891 = vmatmul.mubr.bf16.gmra.mrb[0].mxu0 %v1764
    %v1892 = vpop.f32.mrb[0].mxu0
    %v1893 = vadd.f32 %v1800, %v1892
    %v1894 = vpop.f32.mrb[0].mxu0
    %v1895 = vpop.f32.mrb[0].mxu0
    %v1896 = vadd.f32 %v1800, %v1895
    %v1897 = vpop.f32.mrb[0].mxu0
    %1898 = vmatprep.mubr.bf16.mxu0 0
    %1899 = vmatmul.mubr.bf16.gmra.mrb[0].mxu0 %v1765
    %v1900 = vpop.f32.mrb[0].mxu0
    %v1901 = vadd.f32 %v1800, %v1900
    %v1902 = vpop.f32.mrb[0].mxu0
    %v1903 = vpop.f32.mrb[0].mxu0
    %v1904 = vadd.f32 %v1800, %v1903
    %v1905 = vpop.f32.mrb[0].mxu0
    %1906 = vmatprep.mubr.bf16.mxu0 0
    %1907 = vmatmul.mubr.bf16.gmra.mrb[0].mxu0 %v1766
    %v1908 = vpop.f32.mrb[0].mxu0
    %v1909 = vadd.f32 %v1800, %v1908
    %v1910 = vpop.f32.mrb[0].mxu0
    %v1911 = vpop.f32.mrb[0].mxu0
    %v1912 = vadd.f32 %v1800, %v1911
    %v1913 = vpop.f32.mrb[0].mxu0
    %1914 = vmatprep.mubr.bf16.mxu0 0
    %1915 = vmatmul.mubr.bf16.gmra.mrb[0].mxu0 %v1767
    %v1916 = vpop.f32.mrb[0].mxu0
    %v1917 = vadd.f32 %v1800, %v1916
    %v1918 = vpop.f32.mrb[0].mxu0
    %v1919 = vpop.f32.mrb[0].mxu0
    %v1920 = vadd.f32 %v1800, %v1919
    %v1921 = vpop.f32.mrb[0].mxu0
    %1922 = vmatprep.mubr.bf16.mxu0 0
    %1923 = vmatmul.mubr.bf16.gmra.mrb[0].mxu0 %v1768
    %v1924 = vpop.f32.mrb[0].mxu0
    %v1925 = vadd.f32 %v1800, %v1924
    %v1926 = vpop.f32.mrb[0].mxu0
    %v1927 = vpop.f32.mrb[0].mxu0
    %v1928 = vadd.f32 %v1800, %v1927
    %v1929 = vpop.f32.mrb[0].mxu0
    %1930 = vmatprep.mubr.bf16.mxu0 0
    %1931 = vmatmul.mubr.bf16.gmra.mrb[0].mxu0 %v1769
    %v1932 = vpop.f32.mrb[0].mxu0
    %v1933 = vadd.f32 %v1800, %v1932
    %v1934 = vpop.f32.mrb[0].mxu0
    %v1935 = vpop.f32.mrb[0].mxu0
    %v1936 = vadd.f32 %v1800, %v1935
    %v1937 = vpop.f32.mrb[0].mxu0
    %1938 = vmatprep.mubr.bf16.mxu0 0
    %1939 = vmatmul.mubr.bf16.gmra.mrb[0].mxu0 %v1770
    %v1940 = vpop.f32.mrb[0].mxu0
    %v1941 = vadd.f32 %v1800, %v1940
    %v1942 = vpop.f32.mrb[0].mxu0
    %v1943 = vpop.f32.mrb[0].mxu0
    %v1944 = vadd.f32 %v1800, %v1943
    %v1945 = vpop.f32.mrb[0].mxu0
    %1946 = vmatprep.mubr.bf16.mxu0 0
    %1947 = vmatmul.mubr.bf16.gmra.mrb[0].mxu0 %v1771
    %v1948 = vpop.f32.mrb[0].mxu0
    %v1949 = vadd.f32 %v1800, %v1948
    %v1950 = vpop.f32.mrb[0].mxu0
    %v1951 = vpop.f32.mrb[0].mxu0
    %v1952 = vadd.f32 %v1800, %v1951
    %v1953 = vpop.f32.mrb[0].mxu0
    %1954 = vmatprep.mubr.bf16.mxu0 0
    %1955 = vmatmul.mubr.bf16.gmra.mrb[0].mxu0 %v1772
    %v1956 = vpop.f32.mrb[0].mxu0
    %v1957 = vadd.f32 %v1800, %v1956
    %v1958 = vpop.f32.mrb[0].mxu0
    %v1959 = vpop.f32.mrb[0].mxu0
    %v1960 = vadd.f32 %v1800, %v1959
    %v1961 = vpop.f32.mrb[0].mxu0
    %1962 = vmatprep.mubr.bf16.mxu0 0
    %1963 = vmatmul.mubr.bf16.gmra.mrb[0].mxu0 %v1773
    %v1964 = vpop.f32.mrb[0].mxu0
    %v1965 = vadd.f32 %v1800, %v1964
    %v1966 = vpop.f32.mrb[0].mxu0
    %v1967 = vpop.f32.mrb[0].mxu0
    %v1968 = vadd.f32 %v1800, %v1967
    %v1969 = vpop.f32.mrb[0].mxu0
    %1970 = vmatprep.mubr.bf16.mxu0 0
    %1971 = vmatmul.mubr.bf16.gmra.mrb[0].mxu0 %v1774
    %v1972 = vpop.f32.mrb[0].mxu0
    %v1973 = vadd.f32 %v1800, %v1972
    %v1974 = vpop.f32.mrb[0].mxu0
    %v1975 = vpop.f32.mrb[0].mxu0
    %v1976 = vadd.f32 %v1800, %v1975
    %v1977 = vpop.f32.mrb[0].mxu0
    %1978 = vmatprep.mubr.bf16.mxu0 0
    %1979 = vmatmul.mubr.bf16.gmra.mrb[0].mxu0 %v1775
    %v1980 = vpop.f32.mrb[0].mxu0
    %v1981 = vadd.f32 %v1800, %v1980
    %v1982 = vpop.f32.mrb[0].mxu0
    %v1983 = vpop.f32.mrb[0].mxu0
    %v1984 = vadd.f32 %v1800, %v1983
    %v1985 = vpop.f32.mrb[0].mxu0
    %1986 = vmatprep.mubr.bf16.mxu0 0
    %1987 = vmatmul.mubr.bf16.gmra.mrb[0].mxu0 %v1776
    %v1988 = vpop.f32.mrb[0].mxu0
    %v1989 = vadd.f32 %v1800, %v1988
    %v1990 = vpop.f32.mrb[0].mxu0
    %v1991 = vpop.f32.mrb[0].mxu0
    %v1992 = vadd.f32 %v1800, %v1991
    %v1993 = vpop.f32.mrb[0].mxu0
    %1994 = vmatprep.mubr.bf16.mxu0 0
    %1995 = vmatmul.mubr.bf16.gmra.mrb[0].mxu0 %v1777
    %v1996 = vpop.f32.mrb[0].mxu0
    %v1997 = vadd.f32 %v1800, %v1996
    %v1998 = vpop.f32.mrb[0].mxu0
    %v1999 = vpop.f32.mrb[0].mxu0
    %v2000 = vadd.f32 %v1800, %v1999
    %v2001 = vpop.f32.mrb[0].mxu0
    %2002 = vmatprep.mubr.bf16.mxu0 0
    %2003 = vmatmul.mubr.bf16.gmra.mrb[0].mxu0 %v1778
    %v2004 = vpop.f32.mrb[0].mxu0
    %v2005 = vadd.f32 %v1800, %v2004
    %v2006 = vpop.f32.mrb[0].mxu0
    %v2007 = vpop.f32.mrb[0].mxu0
    %v2008 = vadd.f32 %v1800, %v2007
    %v2009 = vpop.f32.mrb[0].mxu0
    %2010 = vdwg.mxu0
    %v2011 = vpack.c.bf16 %v1888, %v1885
    %v2012 = vpack.c.bf16 %v1896, %v1893
    %v2013 = vpack.c.bf16 %v1904, %v1901
    %v2014 = vpack.c.bf16 %v1912, %v1909
    %v2015 = vpack.c.bf16 %v1920, %v1917
    %v2016 = vpack.c.bf16 %v1928, %v1925
    %v2017 = vpack.c.bf16 %v1936, %v1933
    %v2018 = vpack.c.bf16 %v1944, %v1941
    %v2019 = vpack.c.bf16 %v1952, %v1949
    %v2020 = vpack.c.bf16 %v1960, %v1957
    %v2021 = vpack.c.bf16 %v1968, %v1965
    %v2022 = vpack.c.bf16 %v1976, %v1973
    %v2023 = vpack.c.bf16 %v1984, %v1981
    %v2024 = vpack.c.bf16 %v1992, %v1989
    %v2025 = vpack.c.bf16 %v2000, %v1997
    %v2026 = vpack.c.bf16 %v2008, %v2005
    %v2043 = vunpack.c.l.b16 %v2011
    %v2044 = vunpack.c.h.b16 %v2011
    %v2045 = vunpack.c.l.b16 %v2012
    %v2046 = vunpack.c.h.b16 %v2012
    %v2047 = vunpack.c.l.b16 %v2013
    %v2048 = vunpack.c.h.b16 %v2013
    %v2049 = vunpack.c.l.b16 %v2014
    %v2050 = vunpack.c.h.b16 %v2014
    %v2051 = vunpack.c.l.b16 %v2015
    %v2052 = vunpack.c.h.b16 %v2015
    %v2053 = vunpack.c.l.b16 %v2016
    %v2054 = vunpack.c.h.b16 %v2016
    %v2055 = vunpack.c.l.b16 %v2017
    %v2056 = vunpack.c.h.b16 %v2017
    %v2057 = vunpack.c.l.b16 %v2018
    %v2058 = vunpack.c.h.b16 %v2018
    %v2059 = vunpack.c.l.b16 %v2019
    %v2060 = vunpack.c.h.b16 %v2019
    %v2061 = vunpack.c.l.b16 %v2020
    %v2062 = vunpack.c.h.b16 %v2020
    %v2063 = vunpack.c.l.b16 %v2021
    %v2064 = vunpack.c.h.b16 %v2021
    %v2065 = vunpack.c.l.b16 %v2022
    %v2066 = vunpack.c.h.b16 %v2022
    %v2067 = vunpack.c.l.b16 %v2023
    %v2068 = vunpack.c.h.b16 %v2023
    %v2069 = vunpack.c.l.b16 %v2024
    %v2070 = vunpack.c.h.b16 %v2024
    %v2071 = vunpack.c.l.b16 %v2025
    %v2072 = vunpack.c.h.b16 %v2025
    %v2073 = vunpack.c.l.b16 %v2026
    %v2074 = vunpack.c.h.b16 %v2026
    %v2075 = vpack.c.b16 %v2043, %v2043
    %v2076 = vpack.c.b16 %v2044, %v2044
    %v2077 = vpack.c.b16 %v2045, %v2045
    %v2078 = vpack.c.b16 %v2046, %v2046
    %v2079 = vpack.c.b16 %v2047, %v2047
    %v2080 = vpack.c.b16 %v2048, %v2048
    %v2081 = vpack.c.b16 %v2049, %v2049
    %v2082 = vpack.c.b16 %v2050, %v2050
    %v2083 = vpack.c.b16 %v2051, %v2051
    %v2084 = vpack.c.b16 %v2052, %v2052
    %v2085 = vpack.c.b16 %v2053, %v2053
    %v2086 = vpack.c.b16 %v2054, %v2054
    %v2087 = vpack.c.b16 %v2055, %v2055
    %v2088 = vpack.c.b16 %v2056, %v2056
    %v2089 = vpack.c.b16 %v2057, %v2057
    %v2090 = vpack.c.b16 %v2058, %v2058
    %v2091 = vpack.c.b16 %v2059, %v2059
    %v2092 = vpack.c.b16 %v2060, %v2060
    %v2093 = vpack.c.b16 %v2061, %v2061
    %v2094 = vpack.c.b16 %v2062, %v2062
    %v2095 = vpack.c.b16 %v2063, %v2063
    %v2096 = vpack.c.b16 %v2064, %v2064
    %v2097 = vpack.c.b16 %v2065, %v2065
    %v2098 = vpack.c.b16 %v2066, %v2066
    %v2099 = vpack.c.b16 %v2067, %v2067
    %v2100 = vpack.c.b16 %v2068, %v2068
    %v2101 = vpack.c.b16 %v2069, %v2069
    %v2102 = vpack.c.b16 %v2070, %v2070
    %v2103 = vpack.c.b16 %v2071, %v2071
    %v2104 = vpack.c.b16 %v2072, %v2072
    %v2105 = vpack.c.b16 %v2073, %v2073
    %v2106 = vpack.c.b16 %v2074, %v2074
    %2139 = vst [vmem:[#allocation2] sm:$0xf] %v2075
    %2140 = vst [vmem:[#allocation2 + $0x4] sm:$0xf] %v2076
    %2141 = vst [vmem:[#allocation2 + $0x8] sm:$0xf] %v2077
    %2142 = vst [vmem:[#allocation2 + $0xc] sm:$0xf] %v2078
    %2143 = vst [vmem:[#allocation2 + $0x10] sm:$0xf] %v2079
    %2144 = vst [vmem:[#allocation2 + $0x14] sm:$0xf] %v2080
    %2145 = vst [vmem:[#allocation2 + $0x18] sm:$0xf] %v2081
    %2146 = vst [vmem:[#allocation2 + $0x1c] sm:$0xf] %v2082
    %2147 = vst [vmem:[#allocation2 + $0x20] sm:$0xf] %v2083
    %2148 = vst [vmem:[#allocation2 + $0x24] sm:$0xf] %v2084
    %2149 = vst [vmem:[#allocation2 + $0x28] sm:$0xf] %v2085
    %2150 = vst [vmem:[#allocation2 + $0x2c] sm:$0xf] %v2086
    %2151 = vst [vmem:[#allocation2 + $0x30] sm:$0xf] %v2087
    %2152 = vst [vmem:[#allocation2 + $0x34] sm:$0xf] %v2088
    %2153 = vst [vmem:[#allocation2 + $0x38] sm:$0xf] %v2089
    %2154 = vst [vmem:[#allocation2 + $0x3c] sm:$0xf] %v2090
    %2155 = vst [vmem:[#allocation2 + $0x40] sm:$0xf] %v2091
    %2156 = vst [vmem:[#allocation2 + $0x44] sm:$0xf] %v2092
    %2157 = vst [vmem:[#allocation2 + $0x48] sm:$0xf] %v2093
    %2158 = vst [vmem:[#allocation2 + $0x4c] sm:$0xf] %v2094
    %2159 = vst [vmem:[#allocation2 + $0x50] sm:$0xf] %v2095
    %2160 = vst [vmem:[#allocation2 + $0x54] sm:$0xf] %v2096
    %2161 = vst [vmem:[#allocation2 + $0x58] sm:$0xf] %v2097
    %2162 = vst [vmem:[#allocation2 + $0x5c] sm:$0xf] %v2098
    %2163 = vst [vmem:[#allocation2 + $0x60] sm:$0xf] %v2099
    %2164 = vst [vmem:[#allocation2 + $0x64] sm:$0xf] %v2100
    %2165 = vst [vmem:[#allocation2 + $0x68] sm:$0xf] %v2101
    %2166 = vst [vmem:[#allocation2 + $0x6c] sm:$0xf] %v2102
    %2167 = vst [vmem:[#allocation2 + $0x70] sm:$0xf] %v2103
    %2168 = vst [vmem:[#allocation2 + $0x74] sm:$0xf] %v2104
    %2169 = vst [vmem:[#allocation2 + $0x78] sm:$0xf] %v2105
    %2170 = vst [vmem:[#allocation2 + $0x7c] sm:$0xf] %v2106
    // Predicated region
    $region34: #{tpu_custom_call.1} parent=1 // pred_check
      _
    $region35: #{tpu_custom_call.1} parent=1 // pred_check_branch
      %2172 = sbr.rel (0) target = $region37
    $region36: #{tpu_custom_call.1} parent=1 // pred_region
      %s2174 = ssub.s32 2048, 2048
      %2175 = vsyncadd [#allocation3], %s2174
      %s2176 = sshll.u32 [#allocation2], 4
      %s2177 = int_to_ptr.vmem [resolvable:$true] %s2176
      %2182 = dma.vmem_to_hbm [thread:$0]  %s2177, 2048, %s8, [#allocation3], 64, 64, 4
    $region37: #{tpu_custom_call.1} parent=1 // pred_fallthru
      _
    // Predicated region
    $region38: #{tpu_custom_call.1} parent=1 // pred_check
      _
    $region39: #{tpu_custom_call.1} parent=1 // pred_check_branch
      %2184 = sbr.rel (0) target = $region41
    $region40: #{tpu_custom_call.1} parent=1 // pred_region
      %2185 = dma.done [#allocation3], 2048
    $region41: #{tpu_custom_call.1} parent=1 // pred_fallthru
      _
    %2186 = vsyncpa [#allocation3], 1

</llo_original>
